<compile_context>
chip_gen: v5e
topology: v5e:2x2
jax: 0.10.0
libtpu: 0.0.40
codegen_flags: <defaults>
</compile_context>

<pallas_src>
import math

import jax
import jax.numpy as jnp
from jax.experimental import pallas as pl
from jax.experimental.pallas import tpu as pltpu

HIDDEN_SIZE = 21          # 384 * 21 == 8064 (classifier input width)
HIDDEN_PAD = 24           # hidden padded to a sublane multiple of 8
NUM_LAYERS = 2
FEAT_CH = 384             # LSTM "batch" dim (on lanes): 3 lane-tiles of 128
NUM_CLASSES = 2
SEQ_IN_LEN = 8            # input length L so the feature stack ends at length 1
FEAT_TILE = 1024          # samples per feature-stage grid step

BN_EPS = 1e-5
BN_INV = 1.0 / math.sqrt(1.0 + BN_EPS)   # eval-mode BatchNorm1d (running mean 0, var 1)
NEG_SLOPE = 0.01                          # LeakyReLU default slope


def _leaky(x):
    return jnp.where(x > 0, x, NEG_SLOPE * x)


def _bn_leaky(x):
    # BatchNorm1d(affine=False) in eval mode followed by LeakyReLU
    return _leaky(x * BN_INV)


def _full_spec(shape):
    nd = len(shape)
    return pl.BlockSpec(shape, lambda i, _nd=nd: (0,) * _nd)


# ----------------------------------------------------------------------------
# Feature extractor kernel: a block of samples per grid step.
# Conv1d(1,64,k=2,s=2) -> BN -> LReLU -> MaxPool(2,2) -> Dropout ->
# Conv1d(64,128,k=1) -> BN -> LReLU -> Conv1d(128,192,k=1) -> BN -> LReLU ->
# Conv1d(192,384,k=1) -> BN -> LReLU -> MaxPool(k=2, s=1)
# The two positions surviving the first MaxPool are stacked on rows so the
# 1x1-conv trunk (three MXU matmuls) runs once per tile; the final
# MaxPool(k=2,s=1) is a plain jnp.maximum of the two row-halves.
# ----------------------------------------------------------------------------
def features_kernel(x_ref, w1_ref, b1_ref, w2_ref, b2_ref, w3_ref, b3_ref,
                    w4_ref, b4_ref, o_ref):
    x = x_ref[...]                                     # (T, 8)
    w1 = w1_ref[...]                                   # (2, 64)
    b1 = b1_ref[...]                                   # (1, 64)

    def conv1_bn(p):
        # conv window p = x[:, 2p:2p+2]; strided conv via broadcast multiplies
        return _bn_leaky(x[:, 2 * p:2 * p + 1] * w1[0:1, :]
                         + x[:, 2 * p + 1:2 * p + 2] * w1[1:2, :] + b1)

    # MaxPool1d(kernel=2, stride=2) over the 4 conv positions -> 2 streams
    s_a = jnp.maximum(conv1_bn(0), conv1_bn(1))        # (T, 64) pooled pos 0
    s_b = jnp.maximum(conv1_bn(2), conv1_bn(3))        # (T, 64) pooled pos 1
    # Dropout(p=0.5): identity in eval mode

    h = jnp.concatenate([s_a, s_b], axis=0)            # (2T, 64): one trunk pass

    def dense(v, w_ref, b_ref):
        # bf16 weights/activations on the MXU, f32 accumulate + f32 epilogue
        return _bn_leaky(jnp.dot(v.astype(jnp.bfloat16), w_ref[...],
                                 preferred_element_type=jnp.float32) + b_ref[...])

    h = dense(h, w2_ref, b2_ref)                       # (2T, 128)
    h = dense(h, w3_ref, b3_ref)                       # (2T, 192)
    h = dense(h, w4_ref, b4_ref)                       # (2T, 384)

    # MaxPool1d(kernel=2, stride=1): 2 positions -> 1 position
    t = s_a.shape[0]
    o_ref[...] = jnp.maximum(h[:t, :], h[t:, :])


def features_forward(x, fp):
    n = x.shape[0]
    x2 = x.reshape(n, SEQ_IN_LEN)                      # requires L == 8 (reference geometry)

    tile_n = n if n <= FEAT_TILE else FEAT_TILE
    grid = (pl.cdiv(n, tile_n),)

    out = pl.pallas_call(
        features_kernel,
        out_shape=jax.ShapeDtypeStruct((n, FEAT_CH), jnp.float32),
        grid=grid,
        in_specs=[pl.BlockSpec((tile_n, SEQ_IN_LEN), lambda i: (i, 0)),
                  _full_spec((2, 64)), _full_spec((1, 64)),
                  _full_spec((64, 128)), _full_spec((1, 128)),
                  _full_spec((128, 192)), _full_spec((1, 192)),
                  _full_spec((192, 384)), _full_spec((1, 384))],
        out_specs=pl.BlockSpec((tile_n, FEAT_CH), lambda i: (i, 0)),
        compiler_params=pltpu.CompilerParams(dimension_semantics=("parallel",)),
    )(x2, fp["w1"], fp["b1"], fp["w2"], fp["b2"],
      fp["w3"], fp["b3"], fp["w4"], fp["b4"])
    return out                                         # (N, 384) == (N, 384, 1) squeezed


# ----------------------------------------------------------------------------
# Fused LSTM (2 layers, hidden=21 padded to 24) + classifier kernel.
# Layout: hidden on sublanes, batch(=384 feature channels) on lanes, ONE
# invocation (the recurrence is sequential; a lane-split grid only serializes
# it on single-TensorCore chips).  Per timestep: a fused-gate matmul per layer
# ((96,24)@(24,384) and (96,48)@(48,384)), then a BN/LReLU/BN/LReLU epilogue
# producing per-lane partial logits (sublane-reduced only); the 384-lane sum
# and fc bias are done in the wrapper.
# ----------------------------------------------------------------------------
def lstm_cls_kernel(x_ref, wih0_ref, whh0_ref, b0_ref, w1_ref, b1_ref,
                    bn1g_ref, bn1b_ref, bn2g_ref, bn2b_ref, fcw_ref,
                    logit_ref, hn_ref, cn_ref):
    seq = x_ref.shape[0]
    lanes = x_ref.shape[1]                 # 384
    hp = whh0_ref.shape[1]                 # 24 (padded hidden)
    hp4 = whh0_ref.shape[0]                # 96

    # Hoisted loop-invariants (small).  Lane-broadcasts hoisted once.
    whh0 = whh0_ref[...]                                    # (96, 24)
    w1 = w1_ref[...]                                        # (96, 48)
    wih0 = jnp.broadcast_to(wih0_ref[...], (hp4, lanes))    # (96, 384)
    b0 = jnp.broadcast_to(b0_ref[...], (hp4, lanes))        # (96, 384)
    b1 = jnp.broadcast_to(b1_ref[...], (hp4, lanes))        # (96, 384)

    zeros = jnp.zeros((hp, lanes), jnp.float32)

    def sig(v):
        # logistic as a single EUP tanh push (EUP has one VLIW slot)
        return 0.5 * jnp.tanh(0.5 * v) + 0.5

    def step(t, carry):
        h0, c0, h1, c1 = carry
        xt = x_ref[pl.ds(t, 1), :]                                    # (1, lanes)

        # ---- layer 0: input_size == 1 -> x term is a broadcast multiply ----
        g0 = (wih0 * xt
              + jnp.dot(whh0, h0, preferred_element_type=jnp.float32)
              + b0)                                                   # (96, lanes)
        i0 = sig(g0[0 * hp:1 * hp])
        f0 = sig(g0[1 * hp:2 * hp])
        u0 = jnp.tanh(g0[2 * hp:3 * hp])
        o0 = sig(g0[3 * hp:4 * hp])
        c0 = f0 * c0 + i0 * u0
        h0 = o0 * jnp.tanh(c0)

        # ---- layer 1 (inter-layer dropout p=0.5 is identity in eval) ----
        hh = jnp.concatenate([h0, h1], axis=0)                        # (48, lanes)
        g1 = (jnp.dot(w1, hh, preferred_element_type=jnp.float32)
              + b1)                                                   # (96, lanes)
        i1 = sig(g1[0 * hp:1 * hp])
        f1 = sig(g1[1 * hp:2 * hp])
        u1 = jnp.tanh(g1[2 * hp:3 * hp])
        o1 = sig(g1[3 * hp:4 * hp])
        c1 = f1 * c1 + i1 * u1
        h1 = o1 * jnp.tanh(c1)

        # ---- fused classifier epilogue for this timestep ----
        # Dropout: identity (eval).  BN eval stats; 1/sqrt(var+eps) folded
        # into the gamma planes on the host.  Only the sublane reduce is done
        # here; the 384-lane reduce + fc bias happen in the wrapper.
        a = _leaky(h1 * bn1g_ref[...] + bn1b_ref[...])
        a = _leaky(a * bn2g_ref[...] + bn2b_ref[...])
        p0 = jnp.sum(a * fcw_ref[0], axis=0, keepdims=True)           # (1, 384)
        p1 = jnp.sum(a * fcw_ref[1], axis=0, keepdims=True)           # (1, 384)
        logit_ref[pl.ds(t, 1), 0:lanes] = p0
        logit_ref[pl.ds(t, 1), lanes:2 * lanes] = p1

        return h0, c0, h1, c1

    # unroll kept at 2: g0/g1 are 36 vregs each at 384 lanes, higher unroll spills.
    h0, c0, h1, c1 = jax.lax.fori_loop(
        0, seq, step, (zeros, zeros, zeros, zeros), unroll=2)

    hn_ref[0] = h0
    hn_ref[1] = h1
    cn_ref[0] = c0
    cn_ref[1] = c1


def lstm_classifier_forward(feats, lp, cp):
    n = feats.shape[0]
    hp4 = 4 * HIDDEN_PAD

    logit_part, hn, cn = pl.pallas_call(
        lstm_cls_kernel,
        out_shape=(
            jax.ShapeDtypeStruct((n, NUM_CLASSES * FEAT_CH), jnp.float32),   # per-lane partials
            jax.ShapeDtypeStruct((NUM_LAYERS, HIDDEN_PAD, FEAT_CH), jnp.float32),
            jax.ShapeDtypeStruct((NUM_LAYERS, HIDDEN_PAD, FEAT_CH), jnp.float32),
        ),
        grid=(1,),
        in_specs=[
            _full_spec((n, FEAT_CH)),                       # x (seq, batch)
            _full_spec((hp4, 1)),                           # wih0 (un-replicated)
            _full_spec((hp4, HIDDEN_PAD)),                  # whh0 fused gates
            _full_spec((hp4, 1)),                           # b0
            _full_spec((hp4, 2 * HIDDEN_PAD)),              # [wih1 | whh1] fused
            _full_spec((hp4, 1)),                           # b1
            _full_spec((HIDDEN_PAD, FEAT_CH)),              # bn1 gamma (BN_INV folded)
            _full_spec((HIDDEN_PAD, FEAT_CH)),              # bn1 beta
            _full_spec((HIDDEN_PAD, FEAT_CH)),              # bn2 gamma (BN_INV folded)
            _full_spec((HIDDEN_PAD, FEAT_CH)),              # bn2 beta
            _full_spec((NUM_CLASSES, HIDDEN_PAD, FEAT_CH)),  # fc W planes
        ],
        out_specs=(
            _full_spec((n, NUM_CLASSES * FEAT_CH)),
            _full_spec((NUM_LAYERS, HIDDEN_PAD, FEAT_CH)),
            _full_spec((NUM_LAYERS, HIDDEN_PAD, FEAT_CH)),
        ),
        compiler_params=pltpu.CompilerParams(dimension_semantics=("arbitrary",)),
    )(feats, lp["wih0"], lp["whh0"], lp["b0"], lp["w1"], lp["b1"],
      cp["bn1_g"], cp["bn1_b"], cp["bn2_g"], cp["bn2_b"], cp["fc_w"])

    # 384-lane reduce of the per-lane partial logits + fc bias (tiny XLA op).
    logits = logit_part.reshape(n, NUM_CLASSES, FEAT_CH).sum(axis=-1) + cp["fc_b"]
    # Kernel state layout is (layer, hidden_pad, batch); PyTorch is (layer, batch, hidden).
    h_n = jnp.transpose(hn, (0, 2, 1))[:, :, :HIDDEN_SIZE]
    c_n = jnp.transpose(cn, (0, 2, 1))[:, :, :HIDDEN_SIZE]
    return logits, (h_n, c_n)


# ----------------------------------------------------------------------------
# Full forward
# ----------------------------------------------------------------------------
def crnn_forward(x, params, hidden=None):
    # TODO(synk): `hidden` is assumed None (zero-initialized h0/c0), matching the test call.
    feats = features_forward(x, params["features"])               # (N, 384)
    logits, hidden = lstm_classifier_forward(feats, params["lstm"], params["classifier"])
    return logits, hidden


# ----------------------------------------------------------------------------
# Deterministic parameter init (PyTorch shapes, converted to kernel layouts)
# ----------------------------------------------------------------------------
def init_params(key):
    ks = jax.random.split(key, 24)

    def nrm(k, shape, scale=0.1):
        return scale * jax.random.normal(k, shape, dtype=jnp.float32)

    # --- features (PyTorch conv shapes: (out, in, k)) ---
    conv1_w = nrm(ks[0], (64, 1, 2));    conv1_b = nrm(ks[1], (64,))
    conv2_w = nrm(ks[2], (128, 64, 1));  conv2_b = nrm(ks[3], (128,))
    conv3_w = nrm(ks[4], (192, 128, 1)); conv3_b = nrm(ks[5], (192,))
    conv4_w = nrm(ks[6], (384, 192, 1)); conv4_b = nrm(ks[7], (384,))
    features = dict(
        w1=conv1_w[:, 0, :].T,                               # (2, 64) f32 (VPU conv)
        b1=conv1_b.reshape(1, 64),
        w2=conv2_w[:, :, 0].T.astype(jnp.bfloat16),          # (64, 128) bf16 (MXU)
        b2=conv2_b.reshape(1, 128),
        w3=conv3_w[:, :, 0].T.astype(jnp.bfloat16),          # (128, 192)
        b3=conv3_b.reshape(1, 192),
        w4=conv4_w[:, :, 0].T.astype(jnp.bfloat16),          # (192, 384)
        b4=conv4_b.reshape(1, 384),
    )

    # --- LSTM (PyTorch shapes: weight_ih_l0 (4H,1), weight_hh (4H,H), gates i,f,g,o) ---
    H, HP = HIDDEN_SIZE, HIDDEN_PAD
    w_ih_l0 = nrm(ks[8], (4 * H, 1));  w_hh_l0 = nrm(ks[9], (4 * H, H))
    b_ih_l0 = nrm(ks[10], (4 * H,));   b_hh_l0 = nrm(ks[11], (4 * H,))
    w_ih_l1 = nrm(ks[12], (4 * H, H)); w_hh_l1 = nrm(ks[13], (4 * H, H))
    b_ih_l1 = nrm(ks[14], (4 * H,));   b_hh_l1 = nrm(ks[15], (4 * H,))

    def pad_rows(w):
        # (4H, K) -> (4*HP, K): zero-pad each gate's H rows to HP rows.
        w4 = w.reshape(4, H, -1)
        pad = jnp.zeros((4, HP - H, w4.shape[-1]), jnp.float32)
        return jnp.concatenate([w4, pad], axis=1).reshape(4 * HP, -1)

    def pad_cols(w):
        # (R, H) -> (R, HP): zero-pad hidden columns (padded h rows stay 0).
        return jnp.concatenate([w, jnp.zeros((w.shape[0], HP - H), jnp.float32)], axis=1)

    lstm = dict(
        wih0=pad_rows(w_ih_l0),                               # (96, 1)  lane-broadcast in-kernel
        whh0=pad_cols(pad_rows(w_hh_l0)),                     # (96, 24)
        b0=pad_rows((b_ih_l0 + b_hh_l0)[:, None]),            # (96, 1)
        w1=jnp.concatenate([pad_cols(pad_rows(w_ih_l1)),
                            pad_cols(pad_rows(w_hh_l1))], axis=1),  # (96, 48)
        b1=pad_rows((b_ih_l1 + b_hh_l1)[:, None]),            # (96, 1)
    )

    # --- classifier: flattened feature f = b*21 + j  ->  plane[j, b], padded to HP rows ---
    flat_dim = FEAT_CH * H                 # 8064
    fc_w = nrm(ks[16], (NUM_CLASSES, flat_dim))
    fc_b = nrm(ks[17], (NUM_CLASSES,))
    bn1_g = jnp.ones((flat_dim,), jnp.float32);  bn1_b = jnp.zeros((flat_dim,), jnp.float32)
    bn2_g = jnp.ones((flat_dim,), jnp.float32);  bn2_b = jnp.zeros((flat_dim,), jnp.float32)

    def to_plane(v):
        m = v.reshape(FEAT_CH, H).T                                   # (21, 384)
        return jnp.concatenate([m, jnp.zeros((HP - H, FEAT_CH), jnp.float32)], axis=0)

    classifier = dict(
        # eval-mode BN scale 1/sqrt(var+eps) folded into the gamma planes
        bn1_g=to_plane(bn1_g) * BN_INV, bn1_b=to_plane(bn1_b),
        bn2_g=to_plane(bn2_g) * BN_INV, bn2_b=to_plane(bn2_b),
        fc_w=jnp.stack([to_plane(fc_w[c]) for c in range(NUM_CLASSES)], axis=0),  # (2, 24, 384)
        fc_b=fc_b,                                                    # (2,)
    )

    return dict(features=features, lstm=lstm, classifier=classifier)


if __name__ == "__main__":
    key = jax.random.PRNGKey(0)
    pkey, xkey = jax.random.split(key)
    params = init_params(pkey)

    N = 2
    x = jax.random.normal(xkey, (N, 1, SEQ_IN_LEN), dtype=jnp.float32)  # NCW, like PyTorch

    logits, (h_n, c_n) = jax.jit(crnn_forward)(x, params)
    jax.block_until_ready((logits, h_n, c_n))

    assert logits.shape == (N, NUM_CLASSES), logits.shape
    assert h_n.shape == (NUM_LAYERS, FEAT_CH, HIDDEN_SIZE), h_n.shape
    assert c_n.shape == (NUM_LAYERS, FEAT_CH, HIDDEN_SIZE), c_n.shape
    assert bool(jnp.all(jnp.isfinite(logits)))
    print("KERNEL_OK")
</pallas_src>

<mosaic_0001>
module attributes {stable_mosaic.version = 11 : i64} {
  func.func @features_kernel(%arg0: i32, %arg1: memref<2x8xf32, #tpu.memory_space<vmem>>, %arg2: memref<2x64xf32, #tpu.memory_space<vmem>>, %arg3: memref<1x64xf32, #tpu.memory_space<vmem>>, %arg4: memref<64x128xbf16, #tpu.memory_space<vmem>>, %arg5: memref<1x128xf32, #tpu.memory_space<vmem>>, %arg6: memref<128x192xbf16, #tpu.memory_space<vmem>>, %arg7: memref<1x192xf32, #tpu.memory_space<vmem>>, %arg8: memref<192x384xbf16, #tpu.memory_space<vmem>>, %arg9: memref<1x384xf32, #tpu.memory_space<vmem>>, %arg10: memref<2x384xf32, #tpu.memory_space<vmem>>) attributes {dimension_semantics = [#tpu.dimension_semantics<parallel>], iteration_bounds = array<i64: 1>, scalar_prefetch = 0 : i64, scratch_operands = 0 : i64, tpu.core_type = #tpu.core_type<tc>, window_params = [{transform_indices = @transform_0, window_bounds = array<i64: 2, 8>}, {pipeline_mode = #tpu.pipeline_mode<synchronous>, transform_indices = @transform_1, window_bounds = array<i64: 2, 64>}, {pipeline_mode = #tpu.pipeline_mode<synchronous>, transform_indices = @transform_2, window_bounds = array<i64: 1, 64>}, {pipeline_mode = #tpu.pipeline_mode<synchronous>, transform_indices = @transform_3, window_bounds = array<i64: 64, 128>}, {pipeline_mode = #tpu.pipeline_mode<synchronous>, transform_indices = @transform_4, window_bounds = array<i64: 1, 128>}, {pipeline_mode = #tpu.pipeline_mode<synchronous>, transform_indices = @transform_5, window_bounds = array<i64: 128, 192>}, {pipeline_mode = #tpu.pipeline_mode<synchronous>, transform_indices = @transform_6, window_bounds = array<i64: 1, 192>}, {pipeline_mode = #tpu.pipeline_mode<synchronous>, transform_indices = @transform_7, window_bounds = array<i64: 192, 384>}, {pipeline_mode = #tpu.pipeline_mode<synchronous>, transform_indices = @transform_8, window_bounds = array<i64: 1, 384>}, {transform_indices = @transform_9, window_bounds = array<i64: 2, 384>}]} {
    %c0 = arith.constant 0 : index
    %c0_0 = arith.constant 0 : index
    %0 = vector.load %arg1[%c0, %c0_0] : memref<2x8xf32, #tpu.memory_space<vmem>>, vector<2x8xf32>
    %c0_1 = arith.constant 0 : index
    %c0_2 = arith.constant 0 : index
    %1 = vector.load %arg2[%c0_1, %c0_2] : memref<2x64xf32, #tpu.memory_space<vmem>>, vector<2x64xf32>
    %c0_3 = arith.constant 0 : index
    %c0_4 = arith.constant 0 : index
    %2 = vector.load %arg3[%c0_3, %c0_4] : memref<1x64xf32, #tpu.memory_space<vmem>>, vector<1x64xf32>
    %3 = vector.extract_strided_slice %0 {offsets = [0, 0], sizes = [2, 1], strides = [1, 1]} : vector<2x8xf32> to vector<2x1xf32>
    %4 = vector.extract_strided_slice %1 {offsets = [0, 0], sizes = [1, 64], strides = [1, 1]} : vector<2x64xf32> to vector<1x64xf32>
    %5 = vector.broadcast %3 : vector<2x1xf32> to vector<2x64xf32>
    %6 = vector.broadcast %4 : vector<1x64xf32> to vector<2x64xf32>
    %7 = arith.mulf %5, %6 : vector<2x64xf32>
    %8 = vector.extract_strided_slice %0 {offsets = [0, 1], sizes = [2, 1], strides = [1, 1]} : vector<2x8xf32> to vector<2x1xf32>
    %9 = vector.extract_strided_slice %1 {offsets = [1, 0], sizes = [1, 64], strides = [1, 1]} : vector<2x64xf32> to vector<1x64xf32>
    %10 = vector.broadcast %8 : vector<2x1xf32> to vector<2x64xf32>
    %11 = vector.broadcast %9 : vector<1x64xf32> to vector<2x64xf32>
    %12 = arith.mulf %10, %11 : vector<2x64xf32>
    %13 = arith.addf %7, %12 : vector<2x64xf32>
    %14 = vector.broadcast %2 : vector<1x64xf32> to vector<2x64xf32>
    %15 = arith.addf %13, %14 : vector<2x64xf32>
    %cst = arith.constant 0.999994993 : f32
    %16 = vector.broadcast %cst : f32 to vector<2x64xf32>
    %17 = arith.mulf %15, %16 : vector<2x64xf32>
    %cst_5 = arith.constant 0.000000e+00 : f32
    %18 = vector.broadcast %cst_5 : f32 to vector<2x64xf32>
    %19 = arith.cmpf ogt, %17, %18 : vector<2x64xf32>
    %cst_6 = arith.constant 0.00999999977 : f32
    %20 = vector.broadcast %cst_6 : f32 to vector<2x64xf32>
    %21 = arith.mulf %20, %17 : vector<2x64xf32>
    %22 = arith.select %19, %17, %21 : vector<2x64xi1>, vector<2x64xf32>
    %23 = vector.extract_strided_slice %0 {offsets = [0, 2], sizes = [2, 1], strides = [1, 1]} : vector<2x8xf32> to vector<2x1xf32>
    %24 = vector.extract_strided_slice %1 {offsets = [0, 0], sizes = [1, 64], strides = [1, 1]} : vector<2x64xf32> to vector<1x64xf32>
    %25 = vector.broadcast %23 : vector<2x1xf32> to vector<2x64xf32>
    %26 = vector.broadcast %24 : vector<1x64xf32> to vector<2x64xf32>
    %27 = arith.mulf %25, %26 : vector<2x64xf32>
    %28 = vector.extract_strided_slice %0 {offsets = [0, 3], sizes = [2, 1], strides = [1, 1]} : vector<2x8xf32> to vector<2x1xf32>
    %29 = vector.extract_strided_slice %1 {offsets = [1, 0], sizes = [1, 64], strides = [1, 1]} : vector<2x64xf32> to vector<1x64xf32>
    %30 = vector.broadcast %28 : vector<2x1xf32> to vector<2x64xf32>
    %31 = vector.broadcast %29 : vector<1x64xf32> to vector<2x64xf32>
    %32 = arith.mulf %30, %31 : vector<2x64xf32>
    %33 = arith.addf %27, %32 : vector<2x64xf32>
    %34 = vector.broadcast %2 : vector<1x64xf32> to vector<2x64xf32>
    %35 = arith.addf %33, %34 : vector<2x64xf32>
    %cst_7 = arith.constant 0.999994993 : f32
    %36 = vector.broadcast %cst_7 : f32 to vector<2x64xf32>
    %37 = arith.mulf %35, %36 : vector<2x64xf32>
    %cst_8 = arith.constant 0.000000e+00 : f32
    %38 = vector.broadcast %cst_8 : f32 to vector<2x64xf32>
    %39 = arith.cmpf ogt, %37, %38 : vector<2x64xf32>
    %cst_9 = arith.constant 0.00999999977 : f32
    %40 = vector.broadcast %cst_9 : f32 to vector<2x64xf32>
    %41 = arith.mulf %40, %37 : vector<2x64xf32>
    %42 = arith.select %39, %37, %41 : vector<2x64xi1>, vector<2x64xf32>
    %43 = arith.maximumf %22, %42 : vector<2x64xf32>
    %44 = vector.extract_strided_slice %0 {offsets = [0, 4], sizes = [2, 1], strides = [1, 1]} : vector<2x8xf32> to vector<2x1xf32>
    %45 = vector.extract_strided_slice %1 {offsets = [0, 0], sizes = [1, 64], strides = [1, 1]} : vector<2x64xf32> to vector<1x64xf32>
    %46 = vector.broadcast %44 : vector<2x1xf32> to vector<2x64xf32>
    %47 = vector.broadcast %45 : vector<1x64xf32> to vector<2x64xf32>
    %48 = arith.mulf %46, %47 : vector<2x64xf32>
    %49 = vector.extract_strided_slice %0 {offsets = [0, 5], sizes = [2, 1], strides = [1, 1]} : vector<2x8xf32> to vector<2x1xf32>
    %50 = vector.extract_strided_slice %1 {offsets = [1, 0], sizes = [1, 64], strides = [1, 1]} : vector<2x64xf32> to vector<1x64xf32>
    %51 = vector.broadcast %49 : vector<2x1xf32> to vector<2x64xf32>
    %52 = vector.broadcast %50 : vector<1x64xf32> to vector<2x64xf32>
    %53 = arith.mulf %51, %52 : vector<2x64xf32>
    %54 = arith.addf %48, %53 : vector<2x64xf32>
    %55 = vector.broadcast %2 : vector<1x64xf32> to vector<2x64xf32>
    %56 = arith.addf %54, %55 : vector<2x64xf32>
    %cst_10 = arith.constant 0.999994993 : f32
    %57 = vector.broadcast %cst_10 : f32 to vector<2x64xf32>
    %58 = arith.mulf %56, %57 : vector<2x64xf32>
    %cst_11 = arith.constant 0.000000e+00 : f32
    %59 = vector.broadcast %cst_11 : f32 to vector<2x64xf32>
    %60 = arith.cmpf ogt, %58, %59 : vector<2x64xf32>
    %cst_12 = arith.constant 0.00999999977 : f32
    %61 = vector.broadcast %cst_12 : f32 to vector<2x64xf32>
    %62 = arith.mulf %61, %58 : vector<2x64xf32>
    %63 = arith.select %60, %58, %62 : vector<2x64xi1>, vector<2x64xf32>
    %64 = vector.extract_strided_slice %0 {offsets = [0, 6], sizes = [2, 1], strides = [1, 1]} : vector<2x8xf32> to vector<2x1xf32>
    %65 = vector.extract_strided_slice %1 {offsets = [0, 0], sizes = [1, 64], strides = [1, 1]} : vector<2x64xf32> to vector<1x64xf32>
    %66 = vector.broadcast %64 : vector<2x1xf32> to vector<2x64xf32>
    %67 = vector.broadcast %65 : vector<1x64xf32> to vector<2x64xf32>
    %68 = arith.mulf %66, %67 : vector<2x64xf32>
    %69 = vector.extract_strided_slice %0 {offsets = [0, 7], sizes = [2, 1], strides = [1, 1]} : vector<2x8xf32> to vector<2x1xf32>
    %70 = vector.extract_strided_slice %1 {offsets = [1, 0], sizes = [1, 64], strides = [1, 1]} : vector<2x64xf32> to vector<1x64xf32>
    %71 = vector.broadcast %69 : vector<2x1xf32> to vector<2x64xf32>
    %72 = vector.broadcast %70 : vector<1x64xf32> to vector<2x64xf32>
    %73 = arith.mulf %71, %72 : vector<2x64xf32>
    %74 = arith.addf %68, %73 : vector<2x64xf32>
    %75 = vector.broadcast %2 : vector<1x64xf32> to vector<2x64xf32>
    %76 = arith.addf %74, %75 : vector<2x64xf32>
    %cst_13 = arith.constant 0.999994993 : f32
    %77 = vector.broadcast %cst_13 : f32 to vector<2x64xf32>
    %78 = arith.mulf %76, %77 : vector<2x64xf32>
    %cst_14 = arith.constant 0.000000e+00 : f32
    %79 = vector.broadcast %cst_14 : f32 to vector<2x64xf32>
    %80 = arith.cmpf ogt, %78, %79 : vector<2x64xf32>
    %cst_15 = arith.constant 0.00999999977 : f32
    %81 = vector.broadcast %cst_15 : f32 to vector<2x64xf32>
    %82 = arith.mulf %81, %78 : vector<2x64xf32>
    %83 = arith.select %80, %78, %82 : vector<2x64xi1>, vector<2x64xf32>
    %84 = arith.maximumf %63, %83 : vector<2x64xf32>
    %85 = tpu.concatenate %43, %84 in 0 : vector<2x64xf32>, vector<2x64xf32> -> vector<4x64xf32>
    %86 = arith.truncf %85 : vector<4x64xf32> to vector<4x64xbf16>
    %c0_16 = arith.constant 0 : index
    %c0_17 = arith.constant 0 : index
    %87 = vector.load %arg4[%c0_16, %c0_17] : memref<64x128xbf16, #tpu.memory_space<vmem>>, vector<64x128xbf16>
    %cst_18 = arith.constant dense<0.000000e+00> : vector<4x128xf32>
    %88 = tpu.matmul %86, %87, %cst_18 {dimension_numbers = #tpu.dot_dimension_numbers<[1], [0], [0], [1], [0, 0, 1, 1], [], []>} : vector<4x64xbf16>, vector<64x128xbf16>, vector<4x128xf32> -> vector<4x128xf32>
    %c0_19 = arith.constant 0 : index
    %c0_20 = arith.constant 0 : index
    %89 = vector.load %arg5[%c0_19, %c0_20] : memref<1x128xf32, #tpu.memory_space<vmem>>, vector<1x128xf32>
    %90 = vector.broadcast %89 : vector<1x128xf32> to vector<4x128xf32>
    %91 = arith.addf %88, %90 : vector<4x128xf32>
    %cst_21 = arith.constant 0.999994993 : f32
    %92 = vector.broadcast %cst_21 : f32 to vector<4x128xf32>
    %93 = arith.mulf %91, %92 : vector<4x128xf32>
    %cst_22 = arith.constant 0.000000e+00 : f32
    %94 = vector.broadcast %cst_22 : f32 to vector<4x128xf32>
    %95 = arith.cmpf ogt, %93, %94 : vector<4x128xf32>
    %cst_23 = arith.constant 0.00999999977 : f32
    %96 = vector.broadcast %cst_23 : f32 to vector<4x128xf32>
    %97 = arith.mulf %96, %93 : vector<4x128xf32>
    %98 = arith.select %95, %93, %97 : vector<4x128xi1>, vector<4x128xf32>
    %99 = arith.truncf %98 : vector<4x128xf32> to vector<4x128xbf16>
    %c0_24 = arith.constant 0 : index
    %c0_25 = arith.constant 0 : index
    %100 = vector.load %arg6[%c0_24, %c0_25] : memref<128x192xbf16, #tpu.memory_space<vmem>>, vector<128x192xbf16>
    %cst_26 = arith.constant dense<0.000000e+00> : vector<4x192xf32>
    %101 = tpu.matmul %99, %100, %cst_26 {dimension_numbers = #tpu.dot_dimension_numbers<[1], [0], [0], [1], [0, 0, 1, 1], [], []>} : vector<4x128xbf16>, vector<128x192xbf16>, vector<4x192xf32> -> vector<4x192xf32>
    %c0_27 = arith.constant 0 : index
    %c0_28 = arith.constant 0 : index
    %102 = vector.load %arg7[%c0_27, %c0_28] : memref<1x192xf32, #tpu.memory_space<vmem>>, vector<1x192xf32>
    %103 = vector.broadcast %102 : vector<1x192xf32> to vector<4x192xf32>
    %104 = arith.addf %101, %103 : vector<4x192xf32>
    %cst_29 = arith.constant 0.999994993 : f32
    %105 = vector.broadcast %cst_29 : f32 to vector<4x192xf32>
    %106 = arith.mulf %104, %105 : vector<4x192xf32>
    %cst_30 = arith.constant 0.000000e+00 : f32
    %107 = vector.broadcast %cst_30 : f32 to vector<4x192xf32>
    %108 = arith.cmpf ogt, %106, %107 : vector<4x192xf32>
    %cst_31 = arith.constant 0.00999999977 : f32
    %109 = vector.broadcast %cst_31 : f32 to vector<4x192xf32>
    %110 = arith.mulf %109, %106 : vector<4x192xf32>
    %111 = arith.select %108, %106, %110 : vector<4x192xi1>, vector<4x192xf32>
    %112 = arith.truncf %111 : vector<4x192xf32> to vector<4x192xbf16>
    %c0_32 = arith.constant 0 : index
    %c0_33 = arith.constant 0 : index
    %113 = vector.load %arg8[%c0_32, %c0_33] : memref<192x384xbf16, #tpu.memory_space<vmem>>, vector<192x384xbf16>
    %cst_34 = arith.constant dense<0.000000e+00> : vector<4x384xf32>
    %114 = tpu.matmul %112, %113, %cst_34 {dimension_numbers = #tpu.dot_dimension_numbers<[1], [0], [0], [1], [0, 0, 1, 1], [], []>} : vector<4x192xbf16>, vector<192x384xbf16>, vector<4x384xf32> -> vector<4x384xf32>
    %c0_35 = arith.constant 0 : index
    %c0_36 = arith.constant 0 : index
    %115 = vector.load %arg9[%c0_35, %c0_36] : memref<1x384xf32, #tpu.memory_space<vmem>>, vector<1x384xf32>
    %116 = vector.broadcast %115 : vector<1x384xf32> to vector<4x384xf32>
    %117 = arith.addf %114, %116 : vector<4x384xf32>
    %cst_37 = arith.constant 0.999994993 : f32
    %118 = vector.broadcast %cst_37 : f32 to vector<4x384xf32>
    %119 = arith.mulf %117, %118 : vector<4x384xf32>
    %cst_38 = arith.constant 0.000000e+00 : f32
    %120 = vector.broadcast %cst_38 : f32 to vector<4x384xf32>
    %121 = arith.cmpf ogt, %119, %120 : vector<4x384xf32>
    %cst_39 = arith.constant 0.00999999977 : f32
    %122 = vector.broadcast %cst_39 : f32 to vector<4x384xf32>
    %123 = arith.mulf %122, %119 : vector<4x384xf32>
    %124 = arith.select %121, %119, %123 : vector<4x384xi1>, vector<4x384xf32>
    %125 = vector.extract_strided_slice %124 {offsets = [0, 0], sizes = [2, 384], strides = [1, 1]} : vector<4x384xf32> to vector<2x384xf32>
    %126 = vector.extract_strided_slice %124 {offsets = [2, 0], sizes = [2, 384], strides = [1, 1]} : vector<4x384xf32> to vector<2x384xf32>
    %127 = arith.maximumf %125, %126 : vector<2x384xf32>
    %c0_40 = arith.constant 0 : index
    %c0_41 = arith.constant 0 : index
    %128 = vector.load %arg10[%c0_40, %c0_41] : memref<2x384xf32, #tpu.memory_space<vmem>>, vector<2x384xf32>
    tpu.vector_store %arg10[%c0_40, %c0_41], %127 {strides = array<i32>} : memref<2x384xf32, #tpu.memory_space<vmem>>, vector<2x384xf32>,
    return
  }
  func.func @transform_0(%arg0: i32) -> (i32, i32) {
    %c0_i32 = arith.constant 0 : i32
    %c0_i32_0 = arith.constant 0 : i32
    return %arg0, %c0_i32 : i32, i32
  }
  func.func @transform_1(%arg0: i32) -> (i32, i32) {
    %c0_i32 = arith.constant 0 : i32
    %c0_i32_0 = arith.constant 0 : i32
    %c0_i32_1 = arith.constant 0 : i32
    return %c0_i32, %c0_i32_0 : i32, i32
  }
  func.func @transform_2(%arg0: i32) -> (i32, i32) {
    %c0_i32 = arith.constant 0 : i32
    %c0_i32_0 = arith.constant 0 : i32
    %c0_i32_1 = arith.constant 0 : i32
    return %c0_i32, %c0_i32_0 : i32, i32
  }
  func.func @transform_3(%arg0: i32) -> (i32, i32) {
    %c0_i32 = arith.constant 0 : i32
    %c0_i32_0 = arith.constant 0 : i32
    %c0_i32_1 = arith.constant 0 : i32
    return %c0_i32, %c0_i32_0 : i32, i32
  }
  func.func @transform_4(%arg0: i32) -> (i32, i32) {
    %c0_i32 = arith.constant 0 : i32
    %c0_i32_0 = arith.constant 0 : i32
    %c0_i32_1 = arith.constant 0 : i32
    return %c0_i32, %c0_i32_0 : i32, i32
  }
  func.func @transform_5(%arg0: i32) -> (i32, i32) {
    %c0_i32 = arith.constant 0 : i32
    %c0_i32_0 = arith.constant 0 : i32
    %c0_i32_1 = arith.constant 0 : i32
    return %c0_i32, %c0_i32_0 : i32, i32
  }
  func.func @transform_6(%arg0: i32) -> (i32, i32) {
    %c0_i32 = arith.constant 0 : i32
    %c0_i32_0 = arith.constant 0 : i32
    %c0_i32_1 = arith.constant 0 : i32
    return %c0_i32, %c0_i32_0 : i32, i32
  }
  func.func @transform_7(%arg0: i32) -> (i32, i32) {
    %c0_i32 = arith.constant 0 : i32
    %c0_i32_0 = arith.constant 0 : i32
    %c0_i32_1 = arith.constant 0 : i32
    return %c0_i32, %c0_i32_0 : i32, i32
  }
  func.func @transform_8(%arg0: i32) -> (i32, i32) {
    %c0_i32 = arith.constant 0 : i32
    %c0_i32_0 = arith.constant 0 : i32
    %c0_i32_1 = arith.constant 0 : i32
    return %c0_i32, %c0_i32_0 : i32, i32
  }
  func.func @transform_9(%arg0: i32) -> (i32, i32) {
    %c0_i32 = arith.constant 0 : i32
    %c0_i32_0 = arith.constant 0 : i32
    return %arg0, %c0_i32 : i32, i32
  }
}

module attributes {stable_mosaic.version = 11 : i64} {
  func.func @lstm_cls_kernel(%arg0: i32, %arg1: memref<2x384xf32, #tpu.memory_space<vmem>>, %arg2: memref<96x1xf32, #tpu.memory_space<vmem>>, %arg3: memref<96x24xf32, #tpu.memory_space<vmem>>, %arg4: memref<96x1xf32, #tpu.memory_space<vmem>>, %arg5: memref<96x48xf32, #tpu.memory_space<vmem>>, %arg6: memref<96x1xf32, #tpu.memory_space<vmem>>, %arg7: memref<24x384xf32, #tpu.memory_space<vmem>>, %arg8: memref<24x384xf32, #tpu.memory_space<vmem>>, %arg9: memref<24x384xf32, #tpu.memory_space<vmem>>, %arg10: memref<24x384xf32, #tpu.memory_space<vmem>>, %arg11: memref<2x24x384xf32, #tpu.memory_space<vmem>>, %arg12: memref<2x768xf32, #tpu.memory_space<vmem>>, %arg13: memref<2x24x384xf32, #tpu.memory_space<vmem>>, %arg14: memref<2x24x384xf32, #tpu.memory_space<vmem>>) attributes {dimension_semantics = [#tpu.dimension_semantics<arbitrary>], iteration_bounds = array<i64: 1>, scalar_prefetch = 0 : i64, scratch_operands = 0 : i64, tpu.core_type = #tpu.core_type<tc>, window_params = [{pipeline_mode = #tpu.pipeline_mode<synchronous>, transform_indices = @transform_0, window_bounds = array<i64: 2, 384>}, {pipeline_mode = #tpu.pipeline_mode<synchronous>, transform_indices = @transform_1, window_bounds = array<i64: 96, 1>}, {pipeline_mode = #tpu.pipeline_mode<synchronous>, transform_indices = @transform_2, window_bounds = array<i64: 96, 24>}, {pipeline_mode = #tpu.pipeline_mode<synchronous>, transform_indices = @transform_3, window_bounds = array<i64: 96, 1>}, {pipeline_mode = #tpu.pipeline_mode<synchronous>, transform_indices = @transform_4, window_bounds = array<i64: 96, 48>}, {pipeline_mode = #tpu.pipeline_mode<synchronous>, transform_indices = @transform_5, window_bounds = array<i64: 96, 1>}, {pipeline_mode = #tpu.pipeline_mode<synchronous>, transform_indices = @transform_6, window_bounds = array<i64: 24, 384>}, {pipeline_mode = #tpu.pipeline_mode<synchronous>, transform_indices = @transform_7, window_bounds = array<i64: 24, 384>}, {pipeline_mode = #tpu.pipeline_mode<synchronous>, transform_indices = @transform_8, window_bounds = array<i64: 24, 384>}, {pipeline_mode = #tpu.pipeline_mode<synchronous>, transform_indices = @transform_9, window_bounds = array<i64: 24, 384>}, {pipeline_mode = #tpu.pipeline_mode<synchronous>, transform_indices = @transform_10, window_bounds = array<i64: 2, 24, 384>}, {pipeline_mode = #tpu.pipeline_mode<synchronous>, transform_indices = @transform_11, window_bounds = array<i64: 2, 768>}, {pipeline_mode = #tpu.pipeline_mode<synchronous>, transform_indices = @transform_12, window_bounds = array<i64: 2, 24, 384>}, {pipeline_mode = #tpu.pipeline_mode<synchronous>, transform_indices = @transform_13, window_bounds = array<i64: 2, 24, 384>}]} {
    %c0 = arith.constant 0 : index
    %c0_0 = arith.constant 0 : index
    %0 = vector.load %arg3[%c0, %c0_0] : memref<96x24xf32, #tpu.memory_space<vmem>>, vector<96x24xf32>
    %c0_1 = arith.constant 0 : index
    %c0_2 = arith.constant 0 : index
    %1 = vector.load %arg5[%c0_1, %c0_2] : memref<96x48xf32, #tpu.memory_space<vmem>>, vector<96x48xf32>
    %c0_3 = arith.constant 0 : index
    %c0_4 = arith.constant 0 : index
    %2 = vector.load %arg2[%c0_3, %c0_4] : memref<96x1xf32, #tpu.memory_space<vmem>>, vector<96x1xf32>
    %3 = vector.shape_cast %2 : vector<96x1xf32> to vector<96x1xf32>
    %4 = vector.broadcast %3 : vector<96x1xf32> to vector<96x384xf32>
    %c0_5 = arith.constant 0 : index
    %c0_6 = arith.constant 0 : index
    %5 = vector.load %arg4[%c0_5, %c0_6] : memref<96x1xf32, #tpu.memory_space<vmem>>, vector<96x1xf32>
    %6 = vector.shape_cast %5 : vector<96x1xf32> to vector<96x1xf32>
    %7 = vector.broadcast %6 : vector<96x1xf32> to vector<96x384xf32>
    %c0_7 = arith.constant 0 : index
    %c0_8 = arith.constant 0 : index
    %8 = vector.load %arg6[%c0_7, %c0_8] : memref<96x1xf32, #tpu.memory_space<vmem>>, vector<96x1xf32>
    %9 = vector.shape_cast %8 : vector<96x1xf32> to vector<96x1xf32>
    %10 = vector.broadcast %9 : vector<96x1xf32> to vector<96x384xf32>
    %cst = arith.constant 0.000000e+00 : f32
    %11 = vector.broadcast %cst : f32 to vector<24x384xf32>
    %c0_i32 = arith.constant 0 : i32
    %12 = arith.index_cast %c0_i32 : i32 to index
    %c0_9 = arith.constant 0 : index
    %13 = vector.load %arg1[%12, %c0_9] : memref<2x384xf32, #tpu.memory_space<vmem>>, vector<1x384xf32>
    %14 = vector.broadcast %13 : vector<1x384xf32> to vector<96x384xf32>
    %15 = arith.mulf %4, %14 : vector<96x384xf32>
    %cst_10 = arith.constant dense<0.000000e+00> : vector<96x384xf32>
    %16 = tpu.matmul %0, %11, %cst_10 {dimension_numbers = #tpu.dot_dimension_numbers<[1], [0], [0], [1], [0, 0, 1, 1], [], []>} : vector<96x24xf32>, vector<24x384xf32>, vector<96x384xf32> -> vector<96x384xf32>
    %17 = arith.addf %15, %16 : vector<96x384xf32>
    %18 = arith.addf %17, %7 : vector<96x384xf32>
    %19 = vector.extract_strided_slice %18 {offsets = [0, 0], sizes = [24, 384], strides = [1, 1]} : vector<96x384xf32> to vector<24x384xf32>
    %cst_11 = arith.constant 5.000000e-01 : f32
    %20 = vector.broadcast %cst_11 : f32 to vector<24x384xf32>
    %21 = arith.mulf %20, %19 : vector<24x384xf32>
    %22 = math.tanh %21 : vector<24x384xf32>
    %cst_12 = arith.constant 5.000000e-01 : f32
    %23 = vector.broadcast %cst_12 : f32 to vector<24x384xf32>
    %24 = arith.mulf %23, %22 : vector<24x384xf32>
    %cst_13 = arith.constant 5.000000e-01 : f32
    %25 = vector.broadcast %cst_13 : f32 to vector<24x384xf32>
    %26 = arith.addf %24, %25 : vector<24x384xf32>
    %27 = vector.extract_strided_slice %18 {offsets = [24, 0], sizes = [24, 384], strides = [1, 1]} : vector<96x384xf32> to vector<24x384xf32>
    %cst_14 = arith.constant 5.000000e-01 : f32
    %28 = vector.broadcast %cst_14 : f32 to vector<24x384xf32>
    %29 = arith.mulf %28, %27 : vector<24x384xf32>
    %30 = math.tanh %29 : vector<24x384xf32>
    %cst_15 = arith.constant 5.000000e-01 : f32
    %31 = vector.broadcast %cst_15 : f32 to vector<24x384xf32>
    %32 = arith.mulf %31, %30 : vector<24x384xf32>
    %cst_16 = arith.constant 5.000000e-01 : f32
    %33 = vector.broadcast %cst_16 : f32 to vector<24x384xf32>
    %34 = arith.addf %32, %33 : vector<24x384xf32>
    %35 = vector.extract_strided_slice %18 {offsets = [48, 0], sizes = [24, 384], strides = [1, 1]} : vector<96x384xf32> to vector<24x384xf32>
    %36 = math.tanh %35 : vector<24x384xf32>
    %37 = vector.extract_strided_slice %18 {offsets = [72, 0], sizes = [24, 384], strides = [1, 1]} : vector<96x384xf32> to vector<24x384xf32>
    %cst_17 = arith.constant 5.000000e-01 : f32
    %38 = vector.broadcast %cst_17 : f32 to vector<24x384xf32>
    %39 = arith.mulf %38, %37 : vector<24x384xf32>
    %40 = math.tanh %39 : vector<24x384xf32>
    %cst_18 = arith.constant 5.000000e-01 : f32
    %41 = vector.broadcast %cst_18 : f32 to vector<24x384xf32>
    %42 = arith.mulf %41, %40 : vector<24x384xf32>
    %cst_19 = arith.constant 5.000000e-01 : f32
    %43 = vector.broadcast %cst_19 : f32 to vector<24x384xf32>
    %44 = arith.addf %42, %43 : vector<24x384xf32>
    %45 = arith.mulf %34, %11 : vector<24x384xf32>
    %46 = arith.mulf %26, %36 : vector<24x384xf32>
    %47 = arith.addf %45, %46 : vector<24x384xf32>
    %48 = math.tanh %47 : vector<24x384xf32>
    %49 = arith.mulf %44, %48 : vector<24x384xf32>
    %50 = tpu.concatenate %49, %11 in 0 : vector<24x384xf32>, vector<24x384xf32> -> vector<48x384xf32>
    %cst_20 = arith.constant dense<0.000000e+00> : vector<96x384xf32>
    %51 = tpu.matmul %1, %50, %cst_20 {dimension_numbers = #tpu.dot_dimension_numbers<[1], [0], [0], [1], [0, 0, 1, 1], [], []>} : vector<96x48xf32>, vector<48x384xf32>, vector<96x384xf32> -> vector<96x384xf32>
    %52 = arith.addf %51, %10 : vector<96x384xf32>
    %53 = vector.extract_strided_slice %52 {offsets = [0, 0], sizes = [24, 384], strides = [1, 1]} : vector<96x384xf32> to vector<24x384xf32>
    %cst_21 = arith.constant 5.000000e-01 : f32
    %54 = vector.broadcast %cst_21 : f32 to vector<24x384xf32>
    %55 = arith.mulf %54, %53 : vector<24x384xf32>
    %56 = math.tanh %55 : vector<24x384xf32>
    %cst_22 = arith.constant 5.000000e-01 : f32
    %57 = vector.broadcast %cst_22 : f32 to vector<24x384xf32>
    %58 = arith.mulf %57, %56 : vector<24x384xf32>
    %cst_23 = arith.constant 5.000000e-01 : f32
    %59 = vector.broadcast %cst_23 : f32 to vector<24x384xf32>
    %60 = arith.addf %58, %59 : vector<24x384xf32>
    %61 = vector.extract_strided_slice %52 {offsets = [24, 0], sizes = [24, 384], strides = [1, 1]} : vector<96x384xf32> to vector<24x384xf32>
    %cst_24 = arith.constant 5.000000e-01 : f32
    %62 = vector.broadcast %cst_24 : f32 to vector<24x384xf32>
    %63 = arith.mulf %62, %61 : vector<24x384xf32>
    %64 = math.tanh %63 : vector<24x384xf32>
    %cst_25 = arith.constant 5.000000e-01 : f32
    %65 = vector.broadcast %cst_25 : f32 to vector<24x384xf32>
    %66 = arith.mulf %65, %64 : vector<24x384xf32>
    %cst_26 = arith.constant 5.000000e-01 : f32
    %67 = vector.broadcast %cst_26 : f32 to vector<24x384xf32>
    %68 = arith.addf %66, %67 : vector<24x384xf32>
    %69 = vector.extract_strided_slice %52 {offsets = [48, 0], sizes = [24, 384], strides = [1, 1]} : vector<96x384xf32> to vector<24x384xf32>
    %70 = math.tanh %69 : vector<24x384xf32>
    %71 = vector.extract_strided_slice %52 {offsets = [72, 0], sizes = [24, 384], strides = [1, 1]} : vector<96x384xf32> to vector<24x384xf32>
    %cst_27 = arith.constant 5.000000e-01 : f32
    %72 = vector.broadcast %cst_27 : f32 to vector<24x384xf32>
    %73 = arith.mulf %72, %71 : vector<24x384xf32>
    %74 = math.tanh %73 : vector<24x384xf32>
    %cst_28 = arith.constant 5.000000e-01 : f32
    %75 = vector.broadcast %cst_28 : f32 to vector<24x384xf32>
    %76 = arith.mulf %75, %74 : vector<24x384xf32>
    %cst_29 = arith.constant 5.000000e-01 : f32
    %77 = vector.broadcast %cst_29 : f32 to vector<24x384xf32>
    %78 = arith.addf %76, %77 : vector<24x384xf32>
    %79 = arith.mulf %68, %11 : vector<24x384xf32>
    %80 = arith.mulf %60, %70 : vector<24x384xf32>
    %81 = arith.addf %79, %80 : vector<24x384xf32>
    %82 = math.tanh %81 : vector<24x384xf32>
    %83 = arith.mulf %78, %82 : vector<24x384xf32>
    %c0_30 = arith.constant 0 : index
    %c0_31 = arith.constant 0 : index
    %84 = vector.load %arg7[%c0_30, %c0_31] : memref<24x384xf32, #tpu.memory_space<vmem>>, vector<24x384xf32>
    %85 = arith.mulf %83, %84 : vector<24x384xf32>
    %c0_32 = arith.constant 0 : index
    %c0_33 = arith.constant 0 : index
    %86 = vector.load %arg8[%c0_32, %c0_33] : memref<24x384xf32, #tpu.memory_space<vmem>>, vector<24x384xf32>
    %87 = arith.addf %85, %86 : vector<24x384xf32>
    %cst_34 = arith.constant 0.000000e+00 : f32
    %88 = vector.broadcast %cst_34 : f32 to vector<24x384xf32>
    %89 = arith.cmpf ogt, %87, %88 : vector<24x384xf32>
    %cst_35 = arith.constant 0.00999999977 : f32
    %90 = vector.broadcast %cst_35 : f32 to vector<24x384xf32>
    %91 = arith.mulf %90, %87 : vector<24x384xf32>
    %92 = arith.select %89, %87, %91 : vector<24x384xi1>, vector<24x384xf32>
    %c0_36 = arith.constant 0 : index
    %c0_37 = arith.constant 0 : index
    %93 = vector.load %arg9[%c0_36, %c0_37] : memref<24x384xf32, #tpu.memory_space<vmem>>, vector<24x384xf32>
    %94 = arith.mulf %92, %93 : vector<24x384xf32>
    %c0_38 = arith.constant 0 : index
    %c0_39 = arith.constant 0 : index
    %95 = vector.load %arg10[%c0_38, %c0_39] : memref<24x384xf32, #tpu.memory_space<vmem>>, vector<24x384xf32>
    %96 = arith.addf %94, %95 : vector<24x384xf32>
    %cst_40 = arith.constant 0.000000e+00 : f32
    %97 = vector.broadcast %cst_40 : f32 to vector<24x384xf32>
    %98 = arith.cmpf ogt, %96, %97 : vector<24x384xf32>
    %cst_41 = arith.constant 0.00999999977 : f32
    %99 = vector.broadcast %cst_41 : f32 to vector<24x384xf32>
    %100 = arith.mulf %99, %96 : vector<24x384xf32>
    %101 = arith.select %98, %96, %100 : vector<24x384xi1>, vector<24x384xf32>
    %c0_42 = arith.constant 0 : index
    %c0_43 = arith.constant 0 : index
    %c0_44 = arith.constant 0 : index
    %102 = vector.load %arg11[%c0_42, %c0_43, %c0_44] : memref<2x24x384xf32, #tpu.memory_space<vmem>>, vector<1x24x384xf32>
    %103 = vector.shape_cast %102 : vector<1x24x384xf32> to vector<24x384xf32>
    %104 = arith.mulf %101, %103 : vector<24x384xf32>
    %cst_45 = arith.constant dense<0.000000e+00> : vector<384xf32>
    %105 = vector.multi_reduction <add>, %104, %cst_45 [0] : vector<24x384xf32> to vector<384xf32>
    %106 = vector.shape_cast %105 : vector<384xf32> to vector<1x384xf32>
    %c1 = arith.constant 1 : index
    %c0_46 = arith.constant 0 : index
    %c0_47 = arith.constant 0 : index
    %107 = vector.load %arg11[%c1, %c0_46, %c0_47] : memref<2x24x384xf32, #tpu.memory_space<vmem>>, vector<1x24x384xf32>
    %108 = vector.shape_cast %107 : vector<1x24x384xf32> to vector<24x384xf32>
    %109 = arith.mulf %101, %108 : vector<24x384xf32>
    %cst_48 = arith.constant dense<0.000000e+00> : vector<384xf32>
    %110 = vector.multi_reduction <add>, %109, %cst_48 [0] : vector<24x384xf32> to vector<384xf32>
    %111 = vector.shape_cast %110 : vector<384xf32> to vector<1x384xf32>
    %112 = arith.index_cast %c0_i32 : i32 to index
    %c0_49 = arith.constant 0 : index
    %113 = vector.load %arg12[%112, %c0_49] : memref<2x768xf32, #tpu.memory_space<vmem>>, vector<1x384xf32>
    tpu.vector_store %arg12[%112, %c0_49], %106 {strides = array<i32>} : memref<2x768xf32, #tpu.memory_space<vmem>>, vector<1x384xf32>,
    %114 = arith.index_cast %c0_i32 : i32 to index
    %c384 = arith.constant 384 : index
    %115 = vector.load %arg12[%114, %c384] : memref<2x768xf32, #tpu.memory_space<vmem>>, vector<1x384xf32>
    tpu.vector_store %arg12[%114, %c384], %111 {strides = array<i32>} : memref<2x768xf32, #tpu.memory_space<vmem>>, vector<1x384xf32>,
    %c1_i32 = arith.constant 1 : i32
    %116 = arith.index_cast %c1_i32 : i32 to index
    %c0_50 = arith.constant 0 : index
    %117 = vector.load %arg1[%116, %c0_50] : memref<2x384xf32, #tpu.memory_space<vmem>>, vector<1x384xf32>
    %118 = vector.broadcast %117 : vector<1x384xf32> to vector<96x384xf32>
    %119 = arith.mulf %4, %118 : vector<96x384xf32>
    %cst_51 = arith.constant dense<0.000000e+00> : vector<96x384xf32>
    %120 = tpu.matmul %0, %49, %cst_51 {dimension_numbers = #tpu.dot_dimension_numbers<[1], [0], [0], [1], [0, 0, 1, 1], [], []>} : vector<96x24xf32>, vector<24x384xf32>, vector<96x384xf32> -> vector<96x384xf32>
    %121 = arith.addf %119, %120 : vector<96x384xf32>
    %122 = arith.addf %121, %7 : vector<96x384xf32>
    %123 = vector.extract_strided_slice %122 {offsets = [0, 0], sizes = [24, 384], strides = [1, 1]} : vector<96x384xf32> to vector<24x384xf32>
    %cst_52 = arith.constant 5.000000e-01 : f32
    %124 = vector.broadcast %cst_52 : f32 to vector<24x384xf32>
    %125 = arith.mulf %124, %123 : vector<24x384xf32>
    %126 = math.tanh %125 : vector<24x384xf32>
    %cst_53 = arith.constant 5.000000e-01 : f32
    %127 = vector.broadcast %cst_53 : f32 to vector<24x384xf32>
    %128 = arith.mulf %127, %126 : vector<24x384xf32>
    %cst_54 = arith.constant 5.000000e-01 : f32
    %129 = vector.broadcast %cst_54 : f32 to vector<24x384xf32>
    %130 = arith.addf %128, %129 : vector<24x384xf32>
    %131 = vector.extract_strided_slice %122 {offsets = [24, 0], sizes = [24, 384], strides = [1, 1]} : vector<96x384xf32> to vector<24x384xf32>
    %cst_55 = arith.constant 5.000000e-01 : f32
    %132 = vector.broadcast %cst_55 : f32 to vector<24x384xf32>
    %133 = arith.mulf %132, %131 : vector<24x384xf32>
    %134 = math.tanh %133 : vector<24x384xf32>
    %cst_56 = arith.constant 5.000000e-01 : f32
    %135 = vector.broadcast %cst_56 : f32 to vector<24x384xf32>
    %136 = arith.mulf %135, %134 : vector<24x384xf32>
    %cst_57 = arith.constant 5.000000e-01 : f32
    %137 = vector.broadcast %cst_57 : f32 to vector<24x384xf32>
    %138 = arith.addf %136, %137 : vector<24x384xf32>
    %139 = vector.extract_strided_slice %122 {offsets = [48, 0], sizes = [24, 384], strides = [1, 1]} : vector<96x384xf32> to vector<24x384xf32>
    %140 = math.tanh %139 : vector<24x384xf32>
    %141 = vector.extract_strided_slice %122 {offsets = [72, 0], sizes = [24, 384], strides = [1, 1]} : vector<96x384xf32> to vector<24x384xf32>
    %cst_58 = arith.constant 5.000000e-01 : f32
    %142 = vector.broadcast %cst_58 : f32 to vector<24x384xf32>
    %143 = arith.mulf %142, %141 : vector<24x384xf32>
    %144 = math.tanh %143 : vector<24x384xf32>
    %cst_59 = arith.constant 5.000000e-01 : f32
    %145 = vector.broadcast %cst_59 : f32 to vector<24x384xf32>
    %146 = arith.mulf %145, %144 : vector<24x384xf32>
    %cst_60 = arith.constant 5.000000e-01 : f32
    %147 = vector.broadcast %cst_60 : f32 to vector<24x384xf32>
    %148 = arith.addf %146, %147 : vector<24x384xf32>
    %149 = arith.mulf %138, %47 : vector<24x384xf32>
    %150 = arith.mulf %130, %140 : vector<24x384xf32>
    %151 = arith.addf %149, %150 : vector<24x384xf32>
    %152 = math.tanh %151 : vector<24x384xf32>
    %153 = arith.mulf %148, %152 : vector<24x384xf32>
    %154 = tpu.concatenate %153, %83 in 0 : vector<24x384xf32>, vector<24x384xf32> -> vector<48x384xf32>
    %cst_61 = arith.constant dense<0.000000e+00> : vector<96x384xf32>
    %155 = tpu.matmul %1, %154, %cst_61 {dimension_numbers = #tpu.dot_dimension_numbers<[1], [0], [0], [1], [0, 0, 1, 1], [], []>} : vector<96x48xf32>, vector<48x384xf32>, vector<96x384xf32> -> vector<96x384xf32>
    %156 = arith.addf %155, %10 : vector<96x384xf32>
    %157 = vector.extract_strided_slice %156 {offsets = [0, 0], sizes = [24, 384], strides = [1, 1]} : vector<96x384xf32> to vector<24x384xf32>
    %cst_62 = arith.constant 5.000000e-01 : f32
    %158 = vector.broadcast %cst_62 : f32 to vector<24x384xf32>
    %159 = arith.mulf %158, %157 : vector<24x384xf32>
    %160 = math.tanh %159 : vector<24x384xf32>
    %cst_63 = arith.constant 5.000000e-01 : f32
    %161 = vector.broadcast %cst_63 : f32 to vector<24x384xf32>
    %162 = arith.mulf %161, %160 : vector<24x384xf32>
    %cst_64 = arith.constant 5.000000e-01 : f32
    %163 = vector.broadcast %cst_64 : f32 to vector<24x384xf32>
    %164 = arith.addf %162, %163 : vector<24x384xf32>
    %165 = vector.extract_strided_slice %156 {offsets = [24, 0], sizes = [24, 384], strides = [1, 1]} : vector<96x384xf32> to vector<24x384xf32>
    %cst_65 = arith.constant 5.000000e-01 : f32
    %166 = vector.broadcast %cst_65 : f32 to vector<24x384xf32>
    %167 = arith.mulf %166, %165 : vector<24x384xf32>
    %168 = math.tanh %167 : vector<24x384xf32>
    %cst_66 = arith.constant 5.000000e-01 : f32
    %169 = vector.broadcast %cst_66 : f32 to vector<24x384xf32>
    %170 = arith.mulf %169, %168 : vector<24x384xf32>
    %cst_67 = arith.constant 5.000000e-01 : f32
    %171 = vector.broadcast %cst_67 : f32 to vector<24x384xf32>
    %172 = arith.addf %170, %171 : vector<24x384xf32>
    %173 = vector.extract_strided_slice %156 {offsets = [48, 0], sizes = [24, 384], strides = [1, 1]} : vector<96x384xf32> to vector<24x384xf32>
    %174 = math.tanh %173 : vector<24x384xf32>
    %175 = vector.extract_strided_slice %156 {offsets = [72, 0], sizes = [24, 384], strides = [1, 1]} : vector<96x384xf32> to vector<24x384xf32>
    %cst_68 = arith.constant 5.000000e-01 : f32
    %176 = vector.broadcast %cst_68 : f32 to vector<24x384xf32>
    %177 = arith.mulf %176, %175 : vector<24x384xf32>
    %178 = math.tanh %177 : vector<24x384xf32>
    %cst_69 = arith.constant 5.000000e-01 : f32
    %179 = vector.broadcast %cst_69 : f32 to vector<24x384xf32>
    %180 = arith.mulf %179, %178 : vector<24x384xf32>
    %cst_70 = arith.constant 5.000000e-01 : f32
    %181 = vector.broadcast %cst_70 : f32 to vector<24x384xf32>
    %182 = arith.addf %180, %181 : vector<24x384xf32>
    %183 = arith.mulf %172, %81 : vector<24x384xf32>
    %184 = arith.mulf %164, %174 : vector<24x384xf32>
    %185 = arith.addf %183, %184 : vector<24x384xf32>
    %186 = math.tanh %185 : vector<24x384xf32>
    %187 = arith.mulf %182, %186 : vector<24x384xf32>
    %c0_71 = arith.constant 0 : index
    %c0_72 = arith.constant 0 : index
    %188 = vector.load %arg7[%c0_71, %c0_72] : memref<24x384xf32, #tpu.memory_space<vmem>>, vector<24x384xf32>
    %189 = arith.mulf %187, %188 : vector<24x384xf32>
    %c0_73 = arith.constant 0 : index
    %c0_74 = arith.constant 0 : index
    %190 = vector.load %arg8[%c0_73, %c0_74] : memref<24x384xf32, #tpu.memory_space<vmem>>, vector<24x384xf32>
    %191 = arith.addf %189, %190 : vector<24x384xf32>
    %cst_75 = arith.constant 0.000000e+00 : f32
    %192 = vector.broadcast %cst_75 : f32 to vector<24x384xf32>
    %193 = arith.cmpf ogt, %191, %192 : vector<24x384xf32>
    %cst_76 = arith.constant 0.00999999977 : f32
    %194 = vector.broadcast %cst_76 : f32 to vector<24x384xf32>
    %195 = arith.mulf %194, %191 : vector<24x384xf32>
    %196 = arith.select %193, %191, %195 : vector<24x384xi1>, vector<24x384xf32>
    %c0_77 = arith.constant 0 : index
    %c0_78 = arith.constant 0 : index
    %197 = vector.load %arg9[%c0_77, %c0_78] : memref<24x384xf32, #tpu.memory_space<vmem>>, vector<24x384xf32>
    %198 = arith.mulf %196, %197 : vector<24x384xf32>
    %c0_79 = arith.constant 0 : index
    %c0_80 = arith.constant 0 : index
    %199 = vector.load %arg10[%c0_79, %c0_80] : memref<24x384xf32, #tpu.memory_space<vmem>>, vector<24x384xf32>
    %200 = arith.addf %198, %199 : vector<24x384xf32>
    %cst_81 = arith.constant 0.000000e+00 : f32
    %201 = vector.broadcast %cst_81 : f32 to vector<24x384xf32>
    %202 = arith.cmpf ogt, %200, %201 : vector<24x384xf32>
    %cst_82 = arith.constant 0.00999999977 : f32
    %203 = vector.broadcast %cst_82 : f32 to vector<24x384xf32>
    %204 = arith.mulf %203, %200 : vector<24x384xf32>
    %205 = arith.select %202, %200, %204 : vector<24x384xi1>, vector<24x384xf32>
    %c0_83 = arith.constant 0 : index
    %c0_84 = arith.constant 0 : index
    %c0_85 = arith.constant 0 : index
    %206 = vector.load %arg11[%c0_83, %c0_84, %c0_85] : memref<2x24x384xf32, #tpu.memory_space<vmem>>, vector<1x24x384xf32>
    %207 = vector.shape_cast %206 : vector<1x24x384xf32> to vector<24x384xf32>
    %208 = arith.mulf %205, %207 : vector<24x384xf32>
    %cst_86 = arith.constant dense<0.000000e+00> : vector<384xf32>
    %209 = vector.multi_reduction <add>, %208, %cst_86 [0] : vector<24x384xf32> to vector<384xf32>
    %210 = vector.shape_cast %209 : vector<384xf32> to vector<1x384xf32>
    %c1_87 = arith.constant 1 : index
    %c0_88 = arith.constant 0 : index
    %c0_89 = arith.constant 0 : index
    %211 = vector.load %arg11[%c1_87, %c0_88, %c0_89] : memref<2x24x384xf32, #tpu.memory_space<vmem>>, vector<1x24x384xf32>
    %212 = vector.shape_cast %211 : vector<1x24x384xf32> to vector<24x384xf32>
    %213 = arith.mulf %205, %212 : vector<24x384xf32>
    %cst_90 = arith.constant dense<0.000000e+00> : vector<384xf32>
    %214 = vector.multi_reduction <add>, %213, %cst_90 [0] : vector<24x384xf32> to vector<384xf32>
    %215 = vector.shape_cast %214 : vector<384xf32> to vector<1x384xf32>
    %216 = arith.index_cast %c1_i32 : i32 to index
    %c0_91 = arith.constant 0 : index
    %217 = vector.load %arg12[%216, %c0_91] : memref<2x768xf32, #tpu.memory_space<vmem>>, vector<1x384xf32>
    tpu.vector_store %arg12[%216, %c0_91], %210 {strides = array<i32>} : memref<2x768xf32, #tpu.memory_space<vmem>>, vector<1x384xf32>,
    %218 = arith.index_cast %c1_i32 : i32 to index
    %c384_92 = arith.constant 384 : index
    %219 = vector.load %arg12[%218, %c384_92] : memref<2x768xf32, #tpu.memory_space<vmem>>, vector<1x384xf32>
    tpu.vector_store %arg12[%218, %c384_92], %215 {strides = array<i32>} : memref<2x768xf32, #tpu.memory_space<vmem>>, vector<1x384xf32>,
    %c2_i32 = arith.constant 2 : i32
    %c0_93 = arith.constant 0 : index
    %c0_94 = arith.constant 0 : index
    %c0_95 = arith.constant 0 : index
    %220 = vector.load %arg13[%c0_93, %c0_94, %c0_95] : memref<2x24x384xf32, #tpu.memory_space<vmem>>, vector<1x24x384xf32>
    %221 = vector.shape_cast %220 : vector<1x24x384xf32> to vector<24x384xf32>
    %222 = vector.shape_cast %153 : vector<24x384xf32> to vector<1x24x384xf32>
    tpu.vector_store %arg13[%c0_93, %c0_94, %c0_95], %222 {strides = array<i32>} : memref<2x24x384xf32, #tpu.memory_space<vmem>>, vector<1x24x384xf32>,
    %c1_96 = arith.constant 1 : index
    %c0_97 = arith.constant 0 : index
    %c0_98 = arith.constant 0 : index
    %223 = vector.load %arg13[%c1_96, %c0_97, %c0_98] : memref<2x24x384xf32, #tpu.memory_space<vmem>>, vector<1x24x384xf32>
    %224 = vector.shape_cast %223 : vector<1x24x384xf32> to vector<24x384xf32>
    %225 = vector.shape_cast %187 : vector<24x384xf32> to vector<1x24x384xf32>
    tpu.vector_store %arg13[%c1_96, %c0_97, %c0_98], %225 {strides = array<i32>} : memref<2x24x384xf32, #tpu.memory_space<vmem>>, vector<1x24x384xf32>,
    %c0_99 = arith.constant 0 : index
    %c0_100 = arith.constant 0 : index
    %c0_101 = arith.constant 0 : index
    %226 = vector.load %arg14[%c0_99, %c0_100, %c0_101] : memref<2x24x384xf32, #tpu.memory_space<vmem>>, vector<1x24x384xf32>
    %227 = vector.shape_cast %226 : vector<1x24x384xf32> to vector<24x384xf32>
    %228 = vector.shape_cast %151 : vector<24x384xf32> to vector<1x24x384xf32>
    tpu.vector_store %arg14[%c0_99, %c0_100, %c0_101], %228 {strides = array<i32>} : memref<2x24x384xf32, #tpu.memory_space<vmem>>, vector<1x24x384xf32>,
    %c1_102 = arith.constant 1 : index
    %c0_103 = arith.constant 0 : index
    %c0_104 = arith.constant 0 : index
    %229 = vector.load %arg14[%c1_102, %c0_103, %c0_104] : memref<2x24x384xf32, #tpu.memory_space<vmem>>, vector<1x24x384xf32>
    %230 = vector.shape_cast %229 : vector<1x24x384xf32> to vector<24x384xf32>
    %231 = vector.shape_cast %185 : vector<24x384xf32> to vector<1x24x384xf32>
    tpu.vector_store %arg14[%c1_102, %c0_103, %c0_104], %231 {strides = array<i32>} : memref<2x24x384xf32, #tpu.memory_space<vmem>>, vector<1x24x384xf32>,
    return
  }
  func.func @transform_0(%arg0: i32) -> (i32, i32) {
    %c0_i32 = arith.constant 0 : i32
    %c0_i32_0 = arith.constant 0 : i32
    %c0_i32_1 = arith.constant 0 : i32
    return %c0_i32, %c0_i32_0 : i32, i32
  }
  func.func @transform_1(%arg0: i32) -> (i32, i32) {
    %c0_i32 = arith.constant 0 : i32
    %c0_i32_0 = arith.constant 0 : i32
    %c0_i32_1 = arith.constant 0 : i32
    return %c0_i32, %c0_i32_0 : i32, i32
  }
  func.func @transform_2(%arg0: i32) -> (i32, i32) {
    %c0_i32 = arith.constant 0 : i32
    %c0_i32_0 = arith.constant 0 : i32
    %c0_i32_1 = arith.constant 0 : i32
    return %c0_i32, %c0_i32_0 : i32, i32
  }
  func.func @transform_3(%arg0: i32) -> (i32, i32) {
    %c0_i32 = arith.constant 0 : i32
    %c0_i32_0 = arith.constant 0 : i32
    %c0_i32_1 = arith.constant 0 : i32
    return %c0_i32, %c0_i32_0 : i32, i32
  }
  func.func @transform_4(%arg0: i32) -> (i32, i32) {
    %c0_i32 = arith.constant 0 : i32
    %c0_i32_0 = arith.constant 0 : i32
    %c0_i32_1 = arith.constant 0 : i32
    return %c0_i32, %c0_i32_0 : i32, i32
  }
  func.func @transform_5(%arg0: i32) -> (i32, i32) {
    %c0_i32 = arith.constant 0 : i32
    %c0_i32_0 = arith.constant 0 : i32
    %c0_i32_1 = arith.constant 0 : i32
    return %c0_i32, %c0_i32_0 : i32, i32
  }
  func.func @transform_6(%arg0: i32) -> (i32, i32) {
    %c0_i32 = arith.constant 0 : i32
    %c0_i32_0 = arith.constant 0 : i32
    %c0_i32_1 = arith.constant 0 : i32
    return %c0_i32, %c0_i32_0 : i32, i32
  }
  func.func @transform_7(%arg0: i32) -> (i32, i32) {
    %c0_i32 = arith.constant 0 : i32
    %c0_i32_0 = arith.constant 0 : i32
    %c0_i32_1 = arith.constant 0 : i32
    return %c0_i32, %c0_i32_0 : i32, i32
  }
  func.func @transform_8(%arg0: i32) -> (i32, i32) {
    %c0_i32 = arith.constant 0 : i32
    %c0_i32_0 = arith.constant 0 : i32
    %c0_i32_1 = arith.constant 0 : i32
    return %c0_i32, %c0_i32_0 : i32, i32
  }
  func.func @transform_9(%arg0: i32) -> (i32, i32) {
    %c0_i32 = arith.constant 0 : i32
    %c0_i32_0 = arith.constant 0 : i32
    %c0_i32_1 = arith.constant 0 : i32
    return %c0_i32, %c0_i32_0 : i32, i32
  }
  func.func @transform_10(%arg0: i32) -> (i32, i32, i32) {
    %c0_i32 = arith.constant 0 : i32
    %c0_i32_0 = arith.constant 0 : i32
    %c0_i32_1 = arith.constant 0 : i32
    %c0_i32_2 = arith.constant 0 : i32
    return %c0_i32, %c0_i32_0, %c0_i32_1 : i32, i32, i32
  }
  func.func @transform_11(%arg0: i32) -> (i32, i32) {
    %c0_i32 = arith.constant 0 : i32
    %c0_i32_0 = arith.constant 0 : i32
    %c0_i32_1 = arith.constant 0 : i32
    return %c0_i32, %c0_i32_0 : i32, i32
  }
  func.func @transform_12(%arg0: i32) -> (i32, i32, i32) {
    %c0_i32 = arith.constant 0 : i32
    %c0_i32_0 = arith.constant 0 : i32
    %c0_i32_1 = arith.constant 0 : i32
    %c0_i32_2 = arith.constant 0 : i32
    return %c0_i32, %c0_i32_0, %c0_i32_1 : i32, i32, i32
  }
  func.func @transform_13(%arg0: i32) -> (i32, i32, i32) {
    %c0_i32 = arith.constant 0 : i32
    %c0_i32_0 = arith.constant 0 : i32
    %c0_i32_1 = arith.constant 0 : i32
    %c0_i32_2 = arith.constant 0 : i32
    return %c0_i32, %c0_i32_0, %c0_i32_1 : i32, i32, i32
  }
}

</mosaic_0001>

<llo_original>
// kernel: crnn_forward.2
$region0: #{crnn_forward.2}
  #allocation0 [shape = 'u32[]', space=smem, size = 0x4, offset = 0x4, fixed_abs, tag = 'smem constant byte address 0x4 - core index']
  #allocation1 [shape = 'u32[72,128]{1,0:T(1,128)}', space=vmem, size = 0x9000, scoped, tag = 'internal scratch']
  %s0 = inlined_call_operand.vmem [shape: f32[2,8], index: 0, kind: input, shape index: {}]
  %s1 = inlined_call_operand.vmem [shape: f32[2,64], index: 1, kind: input, shape index: {}]
  %s2 = inlined_call_operand.vmem [shape: f32[1,64], index: 2, kind: input, shape index: {}]
  %s3 = inlined_call_operand.vmem [shape: bf16[64,128], index: 3, kind: input, shape index: {}]
  %s4 = inlined_call_operand.vmem [shape: f32[1,128], index: 4, kind: input, shape index: {}]
  %s5 = inlined_call_operand.vmem [shape: bf16[128,192], index: 5, kind: input, shape index: {}]
  %s6 = inlined_call_operand.vmem [shape: f32[1,192], index: 6, kind: input, shape index: {}]
  %s7 = inlined_call_operand.vmem [shape: bf16[192,384], index: 7, kind: input, shape index: {}]
  %s8 = inlined_call_operand.vmem [shape: f32[1,384], index: 8, kind: input, shape index: {}]
  %s9 = inlined_call_operand.vmem [shape: f32[2,384], index: 9, kind: output, shape index: {}]
  %s10 = sld [smem:[#allocation0]]
  $region46: #{crnn_forward.2} parent=0
    _
  %s12 = ssub.s32 1, %s10
  %s13 = scalar_select 0, %s12, %s10
  // Predicated region
  $region2: #{crnn_forward.2} parent=0 // pred_check
    _
  $region3: #{crnn_forward.2} parent=0 // pred_check_branch
    %15 = sbr.rel (0) target = $region5
  $region4: #{crnn_forward.2} parent=0 // pred_region
    _
  $region5: #{crnn_forward.2} parent=0 // pred_fallthru
    _
  // Predicated region
  $region6: #{crnn_forward.2} parent=0 // pred_check
    _
  $region7: #{crnn_forward.2} parent=0 // pred_check_branch
    %17 = sbr.rel (0) target = $region9
  $region8: #{crnn_forward.2} parent=0 // pred_region
    _
  $region9: #{crnn_forward.2} parent=0 // pred_fallthru
    _
  // Predicated region
  $region10: #{crnn_forward.2} parent=0 // pred_check
    _
  $region11: #{crnn_forward.2} parent=0 // pred_check_branch
    %19 = sbr.rel (0) target = $region13
  $region12: #{crnn_forward.2} parent=0 // pred_region
    _
  $region13: #{crnn_forward.2} parent=0 // pred_fallthru
    _
  // Predicated region
  $region14: #{crnn_forward.2} parent=0 // pred_check
    _
  $region15: #{crnn_forward.2} parent=0 // pred_check_branch
    %21 = sbr.rel (0) target = $region17
  $region16: #{crnn_forward.2} parent=0 // pred_region
    _
  $region17: #{crnn_forward.2} parent=0 // pred_fallthru
    _
  // Predicated region
  $region18: #{crnn_forward.2} parent=0 // pred_check
    _
  $region19: #{crnn_forward.2} parent=0 // pred_check_branch
    %23 = sbr.rel (0) target = $region21
  $region20: #{crnn_forward.2} parent=0 // pred_region
    _
  $region21: #{crnn_forward.2} parent=0 // pred_fallthru
    _
  // Predicated region
  $region22: #{crnn_forward.2} parent=0 // pred_check
    _
  $region23: #{crnn_forward.2} parent=0 // pred_check_branch
    %25 = sbr.rel (0) target = $region25
  $region24: #{crnn_forward.2} parent=0 // pred_region
    _
  $region25: #{crnn_forward.2} parent=0 // pred_fallthru
    _
  // Predicated region
  $region26: #{crnn_forward.2} parent=0 // pred_check
    _
  $region27: #{crnn_forward.2} parent=0 // pred_check_branch
    %27 = sbr.rel (0) target = $region29
  $region28: #{crnn_forward.2} parent=0 // pred_region
    _
  $region29: #{crnn_forward.2} parent=0 // pred_fallthru
    _
  // Predicated region
  $region30: #{crnn_forward.2} parent=0 // pred_check
    _
  $region31: #{crnn_forward.2} parent=0 // pred_check_branch
    %29 = sbr.rel (0) target = $region33
  $region32: #{crnn_forward.2} parent=0 // pred_region
    _
  $region33: #{crnn_forward.2} parent=0 // pred_fallthru
    _
  // Predicated region
  $region34: #{crnn_forward.2} parent=0 // pred_check
    _
  $region35: #{crnn_forward.2} parent=0 // pred_check_branch
    %31 = sbr.rel (0) target = $region37
  $region36: #{crnn_forward.2} parent=0 // pred_region
    _
  $region37: #{crnn_forward.2} parent=0 // pred_fallthru
    _
  %v33 = vld [vmem:[%s0] sm:$0x3]
  %v34 = vld [vmem:[%s1] sm:$0x3]
  %v35 = vld [vmem:[%s2] sm:$0x1]
  %37 = vset.pattern.permute.xlu0 0
  %38 = vperm.xlu0 %37, %v33
  %v39 = vpop.permute.xlu0 %38
  %v41 = vperm.slane %v34, 0
  %v42 = vmul.f32 %v39, %v41
  %43 = vset.pattern.permute.xlu0 1
  %44 = vperm.xlu0 %43, %v33
  %v45 = vpop.permute.xlu0 %44
  %v47 = vperm.slane %v34, 1
  %v48 = vmul.f32 %v45, %v47
  %v49 = vadd.f32 %v42, %v48
  %v51 = vperm.slane %v35, 0
  %v53 = vadd.f32 %v49, %v51
  %v54 = vmul.f32 %v53, 0.999995
  %vm55 = vcmp.gt.f32.partialorder %v54, 0.0
  %v56 = vmul.f32 %v54, 0.01
  %v57 = vsel %vm55, %v54, %v56
  %58 = vset.pattern.permute.xlu0 2
  %59 = vperm.xlu0 %58, %v33
  %v60 = vpop.permute.xlu0 %59
  %v62 = vmul.f32 %v60, %v41
  %63 = vset.pattern.permute.xlu0 3
  %64 = vperm.xlu0 %63, %v33
  %v65 = vpop.permute.xlu0 %64
  %v67 = vmul.f32 %v65, %v47
  %v68 = vadd.f32 %v62, %v67
  %v69 = vadd.f32 %v68, %v51
  %v70 = vmul.f32 %v69, 0.999995
  %vm71 = vcmp.gt.f32.partialorder %v70, 0.0
  %v72 = vmul.f32 %v70, 0.01
  %v73 = vsel %vm71, %v70, %v72
  %v74 = vmax.f32 %v57, %v73
  %75 = vset.pattern.permute.xlu0 4
  %76 = vperm.xlu0 %75, %v33
  %v77 = vpop.permute.xlu0 %76
  %v79 = vmul.f32 %v77, %v41
  %80 = vset.pattern.permute.xlu0 5
  %81 = vperm.xlu0 %80, %v33
  %v82 = vpop.permute.xlu0 %81
  %v84 = vmul.f32 %v82, %v47
  %v85 = vadd.f32 %v79, %v84
  %v86 = vadd.f32 %v85, %v51
  %v87 = vmul.f32 %v86, 0.999995
  %vm88 = vcmp.gt.f32.partialorder %v87, 0.0
  %v89 = vmul.f32 %v87, 0.01
  %v90 = vsel %vm88, %v87, %v89
  %91 = vset.pattern.permute.xlu0 6
  %92 = vperm.xlu0 %91, %v33
  %v93 = vpop.permute.xlu0 %92
  %v95 = vmul.f32 %v93, %v41
  %96 = vset.pattern.permute.xlu0 7
  %97 = vperm.xlu0 %96, %v33
  %v98 = vpop.permute.xlu0 %97
  %v100 = vmul.f32 %v98, %v47
  %v101 = vadd.f32 %v95, %v100
  %v102 = vadd.f32 %v101, %v51
  %v103 = vmul.f32 %v102, 0.999995
  %vm104 = vcmp.gt.f32.partialorder %v103, 0.0
  %v105 = vmul.f32 %v103, 0.01
  %v106 = vsel %vm104, %v103, %v105
  %v107 = vmax.f32 %v90, %v106
  %v109 = vrot.slane %v107, 6
  %vm111 = vcmask 1041408
  %v112 = vsel %vm111, %v74, %v109
  %v113 = vpack.c.bf16 %v112, %v112
  %v114 = vld [vmem:[%s3] sm:$0xf]
  %v115 = vld [vmem:[%s3 + $0x4] sm:$0xf]
  %v116 = vld [vmem:[%s3 + $0x8] sm:$0xf]
  %v117 = vld [vmem:[%s3 + $0xc] sm:$0xf]
  %v118 = vld [vmem:[%s3 + $0x10] sm:$0xf]
  %v119 = vld [vmem:[%s3 + $0x14] sm:$0xf]
  %v120 = vld [vmem:[%s3 + $0x18] sm:$0xf]
  %v121 = vld [vmem:[%s3 + $0x1c] sm:$0xf]
  %v122 = vld [vmem:[%s4] sm:$0x1]
  %v124 = vperm.slane %v122, 0
  %v134 = vunpack.c.l.b16 %v114
  %v135 = vunpack.c.l.b16 %v115
  %v136 = vunpack.c.l.b16 %v116
  %v137 = vunpack.c.l.b16 %v117
  %v138 = vunpack.c.l.b16 %v118
  %v139 = vunpack.c.l.b16 %v119
  %v140 = vunpack.c.l.b16 %v120
  %v141 = vunpack.c.l.b16 %v121
  %v142 = vpack.c.b16 %v135, %v134
  %v143 = vpack.c.b16 %v137, %v136
  %v144 = vpack.c.b16 %v139, %v138
  %v145 = vpack.c.b16 %v141, %v140
  %vm150 = vcmask 523264
  %v152 = vsel %vm150, %v113, 0
  %154 = vmatpush.bf16.msra.mxu0 0
  %155 = vmatpush.bf16.msra.mxu0 0
  %156 = vmatpush.bf16.msra.mxu0 0
  %157 = vmatpush.bf16.msra.mxu0 0
  %158 = vmatpush.bf16.msra.mxu0 %v145
  %159 = vmatpush.bf16.msra.mxu0 %v144
  %160 = vmatpush.bf16.msra.mxu0 %v143
  %161 = vmatpush.bf16.msra.mxu0 %v142
  %162 = vmatmul.bf16.gmra.mxu0 %v152
  %v163 = vpop.f32.mrf.mxu0
  %v164 = vadd.f32 %v124, %v163
  %v165 = vpop.f32.mrf.mxu0
  %166 = vdwg.mxu0
  %v167 = vmul.f32 %v164, 0.999995
  %vm168 = vcmp.gt.f32.partialorder %v167, 0.0
  %v169 = vmul.f32 %v167, 0.01
  %v170 = vsel %vm168, %v167, %v169
  %v171 = vpack.c.bf16 %v170, %v170
  %v172 = vld [vmem:[%s5] sm:$0xff]
  %v173 = vld [vmem:[%s5 + $0x8] sm:$0xff]
  %v174 = vld [vmem:[%s5 + $0x10] sm:$0xff]
  %v175 = vld [vmem:[%s5 + $0x18] sm:$0xff]
  %v176 = vld [vmem:[%s5 + $0x20] sm:$0xff]
  %v177 = vld [vmem:[%s5 + $0x28] sm:$0xff]
  %v178 = vld [vmem:[%s5 + $0x30] sm:$0xff]
  %v179 = vld [vmem:[%s5 + $0x38] sm:$0xff]
  %v180 = vld [vmem:[%s5 + $0x40] sm:$0xff]
  %v181 = vld [vmem:[%s5 + $0x48] sm:$0xff]
  %v182 = vld [vmem:[%s5 + $0x50] sm:$0xff]
  %v183 = vld [vmem:[%s5 + $0x58] sm:$0xff]
  %v184 = vld [vmem:[%s5 + $0x60] sm:$0xff]
  %v185 = vld [vmem:[%s5 + $0x68] sm:$0xff]
  %v186 = vld [vmem:[%s5 + $0x70] sm:$0xff]
  %v187 = vld [vmem:[%s5 + $0x78] sm:$0xff]
  %v188 = vld [vmem:[%s6] sm:$0x3]
  %v190 = vperm.slane %v188, 0
  %v191 = vperm.slane %v188, 1
  %v210 = vunpack.c.l.b16 %v172
  %v211 = vunpack.c.h.b16 %v172
  %v212 = vunpack.c.l.b16 %v173
  %v213 = vunpack.c.h.b16 %v173
  %v214 = vunpack.c.l.b16 %v174
  %v215 = vunpack.c.h.b16 %v174
  %v216 = vunpack.c.l.b16 %v175
  %v217 = vunpack.c.h.b16 %v175
  %v218 = vunpack.c.l.b16 %v176
  %v219 = vunpack.c.h.b16 %v176
  %v220 = vunpack.c.l.b16 %v177
  %v221 = vunpack.c.h.b16 %v177
  %v222 = vunpack.c.l.b16 %v178
  %v223 = vunpack.c.h.b16 %v178
  %v224 = vunpack.c.l.b16 %v179
  %v225 = vunpack.c.h.b16 %v179
  %v226 = vunpack.c.l.b16 %v180
  %v227 = vunpack.c.h.b16 %v180
  %v228 = vunpack.c.l.b16 %v181
  %v229 = vunpack.c.h.b16 %v181
  %v230 = vunpack.c.l.b16 %v182
  %v231 = vunpack.c.h.b16 %v182
  %v232 = vunpack.c.l.b16 %v183
  %v233 = vunpack.c.h.b16 %v183
  %v234 = vunpack.c.l.b16 %v184
  %v235 = vunpack.c.h.b16 %v184
  %v236 = vunpack.c.l.b16 %v185
  %v237 = vunpack.c.h.b16 %v185
  %v238 = vunpack.c.l.b16 %v186
  %v239 = vunpack.c.h.b16 %v186
  %v240 = vunpack.c.l.b16 %v187
  %v241 = vunpack.c.h.b16 %v187
  %v242 = vpack.c.b16 %v212, %v210
  %v243 = vpack.c.b16 %v213, %v211
  %v244 = vpack.c.b16 %v216, %v214
  %v245 = vpack.c.b16 %v217, %v215
  %v246 = vpack.c.b16 %v220, %v218
  %v247 = vpack.c.b16 %v221, %v219
  %v248 = vpack.c.b16 %v224, %v222
  %v249 = vpack.c.b16 %v225, %v223
  %v250 = vpack.c.b16 %v228, %v226
  %v251 = vpack.c.b16 %v229, %v227
  %v252 = vpack.c.b16 %v232, %v230
  %v253 = vpack.c.b16 %v233, %v231
  %v254 = vpack.c.b16 %v236, %v234
  %v255 = vpack.c.b16 %v237, %v235
  %v256 = vpack.c.b16 %v240, %v238
  %v257 = vpack.c.b16 %v241, %v239
  %274 = vmatpush.bf16.msra.mxu0 %v256
  %275 = vmatpush.bf16.msra.mxu0 %v254
  %276 = vmatpush.bf16.msra.mxu0 %v252
  %277 = vmatpush.bf16.msra.mxu0 %v250
  %278 = vmatpush.bf16.msra.mxu0 %v248
  %279 = vmatpush.bf16.msra.mxu0 %v246
  %280 = vmatpush.bf16.msra.mxu0 %v244
  %281 = vmatpush.bf16.msra.mxu0 %v242
  %282 = vmatmul.bf16.gmra.mxu0 %v171
  %v283 = vpop.f32.mrf.mxu0
  %v284 = vadd.f32 %v190, %v283
  %v285 = vpop.f32.mrf.mxu0
  %286 = vdwg.mxu0
  %287 = vmatpush.bf16.msra.mxu0 %v257
  %288 = vmatpush.bf16.msra.mxu0 %v255
  %289 = vmatpush.bf16.msra.mxu0 %v253
  %290 = vmatpush.bf16.msra.mxu0 %v251
  %291 = vmatpush.bf16.msra.mxu0 %v249
  %292 = vmatpush.bf16.msra.mxu0 %v247
  %293 = vmatpush.bf16.msra.mxu0 %v245
  %294 = vmatpush.bf16.msra.mxu0 %v243
  %295 = vmatmul.bf16.gmra.mxu0 %v171
  %v296 = vpop.f32.mrf.mxu0
  %v297 = vadd.f32 %v191, %v296
  %v298 = vpop.f32.mrf.mxu0
  %299 = vdwg.mxu0
  %v300 = vmul.f32 %v284, 0.999995
  %v301 = vmul.f32 %v297, 0.999995
  %vm302 = vcmp.gt.f32.partialorder %v300, 0.0
  %vm303 = vcmp.gt.f32.partialorder %v301, 0.0
  %v304 = vmul.f32 %v300, 0.01
  %v305 = vmul.f32 %v301, 0.01
  %v306 = vsel %vm302, %v300, %v304
  %v307 = vsel %vm303, %v301, %v305
  %v308 = vpack.c.bf16 %v306, %v306
  %v309 = vpack.c.bf16 %v307, %v307
  %v310 = vld [vmem:[%s7] sm:$0xff]
  %v311 = vld [vmem:[%s7 + $0x8] sm:$0xf]
  %v312 = vld [vmem:[%s7 + $0xc] sm:$0xff]
  %v313 = vld [vmem:[%s7 + $0x14] sm:$0xf]
  %v314 = vld [vmem:[%s7 + $0x18] sm:$0xff]
  %v315 = vld [vmem:[%s7 + $0x20] sm:$0xf]
  %v316 = vld [vmem:[%s7 + $0x24] sm:$0xff]
  %v317 = vld [vmem:[%s7 + $0x2c] sm:$0xf]
  %v318 = vld [vmem:[%s7 + $0x30] sm:$0xff]
  %v319 = vld [vmem:[%s7 + $0x38] sm:$0xf]
  %v320 = vld [vmem:[%s7 + $0x3c] sm:$0xff]
  %v321 = vld [vmem:[%s7 + $0x44] sm:$0xf]
  %v322 = vld [vmem:[%s7 + $0x48] sm:$0xff]
  %v323 = vld [vmem:[%s7 + $0x50] sm:$0xf]
  %v324 = vld [vmem:[%s7 + $0x54] sm:$0xff]
  %v325 = vld [vmem:[%s7 + $0x5c] sm:$0xf]
  %v326 = vld [vmem:[%s7 + $0x60] sm:$0xff]
  %v327 = vld [vmem:[%s7 + $0x68] sm:$0xf]
  %v328 = vld [vmem:[%s7 + $0x6c] sm:$0xff]
  %v329 = vld [vmem:[%s7 + $0x74] sm:$0xf]
  %v330 = vld [vmem:[%s7 + $0x78] sm:$0xff]
  %v331 = vld [vmem:[%s7 + $0x80] sm:$0xf]
  %v332 = vld [vmem:[%s7 + $0x84] sm:$0xff]
  %v333 = vld [vmem:[%s7 + $0x8c] sm:$0xf]
  %v334 = vld [vmem:[%s7 + $0x90] sm:$0xff]
  %v335 = vld [vmem:[%s7 + $0x98] sm:$0xf]
  %v336 = vld [vmem:[%s7 + $0x9c] sm:$0xff]
  %v337 = vld [vmem:[%s7 + $0xa4] sm:$0xf]
  %v338 = vld [vmem:[%s7 + $0xa8] sm:$0xff]
  %v339 = vld [vmem:[%s7 + $0xb0] sm:$0xf]
  %v340 = vld [vmem:[%s7 + $0xb4] sm:$0xff]
  %v341 = vld [vmem:[%s7 + $0xbc] sm:$0xf]
  %v342 = vld [vmem:[%s7 + $0xc0] sm:$0xff]
  %v343 = vld [vmem:[%s7 + $0xc8] sm:$0xf]
  %v344 = vld [vmem:[%s7 + $0xcc] sm:$0xff]
  %v345 = vld [vmem:[%s7 + $0xd4] sm:$0xf]
  %v346 = vld [vmem:[%s7 + $0xd8] sm:$0xff]
  %v347 = vld [vmem:[%s7 + $0xe0] sm:$0xf]
  %v348 = vld [vmem:[%s7 + $0xe4] sm:$0xff]
  %v349 = vld [vmem:[%s7 + $0xec] sm:$0xf]
  %v350 = vld [vmem:[%s7 + $0xf0] sm:$0xff]
  %v351 = vld [vmem:[%s7 + $0xf8] sm:$0xf]
  %v352 = vld [vmem:[%s7 + $0xfc] sm:$0xff]
  %v353 = vld [vmem:[%s7 + $0x104] sm:$0xf]
  %v354 = vld [vmem:[%s7 + $0x108] sm:$0xff]
  %v355 = vld [vmem:[%s7 + $0x110] sm:$0xf]
  %v356 = vld [vmem:[%s7 + $0x114] sm:$0xff]
  %v357 = vld [vmem:[%s7 + $0x11c] sm:$0xf]
  %v358 = vld [vmem:[%s8] sm:$0x7]
  %v360 = vperm.slane %v358, 0
  %v361 = vperm.slane %v358, 1
  %v362 = vperm.slane %v358, 2
  %v414 = vunpack.c.l.b16 %v310
  %v415 = vunpack.c.h.b16 %v310
  %v416 = vunpack.c.l.b16 %v311
  %v417 = vunpack.c.l.b16 %v312
  %v418 = vunpack.c.h.b16 %v312
  %v419 = vunpack.c.l.b16 %v313
  %v420 = vunpack.c.l.b16 %v314
  %v421 = vunpack.c.h.b16 %v314
  %v422 = vunpack.c.l.b16 %v315
  %v423 = vunpack.c.l.b16 %v316
  %v424 = vunpack.c.h.b16 %v316
  %v425 = vunpack.c.l.b16 %v317
  %v426 = vunpack.c.l.b16 %v318
  %v427 = vunpack.c.h.b16 %v318
  %v428 = vunpack.c.l.b16 %v319
  %v429 = vunpack.c.l.b16 %v320
  %v430 = vunpack.c.h.b16 %v320
  %v431 = vunpack.c.l.b16 %v321
  %v432 = vunpack.c.l.b16 %v322
  %v433 = vunpack.c.h.b16 %v322
  %v434 = vunpack.c.l.b16 %v323
  %v435 = vunpack.c.l.b16 %v324
  %v436 = vunpack.c.h.b16 %v324
  %v437 = vunpack.c.l.b16 %v325
  %v438 = vunpack.c.l.b16 %v326
  %v439 = vunpack.c.h.b16 %v326
  %v440 = vunpack.c.l.b16 %v327
  %v441 = vunpack.c.l.b16 %v328
  %v442 = vunpack.c.h.b16 %v328
  %v443 = vunpack.c.l.b16 %v329
  %v444 = vunpack.c.l.b16 %v330
  %v445 = vunpack.c.h.b16 %v330
  %v446 = vunpack.c.l.b16 %v331
  %v447 = vunpack.c.l.b16 %v332
  %v448 = vunpack.c.h.b16 %v332
  %v449 = vunpack.c.l.b16 %v333
  %v450 = vunpack.c.l.b16 %v334
  %v451 = vunpack.c.h.b16 %v334
  %v452 = vunpack.c.l.b16 %v335
  %v453 = vunpack.c.l.b16 %v336
  %v454 = vunpack.c.h.b16 %v336
  %v455 = vunpack.c.l.b16 %v337
  %v456 = vunpack.c.l.b16 %v338
  %v457 = vunpack.c.h.b16 %v338
  %v458 = vunpack.c.l.b16 %v339
  %v459 = vunpack.c.l.b16 %v340
  %v460 = vunpack.c.h.b16 %v340
  %v461 = vunpack.c.l.b16 %v341
  %v462 = vunpack.c.l.b16 %v342
  %v463 = vunpack.c.h.b16 %v342
  %v464 = vunpack.c.l.b16 %v343
  %v465 = vunpack.c.l.b16 %v344
  %v466 = vunpack.c.h.b16 %v344
  %v467 = vunpack.c.l.b16 %v345
  %v468 = vunpack.c.l.b16 %v346
  %v469 = vunpack.c.h.b16 %v346
  %v470 = vunpack.c.l.b16 %v347
  %v471 = vunpack.c.l.b16 %v348
  %v472 = vunpack.c.h.b16 %v348
  %v473 = vunpack.c.l.b16 %v349
  %v474 = vunpack.c.l.b16 %v350
  %v475 = vunpack.c.h.b16 %v350
  %v476 = vunpack.c.l.b16 %v351
  %v477 = vunpack.c.l.b16 %v352
  %v478 = vunpack.c.h.b16 %v352
  %v479 = vunpack.c.l.b16 %v353
  %v480 = vunpack.c.l.b16 %v354
  %v481 = vunpack.c.h.b16 %v354
  %v482 = vunpack.c.l.b16 %v355
  %v483 = vunpack.c.l.b16 %v356
  %v484 = vunpack.c.h.b16 %v356
  %v485 = vunpack.c.l.b16 %v357
  %v486 = vpack.c.b16 %v417, %v414
  %v487 = vpack.c.b16 %v418, %v415
  %v488 = vpack.c.b16 %v419, %v416
  %v489 = vpack.c.b16 %v423, %v420
  %v490 = vpack.c.b16 %v424, %v421
  %v491 = vpack.c.b16 %v425, %v422
  %v492 = vpack.c.b16 %v429, %v426
  %v493 = vpack.c.b16 %v430, %v427
  %v494 = vpack.c.b16 %v431, %v428
  %v495 = vpack.c.b16 %v435, %v432
  %v496 = vpack.c.b16 %v436, %v433
  %v497 = vpack.c.b16 %v437, %v434
  %v498 = vpack.c.b16 %v441, %v438
  %v499 = vpack.c.b16 %v442, %v439
  %v500 = vpack.c.b16 %v443, %v440
  %v501 = vpack.c.b16 %v447, %v444
  %v502 = vpack.c.b16 %v448, %v445
  %v503 = vpack.c.b16 %v449, %v446
  %v504 = vpack.c.b16 %v453, %v450
  %v505 = vpack.c.b16 %v454, %v451
  %v506 = vpack.c.b16 %v455, %v452
  %v507 = vpack.c.b16 %v459, %v456
  %v508 = vpack.c.b16 %v460, %v457
  %v509 = vpack.c.b16 %v461, %v458
  %v510 = vpack.c.b16 %v465, %v462
  %v511 = vpack.c.b16 %v466, %v463
  %v512 = vpack.c.b16 %v467, %v464
  %v513 = vpack.c.b16 %v471, %v468
  %v514 = vpack.c.b16 %v472, %v469
  %v515 = vpack.c.b16 %v473, %v470
  %v516 = vpack.c.b16 %v477, %v474
  %v517 = vpack.c.b16 %v478, %v475
  %v518 = vpack.c.b16 %v479, %v476
  %v519 = vpack.c.b16 %v483, %v480
  %v520 = vpack.c.b16 %v484, %v481
  %v521 = vpack.c.b16 %v485, %v482
  %v559 = vsel %vm150, %v309, 0
  %561 = vmatpush.bf16.msra.mxu0 %v507
  %562 = vmatpush.bf16.msra.mxu0 %v504
  %563 = vmatpush.bf16.msra.mxu0 %v501
  %564 = vmatpush.bf16.msra.mxu0 %v498
  %565 = vmatpush.bf16.msra.mxu0 %v495
  %566 = vmatpush.bf16.msra.mxu0 %v492
  %567 = vmatpush.bf16.msra.mxu0 %v489
  %568 = vmatpush.bf16.msra.mxu0 %v486
  %569 = vmatmul.bf16.gmra.mxu0 %v308
  %v570 = vpop.f32.mrf.mxu0
  %v571 = vadd.f32 %v360, %v570
  %v572 = vpop.f32.mrf.mxu0
  %573 = vdwg.mxu0
  %574 = vmatpush.bf16.msra.mxu0 0
  %575 = vmatpush.bf16.msra.mxu0 0
  %576 = vmatpush.bf16.msra.mxu0 0
  %577 = vmatpush.bf16.msra.mxu0 0
  %578 = vmatpush.bf16.msra.mxu0 %v519
  %579 = vmatpush.bf16.msra.mxu0 %v516
  %580 = vmatpush.bf16.msra.mxu0 %v513
  %581 = vmatpush.bf16.msra.mxu0 %v510
  %582 = vmatmul.bf16.gmra.mxu0 %v559
  %v583 = vpop.f32.mrf.mxu0
  %v584 = vadd.f32 %v571, %v583
  %v585 = vpop.f32.mrf.mxu0
  %586 = vdwg.mxu0
  %587 = vmatpush.bf16.msra.mxu0 %v508
  %588 = vmatpush.bf16.msra.mxu0 %v505
  %589 = vmatpush.bf16.msra.mxu0 %v502
  %590 = vmatpush.bf16.msra.mxu0 %v499
  %591 = vmatpush.bf16.msra.mxu0 %v496
  %592 = vmatpush.bf16.msra.mxu0 %v493
  %593 = vmatpush.bf16.msra.mxu0 %v490
  %594 = vmatpush.bf16.msra.mxu0 %v487
  %595 = vmatmul.bf16.gmra.mxu0 %v308
  %v596 = vpop.f32.mrf.mxu0
  %v597 = vadd.f32 %v361, %v596
  %v598 = vpop.f32.mrf.mxu0
  %599 = vdwg.mxu0
  %600 = vmatpush.bf16.msra.mxu0 0
  %601 = vmatpush.bf16.msra.mxu0 0
  %602 = vmatpush.bf16.msra.mxu0 0
  %603 = vmatpush.bf16.msra.mxu0 0
  %604 = vmatpush.bf16.msra.mxu0 %v520
  %605 = vmatpush.bf16.msra.mxu0 %v517
  %606 = vmatpush.bf16.msra.mxu0 %v514
  %607 = vmatpush.bf16.msra.mxu0 %v511
  %608 = vmatmul.bf16.gmra.mxu0 %v559
  %v609 = vpop.f32.mrf.mxu0
  %v610 = vadd.f32 %v597, %v609
  %v611 = vpop.f32.mrf.mxu0
  %612 = vdwg.mxu0
  %613 = vmatpush.bf16.msra.mxu0 %v509
  %614 = vmatpush.bf16.msra.mxu0 %v506
  %615 = vmatpush.bf16.msra.mxu0 %v503
  %616 = vmatpush.bf16.msra.mxu0 %v500
  %617 = vmatpush.bf16.msra.mxu0 %v497
  %618 = vmatpush.bf16.msra.mxu0 %v494
  %619 = vmatpush.bf16.msra.mxu0 %v491
  %620 = vmatpush.bf16.msra.mxu0 %v488
  %621 = vmatmul.bf16.gmra.mxu0 %v308
  %v622 = vpop.f32.mrf.mxu0
  %v623 = vadd.f32 %v362, %v622
  %v624 = vpop.f32.mrf.mxu0
  %625 = vdwg.mxu0
  %626 = vmatpush.bf16.msra.mxu0 0
  %627 = vmatpush.bf16.msra.mxu0 0
  %628 = vmatpush.bf16.msra.mxu0 0
  %629 = vmatpush.bf16.msra.mxu0 0
  %630 = vmatpush.bf16.msra.mxu0 %v521
  %631 = vmatpush.bf16.msra.mxu0 %v518
  %632 = vmatpush.bf16.msra.mxu0 %v515
  %633 = vmatpush.bf16.msra.mxu0 %v512
  %634 = vmatmul.bf16.gmra.mxu0 %v559
  %v635 = vpop.f32.mrf.mxu0
  %v636 = vadd.f32 %v623, %v635
  %v637 = vpop.f32.mrf.mxu0
  %638 = vdwg.mxu0
  %v639 = vmul.f32 %v584, 0.999995
  %v640 = vmul.f32 %v610, 0.999995
  %v641 = vmul.f32 %v636, 0.999995
  %vm642 = vcmp.gt.f32.partialorder %v639, 0.0
  %vm643 = vcmp.gt.f32.partialorder %v640, 0.0
  %vm644 = vcmp.gt.f32.partialorder %v641, 0.0
  %v645 = vmul.f32 %v639, 0.01
  %v646 = vmul.f32 %v640, 0.01
  %v647 = vmul.f32 %v641, 0.01
  %v648 = vsel %vm642, %v639, %v645
  %v649 = vsel %vm643, %v640, %v646
  %v650 = vsel %vm644, %v641, %v647
  %v654 = vrot.slane %v648, 2
  %v655 = vrot.slane %v649, 2
  %v656 = vrot.slane %v650, 2
  %v660 = vmax.f32 %v648, %v654
  %v661 = vmax.f32 %v649, %v655
  %v662 = vmax.f32 %v650, %v656
  %v666 = vrot.slane %v661, 6
  %v667 = vrot.slane %v662, 4
  %v668 = vsel %vm111, %v660, %v666
  %vm669 = vcmask 1043456
  %v670 = vsel %vm669, %v668, %v667
  %672 = vst [vmem:[%s9] sm:$0x3f] %v670
  // Predicated region
  $region38: #{crnn_forward.2} parent=0 // pred_check
    _
  $region39: #{crnn_forward.2} parent=0 // pred_check_branch
    %674 = sbr.rel (0) target = $region41
  $region40: #{crnn_forward.2} parent=0 // pred_region
    _
  $region41: #{crnn_forward.2} parent=0 // pred_fallthru
    _
  // Predicated region
  $region42: #{crnn_forward.2} parent=0 // pred_check
    _
  $region43: #{crnn_forward.2} parent=0 // pred_check_branch
    %676 = sbr.rel (0) target = $region45
  $region44: #{crnn_forward.2} parent=0 // pred_region
    _
  $region45: #{crnn_forward.2} parent=0 // pred_fallthru
    _

// kernel: crnn_forward.3
$region0: #{crnn_forward.3}
  #allocation0 [shape = 'u32[]', space=smem, size = 0x4, offset = 0x4, fixed_abs, tag = 'smem constant byte address 0x4 - core index']
  #allocation1 [shape = 'u32[72,128]{1,0:T(1,128)}', space=vmem, size = 0x9000, scoped, tag = 'internal scratch']
  %s0 = inlined_call_operand.vmem [shape: f32[2,384], index: 0, kind: input, shape index: {}]
  %s1 = inlined_call_operand.vmem [shape: f32[96,1], index: 1, kind: input, shape index: {}]
  %s2 = inlined_call_operand.vmem [shape: f32[96,24], index: 2, kind: input, shape index: {}]
  %s3 = inlined_call_operand.vmem [shape: f32[96,1], index: 3, kind: input, shape index: {}]
  %s4 = inlined_call_operand.vmem [shape: f32[96,48], index: 4, kind: input, shape index: {}]
  %s5 = inlined_call_operand.vmem [shape: f32[96,1], index: 5, kind: input, shape index: {}]
  %s6 = inlined_call_operand.vmem [shape: f32[24,384], index: 6, kind: input, shape index: {}]
  %s7 = inlined_call_operand.hbm [shape: f32[24,384], index: 7, kind: input, shape index: {}]
  %s8 = inlined_call_operand.hbm [shape: f32[24,384], index: 8, kind: input, shape index: {}]
  %s9 = inlined_call_operand.hbm [shape: f32[24,384], index: 9, kind: input, shape index: {}]
  %s10 = inlined_call_operand.vmem [shape: f32[2,24,384], index: 10, kind: input, shape index: {}]
  %s11 = inlined_call_operand.vmem [shape: f32[2,768], index: 11, kind: output, shape index: {0}]
  %s12 = inlined_call_operand.vmem [shape: f32[2,24,384], index: 12, kind: output, shape index: {1}]
  %s13 = inlined_call_operand.vmem [shape: f32[2,24,384], index: 13, kind: output, shape index: {2}]
  %14 = xla_tuple %s11, %s12, %s13
  %s15 = sld [smem:[#allocation0]]
  $region82: #{crnn_forward.3} parent=0
    _
  %s17 = ssub.s32 1, %s15
  %s18 = scalar_select 0, %s17, %s15
  $region1: #{crnn_forward.3} parent=0
    #allocation2 [shape = 'u8[36864]{0}', space=vmem, size = 0x9000, scoped, tag = 'input window, operand 7, single buffered']
    #allocation3 [shape = 's32[1]{0}', space=sflag, size = 0x4, scoped, tag = 'scoped memory for crnn_forward.3']
    #allocation4 [shape = 'u8[36864]{0}', space=vmem, size = 0x9000, scoped, tag = 'input window, operand 8, single buffered']
    #allocation5 [shape = 's32[1]{0}', space=sflag, size = 0x4, scoped, tag = 'scoped memory for crnn_forward.3']
    #allocation6 [shape = 'u8[36864]{0}', space=vmem, size = 0x9000, scoped, tag = 'input window, operand 9, single buffered']
    %19 = vsyncpa [#allocation3], 0
    %20 = vsyncpa [#allocation5], 0
    // Predicated region
    $region2: #{crnn_forward.3} parent=1 // pred_check
      _
    $region3: #{crnn_forward.3} parent=1 // pred_check_branch
      %22 = sbr.rel (0) target = $region5
    $region4: #{crnn_forward.3} parent=1 // pred_region
      _
    $region5: #{crnn_forward.3} parent=1 // pred_fallthru
      _
    // Predicated region
    $region6: #{crnn_forward.3} parent=1 // pred_check
      _
    $region7: #{crnn_forward.3} parent=1 // pred_check_branch
      %24 = sbr.rel (0) target = $region9
    $region8: #{crnn_forward.3} parent=1 // pred_region
      _
    $region9: #{crnn_forward.3} parent=1 // pred_fallthru
      _
    // Predicated region
    $region10: #{crnn_forward.3} parent=1 // pred_check
      _
    $region11: #{crnn_forward.3} parent=1 // pred_check_branch
      %26 = sbr.rel (0) target = $region13
    $region12: #{crnn_forward.3} parent=1 // pred_region
      _
    $region13: #{crnn_forward.3} parent=1 // pred_fallthru
      _
    // Predicated region
    $region14: #{crnn_forward.3} parent=1 // pred_check
      _
    $region15: #{crnn_forward.3} parent=1 // pred_check_branch
      %28 = sbr.rel (0) target = $region17
    $region16: #{crnn_forward.3} parent=1 // pred_region
      _
    $region17: #{crnn_forward.3} parent=1 // pred_fallthru
      _
    // Predicated region
    $region18: #{crnn_forward.3} parent=1 // pred_check
      _
    $region19: #{crnn_forward.3} parent=1 // pred_check_branch
      %30 = sbr.rel (0) target = $region21
    $region20: #{crnn_forward.3} parent=1 // pred_region
      _
    $region21: #{crnn_forward.3} parent=1 // pred_fallthru
      _
    // Predicated region
    $region22: #{crnn_forward.3} parent=1 // pred_check
      _
    $region23: #{crnn_forward.3} parent=1 // pred_check_branch
      %32 = sbr.rel (0) target = $region25
    $region24: #{crnn_forward.3} parent=1 // pred_region
      _
    $region25: #{crnn_forward.3} parent=1 // pred_fallthru
      _
    // Predicated region
    $region26: #{crnn_forward.3} parent=1 // pred_check
      _
    $region27: #{crnn_forward.3} parent=1 // pred_check_branch
      %34 = sbr.rel (0) target = $region29
    $region28: #{crnn_forward.3} parent=1 // pred_region
      _
    $region29: #{crnn_forward.3} parent=1 // pred_fallthru
      _
    // Predicated region
    $region30: #{crnn_forward.3} parent=1 // pred_check
      _
    $region31: #{crnn_forward.3} parent=1 // pred_check_branch
      %36 = sbr.rel (0) target = $region33
    $region32: #{crnn_forward.3} parent=1 // pred_region
      %38 = vsyncadd [#allocation3], 0
      %s39 = sshll.u32 %s7, 4
      %s40 = int_to_ptr.hbm [resolvable:$true] %s39
      %s41 = sshll.u32 [#allocation2], 4
      %s42 = int_to_ptr.vmem [resolvable:$true] %s41
      %47 = dma.hbm_to_vmem [thread:$0]  %s40, 1152, %s42, [#allocation3], 384, 384, 24
    $region33: #{crnn_forward.3} parent=1 // pred_fallthru
      _
    // Predicated region
    $region34: #{crnn_forward.3} parent=1 // pred_check
      _
    $region35: #{crnn_forward.3} parent=1 // pred_check_branch
      %49 = sbr.rel (0) target = $region37
    $region36: #{crnn_forward.3} parent=1 // pred_region
      %51 = vsyncadd [#allocation5], 0
      %s52 = sshll.u32 %s8, 4
      %s53 = int_to_ptr.hbm [resolvable:$true] %s52
      %s54 = sshll.u32 [#allocation4], 4
      %s55 = int_to_ptr.vmem [resolvable:$true] %s54
      %60 = dma.hbm_to_vmem [thread:$0]  %s53, 1152, %s55, [#allocation5], 384, 384, 24
    $region37: #{crnn_forward.3} parent=1 // pred_fallthru
      _
    // Predicated region
    $region38: #{crnn_forward.3} parent=1 // pred_check
      _
    $region39: #{crnn_forward.3} parent=1 // pred_check_branch
      %62 = sbr.rel (0) target = $region41
    $region40: #{crnn_forward.3} parent=1 // pred_region
      %64 = vsyncadd [#allocation5], 0
      %s65 = sshll.u32 %s9, 4
      %s66 = int_to_ptr.hbm [resolvable:$true] %s65
      %s67 = sshll.u32 [#allocation6], 4
      %s68 = int_to_ptr.vmem [resolvable:$true] %s67
      %73 = dma.hbm_to_vmem [thread:$0]  %s66, 1152, %s68, [#allocation5], 384, 384, 24
    $region41: #{crnn_forward.3} parent=1 // pred_fallthru
      _
    // Predicated region
    $region42: #{crnn_forward.3} parent=1 // pred_check
      _
    $region43: #{crnn_forward.3} parent=1 // pred_check_branch
      %75 = sbr.rel (0) target = $region45
    $region44: #{crnn_forward.3} parent=1 // pred_region
      _
    $region45: #{crnn_forward.3} parent=1 // pred_fallthru
      _
    // Predicated region
    $region46: #{crnn_forward.3} parent=1 // pred_check
      _
    $region47: #{crnn_forward.3} parent=1 // pred_check_branch
      %77 = sbr.rel (0) target = $region49
    $region48: #{crnn_forward.3} parent=1 // pred_region
      %79 = dma.done [#allocation3], 1152
    $region49: #{crnn_forward.3} parent=1 // pred_fallthru
      _
    // Predicated region
    $region50: #{crnn_forward.3} parent=1 // pred_check
      _
    $region51: #{crnn_forward.3} parent=1 // pred_check_branch
      %81 = sbr.rel (0) target = $region53
    $region52: #{crnn_forward.3} parent=1 // pred_region
      %83 = dma.done [#allocation5], 1152
    $region53: #{crnn_forward.3} parent=1 // pred_fallthru
      _
    // Predicated region
    $region54: #{crnn_forward.3} parent=1 // pred_check
      _
    $region55: #{crnn_forward.3} parent=1 // pred_check_branch
      %85 = sbr.rel (0) target = $region57
    $region56: #{crnn_forward.3} parent=1 // pred_region
      %87 = dma.done [#allocation5], 1152
    $region57: #{crnn_forward.3} parent=1 // pred_fallthru
      _
    %v88 = vld [vmem:[%s2] sm:$0xff]
    %v89 = vld [vmem:[%s2 + $0x8] sm:$0xff]
    %v90 = vld [vmem:[%s2 + $0x10] sm:$0xff]
    %v91 = vld [vmem:[%s2 + $0x18] sm:$0xff]
    %v92 = vld [vmem:[%s2 + $0x20] sm:$0xff]
    %v93 = vld [vmem:[%s2 + $0x28] sm:$0xff]
    %v94 = vld [vmem:[%s2 + $0x30] sm:$0xff]
    %v95 = vld [vmem:[%s2 + $0x38] sm:$0xff]
    %v96 = vld [vmem:[%s2 + $0x40] sm:$0xff]
    %v97 = vld [vmem:[%s2 + $0x48] sm:$0xff]
    %v98 = vld [vmem:[%s2 + $0x50] sm:$0xff]
    %v99 = vld [vmem:[%s2 + $0x58] sm:$0xff]
    %v100 = vld [vmem:[%s4] sm:$0xff]
    %v101 = vld [vmem:[%s4 + $0x8] sm:$0xff]
    %v102 = vld [vmem:[%s4 + $0x10] sm:$0xff]
    %v103 = vld [vmem:[%s4 + $0x18] sm:$0xff]
    %v104 = vld [vmem:[%s4 + $0x20] sm:$0xff]
    %v105 = vld [vmem:[%s4 + $0x28] sm:$0xff]
    %v106 = vld [vmem:[%s4 + $0x30] sm:$0xff]
    %v107 = vld [vmem:[%s4 + $0x38] sm:$0xff]
    %v108 = vld [vmem:[%s4 + $0x40] sm:$0xff]
    %v109 = vld [vmem:[%s4 + $0x48] sm:$0xff]
    %v110 = vld [vmem:[%s4 + $0x50] sm:$0xff]
    %v111 = vld [vmem:[%s4 + $0x58] sm:$0xff]
    %v112 = vld [vmem:[%s1] sm:$0xff]
    %v113 = vld [vmem:[%s1 + $0x8] sm:$0xff]
    %v114 = vld [vmem:[%s1 + $0x10] sm:$0xff]
    %v115 = vld [vmem:[%s1 + $0x18] sm:$0xff]
    %v116 = vld [vmem:[%s1 + $0x20] sm:$0xff]
    %v117 = vld [vmem:[%s1 + $0x28] sm:$0xff]
    %v118 = vld [vmem:[%s1 + $0x30] sm:$0xff]
    %v119 = vld [vmem:[%s1 + $0x38] sm:$0xff]
    %v120 = vld [vmem:[%s1 + $0x40] sm:$0xff]
    %v121 = vld [vmem:[%s1 + $0x48] sm:$0xff]
    %v122 = vld [vmem:[%s1 + $0x50] sm:$0xff]
    %v123 = vld [vmem:[%s1 + $0x58] sm:$0xff]
    %125 = vset.pattern.permute.xlu0 0
    %126 = vperm.xlu0 %125, %v112
    %v127 = vpop.permute.xlu0 %126
    %130 = vset.pattern.permute.xlu0 0
    %131 = vperm.xlu0 %130, %v113
    %v132 = vpop.permute.xlu0 %131
    %135 = vset.pattern.permute.xlu0 0
    %136 = vperm.xlu0 %135, %v114
    %v137 = vpop.permute.xlu0 %136
    %140 = vset.pattern.permute.xlu0 0
    %141 = vperm.xlu0 %140, %v115
    %v142 = vpop.permute.xlu0 %141
    %145 = vset.pattern.permute.xlu0 0
    %146 = vperm.xlu0 %145, %v116
    %v147 = vpop.permute.xlu0 %146
    %150 = vset.pattern.permute.xlu0 0
    %151 = vperm.xlu0 %150, %v117
    %v152 = vpop.permute.xlu0 %151
    %155 = vset.pattern.permute.xlu0 0
    %156 = vperm.xlu0 %155, %v118
    %v157 = vpop.permute.xlu0 %156
    %160 = vset.pattern.permute.xlu0 0
    %161 = vperm.xlu0 %160, %v119
    %v162 = vpop.permute.xlu0 %161
    %165 = vset.pattern.permute.xlu0 0
    %166 = vperm.xlu0 %165, %v120
    %v167 = vpop.permute.xlu0 %166
    %170 = vset.pattern.permute.xlu0 0
    %171 = vperm.xlu0 %170, %v121
    %v172 = vpop.permute.xlu0 %171
    %175 = vset.pattern.permute.xlu0 0
    %176 = vperm.xlu0 %175, %v122
    %v177 = vpop.permute.xlu0 %176
    %180 = vset.pattern.permute.xlu0 0
    %181 = vperm.xlu0 %180, %v123
    %v182 = vpop.permute.xlu0 %181
    %v184 = vld [vmem:[%s3] sm:$0xff]
    %v185 = vld [vmem:[%s3 + $0x8] sm:$0xff]
    %v186 = vld [vmem:[%s3 + $0x10] sm:$0xff]
    %v187 = vld [vmem:[%s3 + $0x18] sm:$0xff]
    %v188 = vld [vmem:[%s3 + $0x20] sm:$0xff]
    %v189 = vld [vmem:[%s3 + $0x28] sm:$0xff]
    %v190 = vld [vmem:[%s3 + $0x30] sm:$0xff]
    %v191 = vld [vmem:[%s3 + $0x38] sm:$0xff]
    %v192 = vld [vmem:[%s3 + $0x40] sm:$0xff]
    %v193 = vld [vmem:[%s3 + $0x48] sm:$0xff]
    %v194 = vld [vmem:[%s3 + $0x50] sm:$0xff]
    %v195 = vld [vmem:[%s3 + $0x58] sm:$0xff]
    %197 = vset.pattern.permute.xlu0 0
    %198 = vperm.xlu0 %197, %v184
    %v199 = vpop.permute.xlu0 %198
    %202 = vset.pattern.permute.xlu0 0
    %203 = vperm.xlu0 %202, %v185
    %v204 = vpop.permute.xlu0 %203
    %207 = vset.pattern.permute.xlu0 0
    %208 = vperm.xlu0 %207, %v186
    %v209 = vpop.permute.xlu0 %208
    %212 = vset.pattern.permute.xlu0 0
    %213 = vperm.xlu0 %212, %v187
    %v214 = vpop.permute.xlu0 %213
    %217 = vset.pattern.permute.xlu0 0
    %218 = vperm.xlu0 %217, %v188
    %v219 = vpop.permute.xlu0 %218
    %222 = vset.pattern.permute.xlu0 0
    %223 = vperm.xlu0 %222, %v189
    %v224 = vpop.permute.xlu0 %223
    %227 = vset.pattern.permute.xlu0 0
    %228 = vperm.xlu0 %227, %v190
    %v229 = vpop.permute.xlu0 %228
    %232 = vset.pattern.permute.xlu0 0
    %233 = vperm.xlu0 %232, %v191
    %v234 = vpop.permute.xlu0 %233
    %237 = vset.pattern.permute.xlu0 0
    %238 = vperm.xlu0 %237, %v192
    %v239 = vpop.permute.xlu0 %238
    %242 = vset.pattern.permute.xlu0 0
    %243 = vperm.xlu0 %242, %v193
    %v244 = vpop.permute.xlu0 %243
    %247 = vset.pattern.permute.xlu0 0
    %248 = vperm.xlu0 %247, %v194
    %v249 = vpop.permute.xlu0 %248
    %252 = vset.pattern.permute.xlu0 0
    %253 = vperm.xlu0 %252, %v195
    %v254 = vpop.permute.xlu0 %253
    %v256 = vld [vmem:[%s5] sm:$0xff]
    %v257 = vld [vmem:[%s5 + $0x8] sm:$0xff]
    %v258 = vld [vmem:[%s5 + $0x10] sm:$0xff]
    %v259 = vld [vmem:[%s5 + $0x18] sm:$0xff]
    %v260 = vld [vmem:[%s5 + $0x20] sm:$0xff]
    %v261 = vld [vmem:[%s5 + $0x28] sm:$0xff]
    %v262 = vld [vmem:[%s5 + $0x30] sm:$0xff]
    %v263 = vld [vmem:[%s5 + $0x38] sm:$0xff]
    %v264 = vld [vmem:[%s5 + $0x40] sm:$0xff]
    %v265 = vld [vmem:[%s5 + $0x48] sm:$0xff]
    %v266 = vld [vmem:[%s5 + $0x50] sm:$0xff]
    %v267 = vld [vmem:[%s5 + $0x58] sm:$0xff]
    %269 = vset.pattern.permute.xlu0 0
    %270 = vperm.xlu0 %269, %v256
    %v271 = vpop.permute.xlu0 %270
    %274 = vset.pattern.permute.xlu0 0
    %275 = vperm.xlu0 %274, %v257
    %v276 = vpop.permute.xlu0 %275
    %279 = vset.pattern.permute.xlu0 0
    %280 = vperm.xlu0 %279, %v258
    %v281 = vpop.permute.xlu0 %280
    %284 = vset.pattern.permute.xlu0 0
    %285 = vperm.xlu0 %284, %v259
    %v286 = vpop.permute.xlu0 %285
    %289 = vset.pattern.permute.xlu0 0
    %290 = vperm.xlu0 %289, %v260
    %v291 = vpop.permute.xlu0 %290
    %294 = vset.pattern.permute.xlu0 0
    %295 = vperm.xlu0 %294, %v261
    %v296 = vpop.permute.xlu0 %295
    %299 = vset.pattern.permute.xlu0 0
    %300 = vperm.xlu0 %299, %v262
    %v301 = vpop.permute.xlu0 %300
    %304 = vset.pattern.permute.xlu0 0
    %305 = vperm.xlu0 %304, %v263
    %v306 = vpop.permute.xlu0 %305
    %309 = vset.pattern.permute.xlu0 0
    %310 = vperm.xlu0 %309, %v264
    %v311 = vpop.permute.xlu0 %310
    %314 = vset.pattern.permute.xlu0 0
    %315 = vperm.xlu0 %314, %v265
    %v316 = vpop.permute.xlu0 %315
    %319 = vset.pattern.permute.xlu0 0
    %320 = vperm.xlu0 %319, %v266
    %v321 = vpop.permute.xlu0 %320
    %324 = vset.pattern.permute.xlu0 0
    %325 = vperm.xlu0 %324, %v267
    %v326 = vpop.permute.xlu0 %325
    %v328 = vld [vmem:[%s0] ss:$2 sm:$0x7]
    %v330 = vperm.slane %v328, 0
    %v331 = vperm.slane %v328, 1
    %v332 = vperm.slane %v328, 2
    %v336 = vmul.f32 %v127, %v330
    %v337 = vmul.f32 %v127, %v331
    %v338 = vmul.f32 %v127, %v332
    %v339 = vmul.f32 %v132, %v330
    %v340 = vmul.f32 %v132, %v331
    %v341 = vmul.f32 %v132, %v332
    %v342 = vmul.f32 %v137, %v330
    %v343 = vmul.f32 %v137, %v331
    %v344 = vmul.f32 %v137, %v332
    %v345 = vmul.f32 %v142, %v330
    %v346 = vmul.f32 %v142, %v331
    %v347 = vmul.f32 %v142, %v332
    %v348 = vmul.f32 %v147, %v330
    %v349 = vmul.f32 %v147, %v331
    %v350 = vmul.f32 %v147, %v332
    %v351 = vmul.f32 %v152, %v330
    %v352 = vmul.f32 %v152, %v331
    %v353 = vmul.f32 %v152, %v332
    %v354 = vmul.f32 %v157, %v330
    %v355 = vmul.f32 %v157, %v331
    %v356 = vmul.f32 %v157, %v332
    %v357 = vmul.f32 %v162, %v330
    %v358 = vmul.f32 %v162, %v331
    %v359 = vmul.f32 %v162, %v332
    %v360 = vmul.f32 %v167, %v330
    %v361 = vmul.f32 %v167, %v331
    %v362 = vmul.f32 %v167, %v332
    %v363 = vmul.f32 %v172, %v330
    %v364 = vmul.f32 %v172, %v331
    %v365 = vmul.f32 %v172, %v332
    %v366 = vmul.f32 %v177, %v330
    %v367 = vmul.f32 %v177, %v331
    %v368 = vmul.f32 %v177, %v332
    %v369 = vmul.f32 %v182, %v330
    %v370 = vmul.f32 %v182, %v331
    %v371 = vmul.f32 %v182, %v332
    %vm372 = vcmask 195584
    %v374 = vsel %vm372, %v88, 0
    %v377 = vsel %vm372, %v89, 0
    %v380 = vsel %vm372, %v90, 0
    %v383 = vsel %vm372, %v91, 0
    %v386 = vsel %vm372, %v92, 0
    %v389 = vsel %vm372, %v93, 0
    %v392 = vsel %vm372, %v94, 0
    %v395 = vsel %vm372, %v95, 0
    %v398 = vsel %vm372, %v96, 0
    %v401 = vsel %vm372, %v97, 0
    %v404 = vsel %vm372, %v98, 0
    %v407 = vsel %vm372, %v99, 0
    %409 = vmatpush.msra.mxu0 0.0
    %410 = vmatpush.msra.mxu0 0.0
    %411 = vmatpush.msra.mxu0 0.0
    %412 = vmatpush.msra.mxu0 0.0
    %413 = vmatpush.msra.mxu0 0.0
    %414 = vmatpush.msra.mxu0 0.0
    %415 = vmatpush.msra.mxu0 0.0
    %416 = vmatpush.msra.mxu0 0.0
    %417 = vmatpush.msra.mxu0 0.0
    %418 = vmatpush.msra.mxu0 0.0
    %419 = vmatpush.msra.mxu0 0.0
    %420 = vmatpush.msra.mxu0 0.0
    %421 = vmatpush.msra.mxu0 0.0
    %422 = vmatpush.msra.mxu0 0.0
    %423 = vmatpush.msra.mxu0 0.0
    %424 = vmatpush.msra.mxu0 0.0
    %425 = vmatmul.f32.gmra.mxu0 %v374
    %v426 = vpop.f32.mrf.mxu0
    %v427 = vadd.f32 0.0, %v426
    %428 = vmatmul.f32.gmra.mxu0 %v377
    %v429 = vpop.f32.mrf.mxu0
    %v430 = vadd.f32 0.0, %v429
    %431 = vmatmul.f32.gmra.mxu0 %v380
    %v432 = vpop.f32.mrf.mxu0
    %v433 = vadd.f32 0.0, %v432
    %434 = vmatmul.f32.gmra.mxu0 %v383
    %v435 = vpop.f32.mrf.mxu0
    %v436 = vadd.f32 0.0, %v435
    %437 = vmatmul.f32.gmra.mxu0 %v386
    %v438 = vpop.f32.mrf.mxu0
    %v439 = vadd.f32 0.0, %v438
    %440 = vmatmul.f32.gmra.mxu0 %v389
    %v441 = vpop.f32.mrf.mxu0
    %v442 = vadd.f32 0.0, %v441
    %443 = vmatmul.f32.gmra.mxu0 %v392
    %v444 = vpop.f32.mrf.mxu0
    %v445 = vadd.f32 0.0, %v444
    %446 = vmatmul.f32.gmra.mxu0 %v395
    %v447 = vpop.f32.mrf.mxu0
    %v448 = vadd.f32 0.0, %v447
    %449 = vmatmul.f32.gmra.mxu0 %v398
    %v450 = vpop.f32.mrf.mxu0
    %v451 = vadd.f32 0.0, %v450
    %452 = vmatmul.f32.gmra.mxu0 %v401
    %v453 = vpop.f32.mrf.mxu0
    %v454 = vadd.f32 0.0, %v453
    %455 = vmatmul.f32.gmra.mxu0 %v404
    %v456 = vpop.f32.mrf.mxu0
    %v457 = vadd.f32 0.0, %v456
    %458 = vmatmul.f32.gmra.mxu0 %v407
    %v459 = vpop.f32.mrf.mxu0
    %v460 = vadd.f32 0.0, %v459
    %461 = vdwg.mxu0
    %v462 = vadd.f32 %v336, %v427
    %v463 = vadd.f32 %v337, %v427
    %v464 = vadd.f32 %v338, %v427
    %v465 = vadd.f32 %v339, %v430
    %v466 = vadd.f32 %v340, %v430
    %v467 = vadd.f32 %v341, %v430
    %v468 = vadd.f32 %v342, %v433
    %v469 = vadd.f32 %v343, %v433
    %v470 = vadd.f32 %v344, %v433
    %v471 = vadd.f32 %v345, %v436
    %v472 = vadd.f32 %v346, %v436
    %v473 = vadd.f32 %v347, %v436
    %v474 = vadd.f32 %v348, %v439
    %v475 = vadd.f32 %v349, %v439
    %v476 = vadd.f32 %v350, %v439
    %v477 = vadd.f32 %v351, %v442
    %v478 = vadd.f32 %v352, %v442
    %v479 = vadd.f32 %v353, %v442
    %v480 = vadd.f32 %v354, %v445
    %v481 = vadd.f32 %v355, %v445
    %v482 = vadd.f32 %v356, %v445
    %v483 = vadd.f32 %v357, %v448
    %v484 = vadd.f32 %v358, %v448
    %v485 = vadd.f32 %v359, %v448
    %v486 = vadd.f32 %v360, %v451
    %v487 = vadd.f32 %v361, %v451
    %v488 = vadd.f32 %v362, %v451
    %v489 = vadd.f32 %v363, %v454
    %v490 = vadd.f32 %v364, %v454
    %v491 = vadd.f32 %v365, %v454
    %v492 = vadd.f32 %v366, %v457
    %v493 = vadd.f32 %v367, %v457
    %v494 = vadd.f32 %v368, %v457
    %v495 = vadd.f32 %v369, %v460
    %v496 = vadd.f32 %v370, %v460
    %v497 = vadd.f32 %v371, %v460
    %v498 = vadd.f32 %v462, %v199
    %v499 = vadd.f32 %v463, %v199
    %v500 = vadd.f32 %v464, %v199
    %v501 = vadd.f32 %v465, %v204
    %v502 = vadd.f32 %v466, %v204
    %v503 = vadd.f32 %v467, %v204
    %v504 = vadd.f32 %v468, %v209
    %v505 = vadd.f32 %v469, %v209
    %v506 = vadd.f32 %v470, %v209
    %v507 = vadd.f32 %v471, %v214
    %v508 = vadd.f32 %v472, %v214
    %v509 = vadd.f32 %v473, %v214
    %v510 = vadd.f32 %v474, %v219
    %v511 = vadd.f32 %v475, %v219
    %v512 = vadd.f32 %v476, %v219
    %v513 = vadd.f32 %v477, %v224
    %v514 = vadd.f32 %v478, %v224
    %v515 = vadd.f32 %v479, %v224
    %v516 = vadd.f32 %v480, %v229
    %v517 = vadd.f32 %v481, %v229
    %v518 = vadd.f32 %v482, %v229
    %v519 = vadd.f32 %v483, %v234
    %v520 = vadd.f32 %v484, %v234
    %v521 = vadd.f32 %v485, %v234
    %v522 = vadd.f32 %v486, %v239
    %v523 = vadd.f32 %v487, %v239
    %v524 = vadd.f32 %v488, %v239
    %v525 = vadd.f32 %v489, %v244
    %v526 = vadd.f32 %v490, %v244
    %v527 = vadd.f32 %v491, %v244
    %v528 = vadd.f32 %v492, %v249
    %v529 = vadd.f32 %v493, %v249
    %v530 = vadd.f32 %v494, %v249
    %v531 = vadd.f32 %v495, %v254
    %v532 = vadd.f32 %v496, %v254
    %v533 = vadd.f32 %v497, %v254
    %v534 = vmul.f32 %v498, 0.5
    %v535 = vmul.f32 %v499, 0.5
    %v536 = vmul.f32 %v500, 0.5
    %v537 = vmul.f32 %v501, 0.5
    %v538 = vmul.f32 %v502, 0.5
    %v539 = vmul.f32 %v503, 0.5
    %v540 = vmul.f32 %v504, 0.5
    %v541 = vmul.f32 %v505, 0.5
    %v542 = vmul.f32 %v506, 0.5
    %v543 = vtanh.pop %v534
    %v544 = vtanh.pop %v535
    %v545 = vtanh.pop %v536
    %v546 = vtanh.pop %v537
    %v547 = vtanh.pop %v538
    %v548 = vtanh.pop %v539
    %v549 = vtanh.pop %v540
    %v550 = vtanh.pop %v541
    %v551 = vtanh.pop %v542
    %v552 = vmul.f32 %v543, 0.5
    %v553 = vmul.f32 %v544, 0.5
    %v554 = vmul.f32 %v545, 0.5
    %v555 = vmul.f32 %v546, 0.5
    %v556 = vmul.f32 %v547, 0.5
    %v557 = vmul.f32 %v548, 0.5
    %v558 = vmul.f32 %v549, 0.5
    %v559 = vmul.f32 %v550, 0.5
    %v560 = vmul.f32 %v551, 0.5
    %v561 = vadd.f32 %v552, 0.5
    %v562 = vadd.f32 %v553, 0.5
    %v563 = vadd.f32 %v554, 0.5
    %v564 = vadd.f32 %v555, 0.5
    %v565 = vadd.f32 %v556, 0.5
    %v566 = vadd.f32 %v557, 0.5
    %v567 = vadd.f32 %v558, 0.5
    %v568 = vadd.f32 %v559, 0.5
    %v569 = vadd.f32 %v560, 0.5
    %v570 = vmul.f32 %v507, 0.5
    %v571 = vmul.f32 %v508, 0.5
    %v572 = vmul.f32 %v509, 0.5
    %v573 = vmul.f32 %v510, 0.5
    %v574 = vmul.f32 %v511, 0.5
    %v575 = vmul.f32 %v512, 0.5
    %v576 = vmul.f32 %v513, 0.5
    %v577 = vmul.f32 %v514, 0.5
    %v578 = vmul.f32 %v515, 0.5
    %v579 = vtanh.pop %v570
    %v580 = vtanh.pop %v571
    %v581 = vtanh.pop %v572
    %v582 = vtanh.pop %v573
    %v583 = vtanh.pop %v574
    %v584 = vtanh.pop %v575
    %v585 = vtanh.pop %v576
    %v586 = vtanh.pop %v577
    %v587 = vtanh.pop %v578
    %v588 = vmul.f32 %v579, 0.5
    %v589 = vmul.f32 %v580, 0.5
    %v590 = vmul.f32 %v581, 0.5
    %v591 = vmul.f32 %v582, 0.5
    %v592 = vmul.f32 %v583, 0.5
    %v593 = vmul.f32 %v584, 0.5
    %v594 = vmul.f32 %v585, 0.5
    %v595 = vmul.f32 %v586, 0.5
    %v596 = vmul.f32 %v587, 0.5
    %v597 = vadd.f32 %v588, 0.5
    %v598 = vadd.f32 %v589, 0.5
    %v599 = vadd.f32 %v590, 0.5
    %v600 = vadd.f32 %v591, 0.5
    %v601 = vadd.f32 %v592, 0.5
    %v602 = vadd.f32 %v593, 0.5
    %v603 = vadd.f32 %v594, 0.5
    %v604 = vadd.f32 %v595, 0.5
    %v605 = vadd.f32 %v596, 0.5
    %v606 = vtanh.pop %v516
    %v607 = vtanh.pop %v517
    %v608 = vtanh.pop %v518
    %v609 = vtanh.pop %v519
    %v610 = vtanh.pop %v520
    %v611 = vtanh.pop %v521
    %v612 = vtanh.pop %v522
    %v613 = vtanh.pop %v523
    %v614 = vtanh.pop %v524
    %v615 = vmul.f32 %v525, 0.5
    %v616 = vmul.f32 %v526, 0.5
    %v617 = vmul.f32 %v527, 0.5
    %v618 = vmul.f32 %v528, 0.5
    %v619 = vmul.f32 %v529, 0.5
    %v620 = vmul.f32 %v530, 0.5
    %v621 = vmul.f32 %v531, 0.5
    %v622 = vmul.f32 %v532, 0.5
    %v623 = vmul.f32 %v533, 0.5
    %v624 = vtanh.pop %v615
    %v625 = vtanh.pop %v616
    %v626 = vtanh.pop %v617
    %v627 = vtanh.pop %v618
    %v628 = vtanh.pop %v619
    %v629 = vtanh.pop %v620
    %v630 = vtanh.pop %v621
    %v631 = vtanh.pop %v622
    %v632 = vtanh.pop %v623
    %v633 = vmul.f32 %v624, 0.5
    %v634 = vmul.f32 %v625, 0.5
    %v635 = vmul.f32 %v626, 0.5
    %v636 = vmul.f32 %v627, 0.5
    %v637 = vmul.f32 %v628, 0.5
    %v638 = vmul.f32 %v629, 0.5
    %v639 = vmul.f32 %v630, 0.5
    %v640 = vmul.f32 %v631, 0.5
    %v641 = vmul.f32 %v632, 0.5
    %v642 = vadd.f32 %v633, 0.5
    %v643 = vadd.f32 %v634, 0.5
    %v644 = vadd.f32 %v635, 0.5
    %v645 = vadd.f32 %v636, 0.5
    %v646 = vadd.f32 %v637, 0.5
    %v647 = vadd.f32 %v638, 0.5
    %v648 = vadd.f32 %v639, 0.5
    %v649 = vadd.f32 %v640, 0.5
    %v650 = vadd.f32 %v641, 0.5
    %v651 = vmul.f32 %v597, 0.0
    %v652 = vmul.f32 %v598, 0.0
    %v653 = vmul.f32 %v599, 0.0
    %v654 = vmul.f32 %v600, 0.0
    %v655 = vmul.f32 %v601, 0.0
    %v656 = vmul.f32 %v602, 0.0
    %v657 = vmul.f32 %v603, 0.0
    %v658 = vmul.f32 %v604, 0.0
    %v659 = vmul.f32 %v605, 0.0
    %v660 = vmul.f32 %v561, %v606
    %v661 = vmul.f32 %v562, %v607
    %v662 = vmul.f32 %v563, %v608
    %v663 = vmul.f32 %v564, %v609
    %v664 = vmul.f32 %v565, %v610
    %v665 = vmul.f32 %v566, %v611
    %v666 = vmul.f32 %v567, %v612
    %v667 = vmul.f32 %v568, %v613
    %v668 = vmul.f32 %v569, %v614
    %v669 = vadd.f32 %v651, %v660
    %v670 = vadd.f32 %v652, %v661
    %v671 = vadd.f32 %v653, %v662
    %v672 = vadd.f32 %v654, %v663
    %v673 = vadd.f32 %v655, %v664
    %v674 = vadd.f32 %v656, %v665
    %v675 = vadd.f32 %v657, %v666
    %v676 = vadd.f32 %v658, %v667
    %v677 = vadd.f32 %v659, %v668
    %v678 = vtanh.pop %v669
    %v679 = vtanh.pop %v670
    %v680 = vtanh.pop %v671
    %v681 = vtanh.pop %v672
    %v682 = vtanh.pop %v673
    %v683 = vtanh.pop %v674
    %v684 = vtanh.pop %v675
    %v685 = vtanh.pop %v676
    %v686 = vtanh.pop %v677
    %v687 = vmul.f32 %v642, %v678
    %v688 = vmul.f32 %v643, %v679
    %v689 = vmul.f32 %v644, %v680
    %v690 = vmul.f32 %v645, %v681
    %v691 = vmul.f32 %v646, %v682
    %v692 = vmul.f32 %v647, %v683
    %v693 = vmul.f32 %v648, %v684
    %v694 = vmul.f32 %v649, %v685
    %v695 = vmul.f32 %v650, %v686
    %vm696 = vcmask 392192
    %v698 = vsel %vm696, %v100, 0
    %v701 = vsel %vm696, %v101, 0
    %v704 = vsel %vm696, %v102, 0
    %v707 = vsel %vm696, %v103, 0
    %v710 = vsel %vm696, %v104, 0
    %v713 = vsel %vm696, %v105, 0
    %v716 = vsel %vm696, %v106, 0
    %v719 = vsel %vm696, %v107, 0
    %v722 = vsel %vm696, %v108, 0
    %v725 = vsel %vm696, %v109, 0
    %v728 = vsel %vm696, %v110, 0
    %v731 = vsel %vm696, %v111, 0
    %733 = vmatpush.msra.mxu0 0.0
    %734 = vmatpush.msra.mxu0 0.0
    %735 = vmatpush.msra.mxu0 0.0
    %736 = vmatpush.msra.mxu0 0.0
    %737 = vmatpush.msra.mxu0 0.0
    %738 = vmatpush.msra.mxu0 0.0
    %739 = vmatpush.msra.mxu0 0.0
    %740 = vmatpush.msra.mxu0 0.0
    %741 = vmatpush.msra.mxu0 0.0
    %742 = vmatpush.msra.mxu0 0.0
    %743 = vmatpush.msra.mxu0 0.0
    %744 = vmatpush.msra.mxu0 0.0
    %745 = vmatpush.msra.mxu0 0.0
    %746 = vmatpush.msra.mxu0 %v693
    %747 = vmatpush.msra.mxu0 %v690
    %748 = vmatpush.msra.mxu0 %v687
    %749 = vmatmul.f32.gmra.mxu0 %v698
    %v750 = vpop.f32.mrf.mxu0
    %v751 = vadd.f32 %v271, %v750
    %752 = vmatmul.f32.gmra.mxu0 %v701
    %v753 = vpop.f32.mrf.mxu0
    %v754 = vadd.f32 %v276, %v753
    %755 = vmatmul.f32.gmra.mxu0 %v704
    %v756 = vpop.f32.mrf.mxu0
    %v757 = vadd.f32 %v281, %v756
    %758 = vmatmul.f32.gmra.mxu0 %v707
    %v759 = vpop.f32.mrf.mxu0
    %v760 = vadd.f32 %v286, %v759
    %761 = vmatmul.f32.gmra.mxu0 %v710
    %v762 = vpop.f32.mrf.mxu0
    %v763 = vadd.f32 %v291, %v762
    %764 = vmatmul.f32.gmra.mxu0 %v713
    %v765 = vpop.f32.mrf.mxu0
    %v766 = vadd.f32 %v296, %v765
    %767 = vmatmul.f32.gmra.mxu0 %v716
    %v768 = vpop.f32.mrf.mxu0
    %v769 = vadd.f32 %v301, %v768
    %770 = vmatmul.f32.gmra.mxu0 %v719
    %v771 = vpop.f32.mrf.mxu0
    %v772 = vadd.f32 %v306, %v771
    %773 = vmatmul.f32.gmra.mxu0 %v722
    %v774 = vpop.f32.mrf.mxu0
    %v775 = vadd.f32 %v311, %v774
    %776 = vmatmul.f32.gmra.mxu0 %v725
    %v777 = vpop.f32.mrf.mxu0
    %v778 = vadd.f32 %v316, %v777
    %779 = vmatmul.f32.gmra.mxu0 %v728
    %v780 = vpop.f32.mrf.mxu0
    %v781 = vadd.f32 %v321, %v780
    %782 = vmatmul.f32.gmra.mxu0 %v731
    %v783 = vpop.f32.mrf.mxu0
    %v784 = vadd.f32 %v326, %v783
    %785 = vdwg.mxu0
    %786 = vmatpush.msra.mxu0 0.0
    %787 = vmatpush.msra.mxu0 0.0
    %788 = vmatpush.msra.mxu0 0.0
    %789 = vmatpush.msra.mxu0 0.0
    %790 = vmatpush.msra.mxu0 0.0
    %791 = vmatpush.msra.mxu0 0.0
    %792 = vmatpush.msra.mxu0 0.0
    %793 = vmatpush.msra.mxu0 0.0
    %794 = vmatpush.msra.mxu0 0.0
    %795 = vmatpush.msra.mxu0 0.0
    %796 = vmatpush.msra.mxu0 0.0
    %797 = vmatpush.msra.mxu0 0.0
    %798 = vmatpush.msra.mxu0 0.0
    %799 = vmatpush.msra.mxu0 %v694
    %800 = vmatpush.msra.mxu0 %v691
    %801 = vmatpush.msra.mxu0 %v688
    %802 = vmatmul.f32.gmra.mxu0 %v698
    %v803 = vpop.f32.mrf.mxu0
    %v804 = vadd.f32 %v271, %v803
    %805 = vmatmul.f32.gmra.mxu0 %v701
    %v806 = vpop.f32.mrf.mxu0
    %v807 = vadd.f32 %v276, %v806
    %808 = vmatmul.f32.gmra.mxu0 %v704
    %v809 = vpop.f32.mrf.mxu0
    %v810 = vadd.f32 %v281, %v809
    %811 = vmatmul.f32.gmra.mxu0 %v707
    %v812 = vpop.f32.mrf.mxu0
    %v813 = vadd.f32 %v286, %v812
    %814 = vmatmul.f32.gmra.mxu0 %v710
    %v815 = vpop.f32.mrf.mxu0
    %v816 = vadd.f32 %v291, %v815
    %817 = vmatmul.f32.gmra.mxu0 %v713
    %v818 = vpop.f32.mrf.mxu0
    %v819 = vadd.f32 %v296, %v818
    %820 = vmatmul.f32.gmra.mxu0 %v716
    %v821 = vpop.f32.mrf.mxu0
    %v822 = vadd.f32 %v301, %v821
    %823 = vmatmul.f32.gmra.mxu0 %v719
    %v824 = vpop.f32.mrf.mxu0
    %v825 = vadd.f32 %v306, %v824
    %826 = vmatmul.f32.gmra.mxu0 %v722
    %v827 = vpop.f32.mrf.mxu0
    %v828 = vadd.f32 %v311, %v827
    %829 = vmatmul.f32.gmra.mxu0 %v725
    %v830 = vpop.f32.mrf.mxu0
    %v831 = vadd.f32 %v316, %v830
    %832 = vmatmul.f32.gmra.mxu0 %v728
    %v833 = vpop.f32.mrf.mxu0
    %v834 = vadd.f32 %v321, %v833
    %835 = vmatmul.f32.gmra.mxu0 %v731
    %v836 = vpop.f32.mrf.mxu0
    %v837 = vadd.f32 %v326, %v836
    %838 = vdwg.mxu0
    %839 = vmatpush.msra.mxu0 0.0
    %840 = vmatpush.msra.mxu0 0.0
    %841 = vmatpush.msra.mxu0 0.0
    %842 = vmatpush.msra.mxu0 0.0
    %843 = vmatpush.msra.mxu0 0.0
    %844 = vmatpush.msra.mxu0 0.0
    %845 = vmatpush.msra.mxu0 0.0
    %846 = vmatpush.msra.mxu0 0.0
    %847 = vmatpush.msra.mxu0 0.0
    %848 = vmatpush.msra.mxu0 0.0
    %849 = vmatpush.msra.mxu0 0.0
    %850 = vmatpush.msra.mxu0 0.0
    %851 = vmatpush.msra.mxu0 0.0
    %852 = vmatpush.msra.mxu0 %v695
    %853 = vmatpush.msra.mxu0 %v692
    %854 = vmatpush.msra.mxu0 %v689
    %855 = vmatmul.f32.gmra.mxu0 %v698
    %v856 = vpop.f32.mrf.mxu0
    %v857 = vadd.f32 %v271, %v856
    %858 = vmatmul.f32.gmra.mxu0 %v701
    %v859 = vpop.f32.mrf.mxu0
    %v860 = vadd.f32 %v276, %v859
    %861 = vmatmul.f32.gmra.mxu0 %v704
    %v862 = vpop.f32.mrf.mxu0
    %v863 = vadd.f32 %v281, %v862
    %864 = vmatmul.f32.gmra.mxu0 %v707
    %v865 = vpop.f32.mrf.mxu0
    %v866 = vadd.f32 %v286, %v865
    %867 = vmatmul.f32.gmra.mxu0 %v710
    %v868 = vpop.f32.mrf.mxu0
    %v869 = vadd.f32 %v291, %v868
    %870 = vmatmul.f32.gmra.mxu0 %v713
    %v871 = vpop.f32.mrf.mxu0
    %v872 = vadd.f32 %v296, %v871
    %873 = vmatmul.f32.gmra.mxu0 %v716
    %v874 = vpop.f32.mrf.mxu0
    %v875 = vadd.f32 %v301, %v874
    %876 = vmatmul.f32.gmra.mxu0 %v719
    %v877 = vpop.f32.mrf.mxu0
    %v878 = vadd.f32 %v306, %v877
    %879 = vmatmul.f32.gmra.mxu0 %v722
    %v880 = vpop.f32.mrf.mxu0
    %v881 = vadd.f32 %v311, %v880
    %882 = vmatmul.f32.gmra.mxu0 %v725
    %v883 = vpop.f32.mrf.mxu0
    %v884 = vadd.f32 %v316, %v883
    %885 = vmatmul.f32.gmra.mxu0 %v728
    %v886 = vpop.f32.mrf.mxu0
    %v887 = vadd.f32 %v321, %v886
    %888 = vmatmul.f32.gmra.mxu0 %v731
    %v889 = vpop.f32.mrf.mxu0
    %v890 = vadd.f32 %v326, %v889
    %891 = vdwg.mxu0
    %v892 = vmul.f32 %v751, 0.5
    %v893 = vmul.f32 %v804, 0.5
    %v894 = vmul.f32 %v857, 0.5
    %v895 = vmul.f32 %v754, 0.5
    %v896 = vmul.f32 %v807, 0.5
    %v897 = vmul.f32 %v860, 0.5
    %v898 = vmul.f32 %v757, 0.5
    %v899 = vmul.f32 %v810, 0.5
    %v900 = vmul.f32 %v863, 0.5
    %v901 = vtanh.pop %v892
    %v902 = vtanh.pop %v893
    %v903 = vtanh.pop %v894
    %v904 = vtanh.pop %v895
    %v905 = vtanh.pop %v896
    %v906 = vtanh.pop %v897
    %v907 = vtanh.pop %v898
    %v908 = vtanh.pop %v899
    %v909 = vtanh.pop %v900
    %v910 = vmul.f32 %v901, 0.5
    %v911 = vmul.f32 %v902, 0.5
    %v912 = vmul.f32 %v903, 0.5
    %v913 = vmul.f32 %v904, 0.5
    %v914 = vmul.f32 %v905, 0.5
    %v915 = vmul.f32 %v906, 0.5
    %v916 = vmul.f32 %v907, 0.5
    %v917 = vmul.f32 %v908, 0.5
    %v918 = vmul.f32 %v909, 0.5
    %v919 = vadd.f32 %v910, 0.5
    %v920 = vadd.f32 %v911, 0.5
    %v921 = vadd.f32 %v912, 0.5
    %v922 = vadd.f32 %v913, 0.5
    %v923 = vadd.f32 %v914, 0.5
    %v924 = vadd.f32 %v915, 0.5
    %v925 = vadd.f32 %v916, 0.5
    %v926 = vadd.f32 %v917, 0.5
    %v927 = vadd.f32 %v918, 0.5
    %v928 = vmul.f32 %v760, 0.5
    %v929 = vmul.f32 %v813, 0.5
    %v930 = vmul.f32 %v866, 0.5
    %v931 = vmul.f32 %v763, 0.5
    %v932 = vmul.f32 %v816, 0.5
    %v933 = vmul.f32 %v869, 0.5
    %v934 = vmul.f32 %v766, 0.5
    %v935 = vmul.f32 %v819, 0.5
    %v936 = vmul.f32 %v872, 0.5
    %v937 = vtanh.pop %v928
    %v938 = vtanh.pop %v929
    %v939 = vtanh.pop %v930
    %v940 = vtanh.pop %v931
    %v941 = vtanh.pop %v932
    %v942 = vtanh.pop %v933
    %v943 = vtanh.pop %v934
    %v944 = vtanh.pop %v935
    %v945 = vtanh.pop %v936
    %v946 = vmul.f32 %v937, 0.5
    %v947 = vmul.f32 %v938, 0.5
    %v948 = vmul.f32 %v939, 0.5
    %v949 = vmul.f32 %v940, 0.5
    %v950 = vmul.f32 %v941, 0.5
    %v951 = vmul.f32 %v942, 0.5
    %v952 = vmul.f32 %v943, 0.5
    %v953 = vmul.f32 %v944, 0.5
    %v954 = vmul.f32 %v945, 0.5
    %v955 = vadd.f32 %v946, 0.5
    %v956 = vadd.f32 %v947, 0.5
    %v957 = vadd.f32 %v948, 0.5
    %v958 = vadd.f32 %v949, 0.5
    %v959 = vadd.f32 %v950, 0.5
    %v960 = vadd.f32 %v951, 0.5
    %v961 = vadd.f32 %v952, 0.5
    %v962 = vadd.f32 %v953, 0.5
    %v963 = vadd.f32 %v954, 0.5
    %v964 = vtanh.pop %v769
    %v965 = vtanh.pop %v822
    %v966 = vtanh.pop %v875
    %v967 = vtanh.pop %v772
    %v968 = vtanh.pop %v825
    %v969 = vtanh.pop %v878
    %v970 = vtanh.pop %v775
    %v971 = vtanh.pop %v828
    %v972 = vtanh.pop %v881
    %v973 = vmul.f32 %v778, 0.5
    %v974 = vmul.f32 %v831, 0.5
    %v975 = vmul.f32 %v884, 0.5
    %v976 = vmul.f32 %v781, 0.5
    %v977 = vmul.f32 %v834, 0.5
    %v978 = vmul.f32 %v887, 0.5
    %v979 = vmul.f32 %v784, 0.5
    %v980 = vmul.f32 %v837, 0.5
    %v981 = vmul.f32 %v890, 0.5
    %v982 = vtanh.pop %v973
    %v983 = vtanh.pop %v974
    %v984 = vtanh.pop %v975
    %v985 = vtanh.pop %v976
    %v986 = vtanh.pop %v977
    %v987 = vtanh.pop %v978
    %v988 = vtanh.pop %v979
    %v989 = vtanh.pop %v980
    %v990 = vtanh.pop %v981
    %v991 = vmul.f32 %v982, 0.5
    %v992 = vmul.f32 %v983, 0.5
    %v993 = vmul.f32 %v984, 0.5
    %v994 = vmul.f32 %v985, 0.5
    %v995 = vmul.f32 %v986, 0.5
    %v996 = vmul.f32 %v987, 0.5
    %v997 = vmul.f32 %v988, 0.5
    %v998 = vmul.f32 %v989, 0.5
    %v999 = vmul.f32 %v990, 0.5
    %v1000 = vadd.f32 %v991, 0.5
    %v1001 = vadd.f32 %v992, 0.5
    %v1002 = vadd.f32 %v993, 0.5
    %v1003 = vadd.f32 %v994, 0.5
    %v1004 = vadd.f32 %v995, 0.5
    %v1005 = vadd.f32 %v996, 0.5
    %v1006 = vadd.f32 %v997, 0.5
    %v1007 = vadd.f32 %v998, 0.5
    %v1008 = vadd.f32 %v999, 0.5
    %v1009 = vmul.f32 %v955, 0.0
    %v1010 = vmul.f32 %v956, 0.0
    %v1011 = vmul.f32 %v957, 0.0
    %v1012 = vmul.f32 %v958, 0.0
    %v1013 = vmul.f32 %v959, 0.0
    %v1014 = vmul.f32 %v960, 0.0
    %v1015 = vmul.f32 %v961, 0.0
    %v1016 = vmul.f32 %v962, 0.0
    %v1017 = vmul.f32 %v963, 0.0
    %v1018 = vmul.f32 %v919, %v964
    %v1019 = vmul.f32 %v920, %v965
    %v1020 = vmul.f32 %v921, %v966
    %v1021 = vmul.f32 %v922, %v967
    %v1022 = vmul.f32 %v923, %v968
    %v1023 = vmul.f32 %v924, %v969
    %v1024 = vmul.f32 %v925, %v970
    %v1025 = vmul.f32 %v926, %v971
    %v1026 = vmul.f32 %v927, %v972
    %v1027 = vadd.f32 %v1009, %v1018
    %v1028 = vadd.f32 %v1010, %v1019
    %v1029 = vadd.f32 %v1011, %v1020
    %v1030 = vadd.f32 %v1012, %v1021
    %v1031 = vadd.f32 %v1013, %v1022
    %v1032 = vadd.f32 %v1014, %v1023
    %v1033 = vadd.f32 %v1015, %v1024
    %v1034 = vadd.f32 %v1016, %v1025
    %v1035 = vadd.f32 %v1017, %v1026
    %v1036 = vtanh.pop %v1027
    %v1037 = vtanh.pop %v1028
    %v1038 = vtanh.pop %v1029
    %v1039 = vtanh.pop %v1030
    %v1040 = vtanh.pop %v1031
    %v1041 = vtanh.pop %v1032
    %v1042 = vtanh.pop %v1033
    %v1043 = vtanh.pop %v1034
    %v1044 = vtanh.pop %v1035
    %v1045 = vmul.f32 %v1000, %v1036
    %v1046 = vmul.f32 %v1001, %v1037
    %v1047 = vmul.f32 %v1002, %v1038
    %v1048 = vmul.f32 %v1003, %v1039
    %v1049 = vmul.f32 %v1004, %v1040
    %v1050 = vmul.f32 %v1005, %v1041
    %v1051 = vmul.f32 %v1006, %v1042
    %v1052 = vmul.f32 %v1007, %v1043
    %v1053 = vmul.f32 %v1008, %v1044
    %v1054 = vld [vmem:[%s6] sm:$0xff]
    %v1055 = vld [vmem:[%s6 + $0x8] sm:$0xff]
    %v1056 = vld [vmem:[%s6 + $0x10] sm:$0xff]
    %v1057 = vld [vmem:[%s6 + $0x18] sm:$0xff]
    %v1058 = vld [vmem:[%s6 + $0x20] sm:$0xff]
    %v1059 = vld [vmem:[%s6 + $0x28] sm:$0xff]
    %v1060 = vld [vmem:[%s6 + $0x30] sm:$0xff]
    %v1061 = vld [vmem:[%s6 + $0x38] sm:$0xff]
    %v1062 = vld [vmem:[%s6 + $0x40] sm:$0xff]
    %v1063 = vmul.f32 %v1045, %v1054
    %v1064 = vmul.f32 %v1046, %v1055
    %v1065 = vmul.f32 %v1047, %v1056
    %v1066 = vmul.f32 %v1048, %v1057
    %v1067 = vmul.f32 %v1049, %v1058
    %v1068 = vmul.f32 %v1050, %v1059
    %v1069 = vmul.f32 %v1051, %v1060
    %v1070 = vmul.f32 %v1052, %v1061
    %v1071 = vmul.f32 %v1053, %v1062
    %v1072 = vld [vmem:[#allocation2] sm:$0xff]
    %v1073 = vld [vmem:[#allocation2 + $0x8] sm:$0xff]
    %v1074 = vld [vmem:[#allocation2 + $0x10] sm:$0xff]
    %v1075 = vld [vmem:[#allocation2 + $0x18] sm:$0xff]
    %v1076 = vld [vmem:[#allocation2 + $0x20] sm:$0xff]
    %v1077 = vld [vmem:[#allocation2 + $0x28] sm:$0xff]
    %v1078 = vld [vmem:[#allocation2 + $0x30] sm:$0xff]
    %v1079 = vld [vmem:[#allocation2 + $0x38] sm:$0xff]
    %v1080 = vld [vmem:[#allocation2 + $0x40] sm:$0xff]
    %v1081 = vadd.f32 %v1063, %v1072
    %v1082 = vadd.f32 %v1064, %v1073
    %v1083 = vadd.f32 %v1065, %v1074
    %v1084 = vadd.f32 %v1066, %v1075
    %v1085 = vadd.f32 %v1067, %v1076
    %v1086 = vadd.f32 %v1068, %v1077
    %v1087 = vadd.f32 %v1069, %v1078
    %v1088 = vadd.f32 %v1070, %v1079
    %v1089 = vadd.f32 %v1071, %v1080
    %vm1090 = vcmp.gt.f32.partialorder %v1081, 0.0
    %vm1091 = vcmp.gt.f32.partialorder %v1082, 0.0
    %vm1092 = vcmp.gt.f32.partialorder %v1083, 0.0
    %vm1093 = vcmp.gt.f32.partialorder %v1084, 0.0
    %vm1094 = vcmp.gt.f32.partialorder %v1085, 0.0
    %vm1095 = vcmp.gt.f32.partialorder %v1086, 0.0
    %vm1096 = vcmp.gt.f32.partialorder %v1087, 0.0
    %vm1097 = vcmp.gt.f32.partialorder %v1088, 0.0
    %vm1098 = vcmp.gt.f32.partialorder %v1089, 0.0
    %v1099 = vmul.f32 %v1081, 0.01
    %v1100 = vmul.f32 %v1082, 0.01
    %v1101 = vmul.f32 %v1083, 0.01
    %v1102 = vmul.f32 %v1084, 0.01
    %v1103 = vmul.f32 %v1085, 0.01
    %v1104 = vmul.f32 %v1086, 0.01
    %v1105 = vmul.f32 %v1087, 0.01
    %v1106 = vmul.f32 %v1088, 0.01
    %v1107 = vmul.f32 %v1089, 0.01
    %v1108 = vsel %vm1090, %v1081, %v1099
    %v1109 = vsel %vm1091, %v1082, %v1100
    %v1110 = vsel %vm1092, %v1083, %v1101
    %v1111 = vsel %vm1093, %v1084, %v1102
    %v1112 = vsel %vm1094, %v1085, %v1103
    %v1113 = vsel %vm1095, %v1086, %v1104
    %v1114 = vsel %vm1096, %v1087, %v1105
    %v1115 = vsel %vm1097, %v1088, %v1106
    %v1116 = vsel %vm1098, %v1089, %v1107
    %v1117 = vld [vmem:[#allocation4] sm:$0xff]
    %v1118 = vld [vmem:[#allocation4 + $0x8] sm:$0xff]
    %v1119 = vld [vmem:[#allocation4 + $0x10] sm:$0xff]
    %v1120 = vld [vmem:[#allocation4 + $0x18] sm:$0xff]
    %v1121 = vld [vmem:[#allocation4 + $0x20] sm:$0xff]
    %v1122 = vld [vmem:[#allocation4 + $0x28] sm:$0xff]
    %v1123 = vld [vmem:[#allocation4 + $0x30] sm:$0xff]
    %v1124 = vld [vmem:[#allocation4 + $0x38] sm:$0xff]
    %v1125 = vld [vmem:[#allocation4 + $0x40] sm:$0xff]
    %v1126 = vmul.f32 %v1108, %v1117
    %v1127 = vmul.f32 %v1109, %v1118
    %v1128 = vmul.f32 %v1110, %v1119
    %v1129 = vmul.f32 %v1111, %v1120
    %v1130 = vmul.f32 %v1112, %v1121
    %v1131 = vmul.f32 %v1113, %v1122
    %v1132 = vmul.f32 %v1114, %v1123
    %v1133 = vmul.f32 %v1115, %v1124
    %v1134 = vmul.f32 %v1116, %v1125
    %v1135 = vld [vmem:[#allocation6] sm:$0xff]
    %v1136 = vld [vmem:[#allocation6 + $0x8] sm:$0xff]
    %v1137 = vld [vmem:[#allocation6 + $0x10] sm:$0xff]
    %v1138 = vld [vmem:[#allocation6 + $0x18] sm:$0xff]
    %v1139 = vld [vmem:[#allocation6 + $0x20] sm:$0xff]
    %v1140 = vld [vmem:[#allocation6 + $0x28] sm:$0xff]
    %v1141 = vld [vmem:[#allocation6 + $0x30] sm:$0xff]
    %v1142 = vld [vmem:[#allocation6 + $0x38] sm:$0xff]
    %v1143 = vld [vmem:[#allocation6 + $0x40] sm:$0xff]
    %v1144 = vadd.f32 %v1126, %v1135
    %v1145 = vadd.f32 %v1127, %v1136
    %v1146 = vadd.f32 %v1128, %v1137
    %v1147 = vadd.f32 %v1129, %v1138
    %v1148 = vadd.f32 %v1130, %v1139
    %v1149 = vadd.f32 %v1131, %v1140
    %v1150 = vadd.f32 %v1132, %v1141
    %v1151 = vadd.f32 %v1133, %v1142
    %v1152 = vadd.f32 %v1134, %v1143
    %vm1153 = vcmp.gt.f32.partialorder %v1144, 0.0
    %vm1154 = vcmp.gt.f32.partialorder %v1145, 0.0
    %vm1155 = vcmp.gt.f32.partialorder %v1146, 0.0
    %vm1156 = vcmp.gt.f32.partialorder %v1147, 0.0
    %vm1157 = vcmp.gt.f32.partialorder %v1148, 0.0
    %vm1158 = vcmp.gt.f32.partialorder %v1149, 0.0
    %vm1159 = vcmp.gt.f32.partialorder %v1150, 0.0
    %vm1160 = vcmp.gt.f32.partialorder %v1151, 0.0
    %vm1161 = vcmp.gt.f32.partialorder %v1152, 0.0
    %v1162 = vmul.f32 %v1144, 0.01
    %v1163 = vmul.f32 %v1145, 0.01
    %v1164 = vmul.f32 %v1146, 0.01
    %v1165 = vmul.f32 %v1147, 0.01
    %v1166 = vmul.f32 %v1148, 0.01
    %v1167 = vmul.f32 %v1149, 0.01
    %v1168 = vmul.f32 %v1150, 0.01
    %v1169 = vmul.f32 %v1151, 0.01
    %v1170 = vmul.f32 %v1152, 0.01
    %v1171 = vsel %vm1153, %v1144, %v1162
    %v1172 = vsel %vm1154, %v1145, %v1163
    %v1173 = vsel %vm1155, %v1146, %v1164
    %v1174 = vsel %vm1156, %v1147, %v1165
    %v1175 = vsel %vm1157, %v1148, %v1166
    %v1176 = vsel %vm1158, %v1149, %v1167
    %v1177 = vsel %vm1159, %v1150, %v1168
    %v1178 = vsel %vm1160, %v1151, %v1169
    %v1179 = vsel %vm1161, %v1152, %v1170
    %v1180 = vld [vmem:[%s10] sm:$0xff]
    %v1181 = vld [vmem:[%s10 + $0x8] sm:$0xff]
    %v1182 = vld [vmem:[%s10 + $0x10] sm:$0xff]
    %v1183 = vld [vmem:[%s10 + $0x18] sm:$0xff]
    %v1184 = vld [vmem:[%s10 + $0x20] sm:$0xff]
    %v1185 = vld [vmem:[%s10 + $0x28] sm:$0xff]
    %v1186 = vld [vmem:[%s10 + $0x30] sm:$0xff]
    %v1187 = vld [vmem:[%s10 + $0x38] sm:$0xff]
    %v1188 = vld [vmem:[%s10 + $0x40] sm:$0xff]
    %v1189 = vmul.f32 %v1171, %v1180
    %v1190 = vmul.f32 %v1172, %v1181
    %v1191 = vmul.f32 %v1173, %v1182
    %v1192 = vmul.f32 %v1174, %v1183
    %v1193 = vmul.f32 %v1175, %v1184
    %v1194 = vmul.f32 %v1176, %v1185
    %v1195 = vmul.f32 %v1177, %v1186
    %v1196 = vmul.f32 %v1178, %v1187
    %v1197 = vmul.f32 %v1179, %v1188
    %v1198 = vadd.f32 %v1189, %v1192
    %v1199 = vadd.f32 %v1198, %v1195
    %v1200 = vrot.slane %v1199, 4
    %v1201 = vadd.f32 %v1199, %v1200
    %v1202 = vrot.slane %v1201, 2
    %v1203 = vadd.f32 %v1201, %v1202
    %v1204 = vrot.slane %v1203, 1
    %v1205 = vadd.f32 %v1203, %v1204
    %v1206 = vadd.f32 %v1190, %v1193
    %v1207 = vadd.f32 %v1206, %v1196
    %v1208 = vrot.slane %v1207, 4
    %v1209 = vadd.f32 %v1207, %v1208
    %v1210 = vrot.slane %v1209, 2
    %v1211 = vadd.f32 %v1209, %v1210
    %v1212 = vrot.slane %v1211, 1
    %v1213 = vadd.f32 %v1211, %v1212
    %v1214 = vadd.f32 %v1191, %v1194
    %v1215 = vadd.f32 %v1214, %v1197
    %v1216 = vrot.slane %v1215, 4
    %v1217 = vadd.f32 %v1215, %v1216
    %v1218 = vrot.slane %v1217, 2
    %v1219 = vadd.f32 %v1217, %v1218
    %v1220 = vrot.slane %v1219, 1
    %v1221 = vadd.f32 %v1219, %v1220
    %s1222 = scalar_lea.vmem %s10, 72
    %v1223 = vld [vmem:[%s1222] sm:$0xff]
    %v1224 = vld [vmem:[%s1222 + $0x8] sm:$0xff]
    %v1225 = vld [vmem:[%s1222 + $0x10] sm:$0xff]
    %v1226 = vld [vmem:[%s1222 + $0x18] sm:$0xff]
    %v1227 = vld [vmem:[%s1222 + $0x20] sm:$0xff]
    %v1228 = vld [vmem:[%s1222 + $0x28] sm:$0xff]
    %v1229 = vld [vmem:[%s1222 + $0x30] sm:$0xff]
    %v1230 = vld [vmem:[%s1222 + $0x38] sm:$0xff]
    %v1231 = vld [vmem:[%s1222 + $0x40] sm:$0xff]
    %v1232 = vmul.f32 %v1171, %v1223
    %v1233 = vmul.f32 %v1172, %v1224
    %v1234 = vmul.f32 %v1173, %v1225
    %v1235 = vmul.f32 %v1174, %v1226
    %v1236 = vmul.f32 %v1175, %v1227
    %v1237 = vmul.f32 %v1176, %v1228
    %v1238 = vmul.f32 %v1177, %v1229
    %v1239 = vmul.f32 %v1178, %v1230
    %v1240 = vmul.f32 %v1179, %v1231
    %v1241 = vadd.f32 %v1232, %v1235
    %v1242 = vadd.f32 %v1241, %v1238
    %v1243 = vrot.slane %v1242, 4
    %v1244 = vadd.f32 %v1242, %v1243
    %v1245 = vrot.slane %v1244, 2
    %v1246 = vadd.f32 %v1244, %v1245
    %v1247 = vrot.slane %v1246, 1
    %v1248 = vadd.f32 %v1246, %v1247
    %v1249 = vadd.f32 %v1233, %v1236
    %v1250 = vadd.f32 %v1249, %v1239
    %v1251 = vrot.slane %v1250, 4
    %v1252 = vadd.f32 %v1250, %v1251
    %v1253 = vrot.slane %v1252, 2
    %v1254 = vadd.f32 %v1252, %v1253
    %v1255 = vrot.slane %v1254, 1
    %v1256 = vadd.f32 %v1254, %v1255
    %v1257 = vadd.f32 %v1234, %v1237
    %v1258 = vadd.f32 %v1257, %v1240
    %v1259 = vrot.slane %v1258, 4
    %v1260 = vadd.f32 %v1258, %v1259
    %v1261 = vrot.slane %v1260, 2
    %v1262 = vadd.f32 %v1260, %v1261
    %v1263 = vrot.slane %v1262, 1
    %v1264 = vadd.f32 %v1262, %v1263
    %v1268 = vrot.slane %v1213, 7
    %v1269 = vrot.slane %v1221, 6
    %vm1270 = vcmask 1040384
    %v1271 = vsel %vm1270, %v1205, %v1268
    %vm1272 = vcmask 1041408
    %v1273 = vsel %vm1272, %v1271, %v1269
    %v1275 = vlaneseq
    %vm1276 = vcmp.ge.s32.totalorder %v1275, 0
    %vm1277 = vcmp.lt.s32.totalorder %v1275, 384
    %vm1278 = vmand %vm1276, %vm1277
    %1279 = vst.msk [vmem:[%s11] ss:$2 sm:$0x7] %vm1278, %v1273
    %v1283 = vrot.slane %v1256, 7
    %v1284 = vrot.slane %v1264, 6
    %v1285 = vsel %vm1270, %v1248, %v1283
    %v1286 = vsel %vm1272, %v1285, %v1284
    %s1288 = scalar_lea.vmem %s11, 6
    %1289 = vst.msk [vmem:[%s1288] ss:$2 sm:$0x7] %vm1278, %v1286
    %s1290 = scalar_lea.vmem %s0, 1
    %v1291 = vld [vmem:[%s1290] ss:$2 sm:$0x7]
    %v1293 = vperm.slane %v1291, 0
    %v1294 = vperm.slane %v1291, 1
    %v1295 = vperm.slane %v1291, 2
    %v1299 = vmul.f32 %v127, %v1293
    %v1300 = vmul.f32 %v127, %v1294
    %v1301 = vmul.f32 %v127, %v1295
    %v1302 = vmul.f32 %v132, %v1293
    %v1303 = vmul.f32 %v132, %v1294
    %v1304 = vmul.f32 %v132, %v1295
    %v1305 = vmul.f32 %v137, %v1293
    %v1306 = vmul.f32 %v137, %v1294
    %v1307 = vmul.f32 %v137, %v1295
    %v1308 = vmul.f32 %v142, %v1293
    %v1309 = vmul.f32 %v142, %v1294
    %v1310 = vmul.f32 %v142, %v1295
    %v1311 = vmul.f32 %v147, %v1293
    %v1312 = vmul.f32 %v147, %v1294
    %v1313 = vmul.f32 %v147, %v1295
    %v1314 = vmul.f32 %v152, %v1293
    %v1315 = vmul.f32 %v152, %v1294
    %v1316 = vmul.f32 %v152, %v1295
    %v1317 = vmul.f32 %v157, %v1293
    %v1318 = vmul.f32 %v157, %v1294
    %v1319 = vmul.f32 %v157, %v1295
    %v1320 = vmul.f32 %v162, %v1293
    %v1321 = vmul.f32 %v162, %v1294
    %v1322 = vmul.f32 %v162, %v1295
    %v1323 = vmul.f32 %v167, %v1293
    %v1324 = vmul.f32 %v167, %v1294
    %v1325 = vmul.f32 %v167, %v1295
    %v1326 = vmul.f32 %v172, %v1293
    %v1327 = vmul.f32 %v172, %v1294
    %v1328 = vmul.f32 %v172, %v1295
    %v1329 = vmul.f32 %v177, %v1293
    %v1330 = vmul.f32 %v177, %v1294
    %v1331 = vmul.f32 %v177, %v1295
    %v1332 = vmul.f32 %v182, %v1293
    %v1333 = vmul.f32 %v182, %v1294
    %v1334 = vmul.f32 %v182, %v1295
    %1335 = vmatpush.msra.mxu0 0.0
    %1336 = vmatpush.msra.mxu0 0.0
    %1337 = vmatpush.msra.mxu0 0.0
    %1338 = vmatpush.msra.mxu0 0.0
    %1339 = vmatpush.msra.mxu0 0.0
    %1340 = vmatpush.msra.mxu0 0.0
    %1341 = vmatpush.msra.mxu0 0.0
    %1342 = vmatpush.msra.mxu0 0.0
    %1343 = vmatpush.msra.mxu0 0.0
    %1344 = vmatpush.msra.mxu0 0.0
    %1345 = vmatpush.msra.mxu0 0.0
    %1346 = vmatpush.msra.mxu0 0.0
    %1347 = vmatpush.msra.mxu0 0.0
    %1348 = vmatpush.msra.mxu0 %v693
    %1349 = vmatpush.msra.mxu0 %v690
    %1350 = vmatpush.msra.mxu0 %v687
    %1351 = vmatmul.f32.gmra.mxu0 %v374
    %v1352 = vpop.f32.mrf.mxu0
    %v1353 = vadd.f32 0.0, %v1352
    %1354 = vmatmul.f32.gmra.mxu0 %v377
    %v1355 = vpop.f32.mrf.mxu0
    %v1356 = vadd.f32 0.0, %v1355
    %1357 = vmatmul.f32.gmra.mxu0 %v380
    %v1358 = vpop.f32.mrf.mxu0
    %v1359 = vadd.f32 0.0, %v1358
    %1360 = vmatmul.f32.gmra.mxu0 %v383
    %v1361 = vpop.f32.mrf.mxu0
    %v1362 = vadd.f32 0.0, %v1361
    %1363 = vmatmul.f32.gmra.mxu0 %v386
    %v1364 = vpop.f32.mrf.mxu0
    %v1365 = vadd.f32 0.0, %v1364
    %1366 = vmatmul.f32.gmra.mxu0 %v389
    %v1367 = vpop.f32.mrf.mxu0
    %v1368 = vadd.f32 0.0, %v1367
    %1369 = vmatmul.f32.gmra.mxu0 %v392
    %v1370 = vpop.f32.mrf.mxu0
    %v1371 = vadd.f32 0.0, %v1370
    %1372 = vmatmul.f32.gmra.mxu0 %v395
    %v1373 = vpop.f32.mrf.mxu0
    %v1374 = vadd.f32 0.0, %v1373
    %1375 = vmatmul.f32.gmra.mxu0 %v398
    %v1376 = vpop.f32.mrf.mxu0
    %v1377 = vadd.f32 0.0, %v1376
    %1378 = vmatmul.f32.gmra.mxu0 %v401
    %v1379 = vpop.f32.mrf.mxu0
    %v1380 = vadd.f32 0.0, %v1379
    %1381 = vmatmul.f32.gmra.mxu0 %v404
    %v1382 = vpop.f32.mrf.mxu0
    %v1383 = vadd.f32 0.0, %v1382
    %1384 = vmatmul.f32.gmra.mxu0 %v407
    %v1385 = vpop.f32.mrf.mxu0
    %v1386 = vadd.f32 0.0, %v1385
    %1387 = vdwg.mxu0
    %1388 = vmatpush.msra.mxu0 0.0
    %1389 = vmatpush.msra.mxu0 0.0
    %1390 = vmatpush.msra.mxu0 0.0
    %1391 = vmatpush.msra.mxu0 0.0
    %1392 = vmatpush.msra.mxu0 0.0
    %1393 = vmatpush.msra.mxu0 0.0
    %1394 = vmatpush.msra.mxu0 0.0
    %1395 = vmatpush.msra.mxu0 0.0
    %1396 = vmatpush.msra.mxu0 0.0
    %1397 = vmatpush.msra.mxu0 0.0
    %1398 = vmatpush.msra.mxu0 0.0
    %1399 = vmatpush.msra.mxu0 0.0
    %1400 = vmatpush.msra.mxu0 0.0
    %1401 = vmatpush.msra.mxu0 %v694
    %1402 = vmatpush.msra.mxu0 %v691
    %1403 = vmatpush.msra.mxu0 %v688
    %1404 = vmatmul.f32.gmra.mxu0 %v374
    %v1405 = vpop.f32.mrf.mxu0
    %v1406 = vadd.f32 0.0, %v1405
    %1407 = vmatmul.f32.gmra.mxu0 %v377
    %v1408 = vpop.f32.mrf.mxu0
    %v1409 = vadd.f32 0.0, %v1408
    %1410 = vmatmul.f32.gmra.mxu0 %v380
    %v1411 = vpop.f32.mrf.mxu0
    %v1412 = vadd.f32 0.0, %v1411
    %1413 = vmatmul.f32.gmra.mxu0 %v383
    %v1414 = vpop.f32.mrf.mxu0
    %v1415 = vadd.f32 0.0, %v1414
    %1416 = vmatmul.f32.gmra.mxu0 %v386
    %v1417 = vpop.f32.mrf.mxu0
    %v1418 = vadd.f32 0.0, %v1417
    %1419 = vmatmul.f32.gmra.mxu0 %v389
    %v1420 = vpop.f32.mrf.mxu0
    %v1421 = vadd.f32 0.0, %v1420
    %1422 = vmatmul.f32.gmra.mxu0 %v392
    %v1423 = vpop.f32.mrf.mxu0
    %v1424 = vadd.f32 0.0, %v1423
    %1425 = vmatmul.f32.gmra.mxu0 %v395
    %v1426 = vpop.f32.mrf.mxu0
    %v1427 = vadd.f32 0.0, %v1426
    %1428 = vmatmul.f32.gmra.mxu0 %v398
    %v1429 = vpop.f32.mrf.mxu0
    %v1430 = vadd.f32 0.0, %v1429
    %1431 = vmatmul.f32.gmra.mxu0 %v401
    %v1432 = vpop.f32.mrf.mxu0
    %v1433 = vadd.f32 0.0, %v1432
    %1434 = vmatmul.f32.gmra.mxu0 %v404
    %v1435 = vpop.f32.mrf.mxu0
    %v1436 = vadd.f32 0.0, %v1435
    %1437 = vmatmul.f32.gmra.mxu0 %v407
    %v1438 = vpop.f32.mrf.mxu0
    %v1439 = vadd.f32 0.0, %v1438
    %1440 = vdwg.mxu0
    %1441 = vmatpush.msra.mxu0 0.0
    %1442 = vmatpush.msra.mxu0 0.0
    %1443 = vmatpush.msra.mxu0 0.0
    %1444 = vmatpush.msra.mxu0 0.0
    %1445 = vmatpush.msra.mxu0 0.0
    %1446 = vmatpush.msra.mxu0 0.0
    %1447 = vmatpush.msra.mxu0 0.0
    %1448 = vmatpush.msra.mxu0 0.0
    %1449 = vmatpush.msra.mxu0 0.0
    %1450 = vmatpush.msra.mxu0 0.0
    %1451 = vmatpush.msra.mxu0 0.0
    %1452 = vmatpush.msra.mxu0 0.0
    %1453 = vmatpush.msra.mxu0 0.0
    %1454 = vmatpush.msra.mxu0 %v695
    %1455 = vmatpush.msra.mxu0 %v692
    %1456 = vmatpush.msra.mxu0 %v689
    %1457 = vmatmul.f32.gmra.mxu0 %v374
    %v1458 = vpop.f32.mrf.mxu0
    %v1459 = vadd.f32 0.0, %v1458
    %1460 = vmatmul.f32.gmra.mxu0 %v377
    %v1461 = vpop.f32.mrf.mxu0
    %v1462 = vadd.f32 0.0, %v1461
    %1463 = vmatmul.f32.gmra.mxu0 %v380
    %v1464 = vpop.f32.mrf.mxu0
    %v1465 = vadd.f32 0.0, %v1464
    %1466 = vmatmul.f32.gmra.mxu0 %v383
    %v1467 = vpop.f32.mrf.mxu0
    %v1468 = vadd.f32 0.0, %v1467
    %1469 = vmatmul.f32.gmra.mxu0 %v386
    %v1470 = vpop.f32.mrf.mxu0
    %v1471 = vadd.f32 0.0, %v1470
    %1472 = vmatmul.f32.gmra.mxu0 %v389
    %v1473 = vpop.f32.mrf.mxu0
    %v1474 = vadd.f32 0.0, %v1473
    %1475 = vmatmul.f32.gmra.mxu0 %v392
    %v1476 = vpop.f32.mrf.mxu0
    %v1477 = vadd.f32 0.0, %v1476
    %1478 = vmatmul.f32.gmra.mxu0 %v395
    %v1479 = vpop.f32.mrf.mxu0
    %v1480 = vadd.f32 0.0, %v1479
    %1481 = vmatmul.f32.gmra.mxu0 %v398
    %v1482 = vpop.f32.mrf.mxu0
    %v1483 = vadd.f32 0.0, %v1482
    %1484 = vmatmul.f32.gmra.mxu0 %v401
    %v1485 = vpop.f32.mrf.mxu0
    %v1486 = vadd.f32 0.0, %v1485
    %1487 = vmatmul.f32.gmra.mxu0 %v404
    %v1488 = vpop.f32.mrf.mxu0
    %v1489 = vadd.f32 0.0, %v1488
    %1490 = vmatmul.f32.gmra.mxu0 %v407
    %v1491 = vpop.f32.mrf.mxu0
    %v1492 = vadd.f32 0.0, %v1491
    %1493 = vdwg.mxu0
    %v1494 = vadd.f32 %v1299, %v1353
    %v1495 = vadd.f32 %v1300, %v1406
    %v1496 = vadd.f32 %v1301, %v1459
    %v1497 = vadd.f32 %v1302, %v1356
    %v1498 = vadd.f32 %v1303, %v1409
    %v1499 = vadd.f32 %v1304, %v1462
    %v1500 = vadd.f32 %v1305, %v1359
    %v1501 = vadd.f32 %v1306, %v1412
    %v1502 = vadd.f32 %v1307, %v1465
    %v1503 = vadd.f32 %v1308, %v1362
    %v1504 = vadd.f32 %v1309, %v1415
    %v1505 = vadd.f32 %v1310, %v1468
    %v1506 = vadd.f32 %v1311, %v1365
    %v1507 = vadd.f32 %v1312, %v1418
    %v1508 = vadd.f32 %v1313, %v1471
    %v1509 = vadd.f32 %v1314, %v1368
    %v1510 = vadd.f32 %v1315, %v1421
    %v1511 = vadd.f32 %v1316, %v1474
    %v1512 = vadd.f32 %v1317, %v1371
    %v1513 = vadd.f32 %v1318, %v1424
    %v1514 = vadd.f32 %v1319, %v1477
    %v1515 = vadd.f32 %v1320, %v1374
    %v1516 = vadd.f32 %v1321, %v1427
    %v1517 = vadd.f32 %v1322, %v1480
    %v1518 = vadd.f32 %v1323, %v1377
    %v1519 = vadd.f32 %v1324, %v1430
    %v1520 = vadd.f32 %v1325, %v1483
    %v1521 = vadd.f32 %v1326, %v1380
    %v1522 = vadd.f32 %v1327, %v1433
    %v1523 = vadd.f32 %v1328, %v1486
    %v1524 = vadd.f32 %v1329, %v1383
    %v1525 = vadd.f32 %v1330, %v1436
    %v1526 = vadd.f32 %v1331, %v1489
    %v1527 = vadd.f32 %v1332, %v1386
    %v1528 = vadd.f32 %v1333, %v1439
    %v1529 = vadd.f32 %v1334, %v1492
    %v1530 = vadd.f32 %v1494, %v199
    %v1531 = vadd.f32 %v1495, %v199
    %v1532 = vadd.f32 %v1496, %v199
    %v1533 = vadd.f32 %v1497, %v204
    %v1534 = vadd.f32 %v1498, %v204
    %v1535 = vadd.f32 %v1499, %v204
    %v1536 = vadd.f32 %v1500, %v209
    %v1537 = vadd.f32 %v1501, %v209
    %v1538 = vadd.f32 %v1502, %v209
    %v1539 = vadd.f32 %v1503, %v214
    %v1540 = vadd.f32 %v1504, %v214
    %v1541 = vadd.f32 %v1505, %v214
    %v1542 = vadd.f32 %v1506, %v219
    %v1543 = vadd.f32 %v1507, %v219
    %v1544 = vadd.f32 %v1508, %v219
    %v1545 = vadd.f32 %v1509, %v224
    %v1546 = vadd.f32 %v1510, %v224
    %v1547 = vadd.f32 %v1511, %v224
    %v1548 = vadd.f32 %v1512, %v229
    %v1549 = vadd.f32 %v1513, %v229
    %v1550 = vadd.f32 %v1514, %v229
    %v1551 = vadd.f32 %v1515, %v234
    %v1552 = vadd.f32 %v1516, %v234
    %v1553 = vadd.f32 %v1517, %v234
    %v1554 = vadd.f32 %v1518, %v239
    %v1555 = vadd.f32 %v1519, %v239
    %v1556 = vadd.f32 %v1520, %v239
    %v1557 = vadd.f32 %v1521, %v244
    %v1558 = vadd.f32 %v1522, %v244
    %v1559 = vadd.f32 %v1523, %v244
    %v1560 = vadd.f32 %v1524, %v249
    %v1561 = vadd.f32 %v1525, %v249
    %v1562 = vadd.f32 %v1526, %v249
    %v1563 = vadd.f32 %v1527, %v254
    %v1564 = vadd.f32 %v1528, %v254
    %v1565 = vadd.f32 %v1529, %v254
    %v1566 = vmul.f32 %v1530, 0.5
    %v1567 = vmul.f32 %v1531, 0.5
    %v1568 = vmul.f32 %v1532, 0.5
    %v1569 = vmul.f32 %v1533, 0.5
    %v1570 = vmul.f32 %v1534, 0.5
    %v1571 = vmul.f32 %v1535, 0.5
    %v1572 = vmul.f32 %v1536, 0.5
    %v1573 = vmul.f32 %v1537, 0.5
    %v1574 = vmul.f32 %v1538, 0.5
    %v1575 = vtanh.pop %v1566
    %v1576 = vtanh.pop %v1567
    %v1577 = vtanh.pop %v1568
    %v1578 = vtanh.pop %v1569
    %v1579 = vtanh.pop %v1570
    %v1580 = vtanh.pop %v1571
    %v1581 = vtanh.pop %v1572
    %v1582 = vtanh.pop %v1573
    %v1583 = vtanh.pop %v1574
    %v1584 = vmul.f32 %v1575, 0.5
    %v1585 = vmul.f32 %v1576, 0.5
    %v1586 = vmul.f32 %v1577, 0.5
    %v1587 = vmul.f32 %v1578, 0.5
    %v1588 = vmul.f32 %v1579, 0.5
    %v1589 = vmul.f32 %v1580, 0.5
    %v1590 = vmul.f32 %v1581, 0.5
    %v1591 = vmul.f32 %v1582, 0.5
    %v1592 = vmul.f32 %v1583, 0.5
    %v1593 = vadd.f32 %v1584, 0.5
    %v1594 = vadd.f32 %v1585, 0.5
    %v1595 = vadd.f32 %v1586, 0.5
    %v1596 = vadd.f32 %v1587, 0.5
    %v1597 = vadd.f32 %v1588, 0.5
    %v1598 = vadd.f32 %v1589, 0.5
    %v1599 = vadd.f32 %v1590, 0.5
    %v1600 = vadd.f32 %v1591, 0.5
    %v1601 = vadd.f32 %v1592, 0.5
    %v1602 = vmul.f32 %v1539, 0.5
    %v1603 = vmul.f32 %v1540, 0.5
    %v1604 = vmul.f32 %v1541, 0.5
    %v1605 = vmul.f32 %v1542, 0.5
    %v1606 = vmul.f32 %v1543, 0.5
    %v1607 = vmul.f32 %v1544, 0.5
    %v1608 = vmul.f32 %v1545, 0.5
    %v1609 = vmul.f32 %v1546, 0.5
    %v1610 = vmul.f32 %v1547, 0.5
    %v1611 = vtanh.pop %v1602
    %v1612 = vtanh.pop %v1603
    %v1613 = vtanh.pop %v1604
    %v1614 = vtanh.pop %v1605
    %v1615 = vtanh.pop %v1606
    %v1616 = vtanh.pop %v1607
    %v1617 = vtanh.pop %v1608
    %v1618 = vtanh.pop %v1609
    %v1619 = vtanh.pop %v1610
    %v1620 = vmul.f32 %v1611, 0.5
    %v1621 = vmul.f32 %v1612, 0.5
    %v1622 = vmul.f32 %v1613, 0.5
    %v1623 = vmul.f32 %v1614, 0.5
    %v1624 = vmul.f32 %v1615, 0.5
    %v1625 = vmul.f32 %v1616, 0.5
    %v1626 = vmul.f32 %v1617, 0.5
    %v1627 = vmul.f32 %v1618, 0.5
    %v1628 = vmul.f32 %v1619, 0.5
    %v1629 = vadd.f32 %v1620, 0.5
    %v1630 = vadd.f32 %v1621, 0.5
    %v1631 = vadd.f32 %v1622, 0.5
    %v1632 = vadd.f32 %v1623, 0.5
    %v1633 = vadd.f32 %v1624, 0.5
    %v1634 = vadd.f32 %v1625, 0.5
    %v1635 = vadd.f32 %v1626, 0.5
    %v1636 = vadd.f32 %v1627, 0.5
    %v1637 = vadd.f32 %v1628, 0.5
    %v1638 = vtanh.pop %v1548
    %v1639 = vtanh.pop %v1549
    %v1640 = vtanh.pop %v1550
    %v1641 = vtanh.pop %v1551
    %v1642 = vtanh.pop %v1552
    %v1643 = vtanh.pop %v1553
    %v1644 = vtanh.pop %v1554
    %v1645 = vtanh.pop %v1555
    %v1646 = vtanh.pop %v1556
    %v1647 = vmul.f32 %v1557, 0.5
    %v1648 = vmul.f32 %v1558, 0.5
    %v1649 = vmul.f32 %v1559, 0.5
    %v1650 = vmul.f32 %v1560, 0.5
    %v1651 = vmul.f32 %v1561, 0.5
    %v1652 = vmul.f32 %v1562, 0.5
    %v1653 = vmul.f32 %v1563, 0.5
    %v1654 = vmul.f32 %v1564, 0.5
    %v1655 = vmul.f32 %v1565, 0.5
    %v1656 = vtanh.pop %v1647
    %v1657 = vtanh.pop %v1648
    %v1658 = vtanh.pop %v1649
    %v1659 = vtanh.pop %v1650
    %v1660 = vtanh.pop %v1651
    %v1661 = vtanh.pop %v1652
    %v1662 = vtanh.pop %v1653
    %v1663 = vtanh.pop %v1654
    %v1664 = vtanh.pop %v1655
    %v1665 = vmul.f32 %v1656, 0.5
    %v1666 = vmul.f32 %v1657, 0.5
    %v1667 = vmul.f32 %v1658, 0.5
    %v1668 = vmul.f32 %v1659, 0.5
    %v1669 = vmul.f32 %v1660, 0.5
    %v1670 = vmul.f32 %v1661, 0.5
    %v1671 = vmul.f32 %v1662, 0.5
    %v1672 = vmul.f32 %v1663, 0.5
    %v1673 = vmul.f32 %v1664, 0.5
    %v1674 = vadd.f32 %v1665, 0.5
    %v1675 = vadd.f32 %v1666, 0.5
    %v1676 = vadd.f32 %v1667, 0.5
    %v1677 = vadd.f32 %v1668, 0.5
    %v1678 = vadd.f32 %v1669, 0.5
    %v1679 = vadd.f32 %v1670, 0.5
    %v1680 = vadd.f32 %v1671, 0.5
    %v1681 = vadd.f32 %v1672, 0.5
    %v1682 = vadd.f32 %v1673, 0.5
    %v1683 = vmul.f32 %v1629, %v669
    %v1684 = vmul.f32 %v1630, %v670
    %v1685 = vmul.f32 %v1631, %v671
    %v1686 = vmul.f32 %v1632, %v672
    %v1687 = vmul.f32 %v1633, %v673
    %v1688 = vmul.f32 %v1634, %v674
    %v1689 = vmul.f32 %v1635, %v675
    %v1690 = vmul.f32 %v1636, %v676
    %v1691 = vmul.f32 %v1637, %v677
    %v1692 = vmul.f32 %v1593, %v1638
    %v1693 = vmul.f32 %v1594, %v1639
    %v1694 = vmul.f32 %v1595, %v1640
    %v1695 = vmul.f32 %v1596, %v1641
    %v1696 = vmul.f32 %v1597, %v1642
    %v1697 = vmul.f32 %v1598, %v1643
    %v1698 = vmul.f32 %v1599, %v1644
    %v1699 = vmul.f32 %v1600, %v1645
    %v1700 = vmul.f32 %v1601, %v1646
    %v1701 = vadd.f32 %v1683, %v1692
    %v1702 = vadd.f32 %v1684, %v1693
    %v1703 = vadd.f32 %v1685, %v1694
    %v1704 = vadd.f32 %v1686, %v1695
    %v1705 = vadd.f32 %v1687, %v1696
    %v1706 = vadd.f32 %v1688, %v1697
    %v1707 = vadd.f32 %v1689, %v1698
    %v1708 = vadd.f32 %v1690, %v1699
    %v1709 = vadd.f32 %v1691, %v1700
    %v1710 = vtanh.pop %v1701
    %v1711 = vtanh.pop %v1702
    %v1712 = vtanh.pop %v1703
    %v1713 = vtanh.pop %v1704
    %v1714 = vtanh.pop %v1705
    %v1715 = vtanh.pop %v1706
    %v1716 = vtanh.pop %v1707
    %v1717 = vtanh.pop %v1708
    %v1718 = vtanh.pop %v1709
    %v1719 = vmul.f32 %v1674, %v1710
    %v1720 = vmul.f32 %v1675, %v1711
    %v1721 = vmul.f32 %v1676, %v1712
    %v1722 = vmul.f32 %v1677, %v1713
    %v1723 = vmul.f32 %v1678, %v1714
    %v1724 = vmul.f32 %v1679, %v1715
    %v1725 = vmul.f32 %v1680, %v1716
    %v1726 = vmul.f32 %v1681, %v1717
    %v1727 = vmul.f32 %v1682, %v1718
    %1728 = vmatpush.msra.mxu0 0.0
    %1729 = vmatpush.msra.mxu0 0.0
    %1730 = vmatpush.msra.mxu0 0.0
    %1731 = vmatpush.msra.mxu0 0.0
    %1732 = vmatpush.msra.mxu0 0.0
    %1733 = vmatpush.msra.mxu0 0.0
    %1734 = vmatpush.msra.mxu0 0.0
    %1735 = vmatpush.msra.mxu0 0.0
    %1736 = vmatpush.msra.mxu0 0.0
    %1737 = vmatpush.msra.mxu0 0.0
    %1738 = vmatpush.msra.mxu0 %v1051
    %1739 = vmatpush.msra.mxu0 %v1048
    %1740 = vmatpush.msra.mxu0 %v1045
    %1741 = vmatpush.msra.mxu0 %v1725
    %1742 = vmatpush.msra.mxu0 %v1722
    %1743 = vmatpush.msra.mxu0 %v1719
    %1744 = vmatmul.f32.gmra.mxu0 %v698
    %v1745 = vpop.f32.mrf.mxu0
    %v1746 = vadd.f32 %v271, %v1745
    %1747 = vmatmul.f32.gmra.mxu0 %v701
    %v1748 = vpop.f32.mrf.mxu0
    %v1749 = vadd.f32 %v276, %v1748
    %1750 = vmatmul.f32.gmra.mxu0 %v704
    %v1751 = vpop.f32.mrf.mxu0
    %v1752 = vadd.f32 %v281, %v1751
    %1753 = vmatmul.f32.gmra.mxu0 %v707
    %v1754 = vpop.f32.mrf.mxu0
    %v1755 = vadd.f32 %v286, %v1754
    %1756 = vmatmul.f32.gmra.mxu0 %v710
    %v1757 = vpop.f32.mrf.mxu0
    %v1758 = vadd.f32 %v291, %v1757
    %1759 = vmatmul.f32.gmra.mxu0 %v713
    %v1760 = vpop.f32.mrf.mxu0
    %v1761 = vadd.f32 %v296, %v1760
    %1762 = vmatmul.f32.gmra.mxu0 %v716
    %v1763 = vpop.f32.mrf.mxu0
    %v1764 = vadd.f32 %v301, %v1763
    %1765 = vmatmul.f32.gmra.mxu0 %v719
    %v1766 = vpop.f32.mrf.mxu0
    %v1767 = vadd.f32 %v306, %v1766
    %1768 = vmatmul.f32.gmra.mxu0 %v722
    %v1769 = vpop.f32.mrf.mxu0
    %v1770 = vadd.f32 %v311, %v1769
    %1771 = vmatmul.f32.gmra.mxu0 %v725
    %v1772 = vpop.f32.mrf.mxu0
    %v1773 = vadd.f32 %v316, %v1772
    %1774 = vmatmul.f32.gmra.mxu0 %v728
    %v1775 = vpop.f32.mrf.mxu0
    %v1776 = vadd.f32 %v321, %v1775
    %1777 = vmatmul.f32.gmra.mxu0 %v731
    %v1778 = vpop.f32.mrf.mxu0
    %v1779 = vadd.f32 %v326, %v1778
    %1780 = vdwg.mxu0
    %1781 = vmatpush.msra.mxu0 0.0
    %1782 = vmatpush.msra.mxu0 0.0
    %1783 = vmatpush.msra.mxu0 0.0
    %1784 = vmatpush.msra.mxu0 0.0
    %1785 = vmatpush.msra.mxu0 0.0
    %1786 = vmatpush.msra.mxu0 0.0
    %1787 = vmatpush.msra.mxu0 0.0
    %1788 = vmatpush.msra.mxu0 0.0
    %1789 = vmatpush.msra.mxu0 0.0
    %1790 = vmatpush.msra.mxu0 0.0
    %1791 = vmatpush.msra.mxu0 %v1052
    %1792 = vmatpush.msra.mxu0 %v1049
    %1793 = vmatpush.msra.mxu0 %v1046
    %1794 = vmatpush.msra.mxu0 %v1726
    %1795 = vmatpush.msra.mxu0 %v1723
    %1796 = vmatpush.msra.mxu0 %v1720
    %1797 = vmatmul.f32.gmra.mxu0 %v698
    %v1798 = vpop.f32.mrf.mxu0
    %v1799 = vadd.f32 %v271, %v1798
    %1800 = vmatmul.f32.gmra.mxu0 %v701
    %v1801 = vpop.f32.mrf.mxu0
    %v1802 = vadd.f32 %v276, %v1801
    %1803 = vmatmul.f32.gmra.mxu0 %v704
    %v1804 = vpop.f32.mrf.mxu0
    %v1805 = vadd.f32 %v281, %v1804
    %1806 = vmatmul.f32.gmra.mxu0 %v707
    %v1807 = vpop.f32.mrf.mxu0
    %v1808 = vadd.f32 %v286, %v1807
    %1809 = vmatmul.f32.gmra.mxu0 %v710
    %v1810 = vpop.f32.mrf.mxu0
    %v1811 = vadd.f32 %v291, %v1810
    %1812 = vmatmul.f32.gmra.mxu0 %v713
    %v1813 = vpop.f32.mrf.mxu0
    %v1814 = vadd.f32 %v296, %v1813
    %1815 = vmatmul.f32.gmra.mxu0 %v716
    %v1816 = vpop.f32.mrf.mxu0
    %v1817 = vadd.f32 %v301, %v1816
    %1818 = vmatmul.f32.gmra.mxu0 %v719
    %v1819 = vpop.f32.mrf.mxu0
    %v1820 = vadd.f32 %v306, %v1819
    %1821 = vmatmul.f32.gmra.mxu0 %v722
    %v1822 = vpop.f32.mrf.mxu0
    %v1823 = vadd.f32 %v311, %v1822
    %1824 = vmatmul.f32.gmra.mxu0 %v725
    %v1825 = vpop.f32.mrf.mxu0
    %v1826 = vadd.f32 %v316, %v1825
    %1827 = vmatmul.f32.gmra.mxu0 %v728
    %v1828 = vpop.f32.mrf.mxu0
    %v1829 = vadd.f32 %v321, %v1828
    %1830 = vmatmul.f32.gmra.mxu0 %v731
    %v1831 = vpop.f32.mrf.mxu0
    %v1832 = vadd.f32 %v326, %v1831
    %1833 = vdwg.mxu0
    %1834 = vmatpush.msra.mxu0 0.0
    %1835 = vmatpush.msra.mxu0 0.0
    %1836 = vmatpush.msra.mxu0 0.0
    %1837 = vmatpush.msra.mxu0 0.0
    %1838 = vmatpush.msra.mxu0 0.0
    %1839 = vmatpush.msra.mxu0 0.0
    %1840 = vmatpush.msra.mxu0 0.0
    %1841 = vmatpush.msra.mxu0 0.0
    %1842 = vmatpush.msra.mxu0 0.0
    %1843 = vmatpush.msra.mxu0 0.0
    %1844 = vmatpush.msra.mxu0 %v1053
    %1845 = vmatpush.msra.mxu0 %v1050
    %1846 = vmatpush.msra.mxu0 %v1047
    %1847 = vmatpush.msra.mxu0 %v1727
    %1848 = vmatpush.msra.mxu0 %v1724
    %1849 = vmatpush.msra.mxu0 %v1721
    %1850 = vmatmul.f32.gmra.mxu0 %v698
    %v1851 = vpop.f32.mrf.mxu0
    %v1852 = vadd.f32 %v271, %v1851
    %1853 = vmatmul.f32.gmra.mxu0 %v701
    %v1854 = vpop.f32.mrf.mxu0
    %v1855 = vadd.f32 %v276, %v1854
    %1856 = vmatmul.f32.gmra.mxu0 %v704
    %v1857 = vpop.f32.mrf.mxu0
    %v1858 = vadd.f32 %v281, %v1857
    %1859 = vmatmul.f32.gmra.mxu0 %v707
    %v1860 = vpop.f32.mrf.mxu0
    %v1861 = vadd.f32 %v286, %v1860
    %1862 = vmatmul.f32.gmra.mxu0 %v710
    %v1863 = vpop.f32.mrf.mxu0
    %v1864 = vadd.f32 %v291, %v1863
    %1865 = vmatmul.f32.gmra.mxu0 %v713
    %v1866 = vpop.f32.mrf.mxu0
    %v1867 = vadd.f32 %v296, %v1866
    %1868 = vmatmul.f32.gmra.mxu0 %v716
    %v1869 = vpop.f32.mrf.mxu0
    %v1870 = vadd.f32 %v301, %v1869
    %1871 = vmatmul.f32.gmra.mxu0 %v719
    %v1872 = vpop.f32.mrf.mxu0
    %v1873 = vadd.f32 %v306, %v1872
    %1874 = vmatmul.f32.gmra.mxu0 %v722
    %v1875 = vpop.f32.mrf.mxu0
    %v1876 = vadd.f32 %v311, %v1875
    %1877 = vmatmul.f32.gmra.mxu0 %v725
    %v1878 = vpop.f32.mrf.mxu0
    %v1879 = vadd.f32 %v316, %v1878
    %1880 = vmatmul.f32.gmra.mxu0 %v728
    %v1881 = vpop.f32.mrf.mxu0
    %v1882 = vadd.f32 %v321, %v1881
    %1883 = vmatmul.f32.gmra.mxu0 %v731
    %v1884 = vpop.f32.mrf.mxu0
    %v1885 = vadd.f32 %v326, %v1884
    %1886 = vdwg.mxu0
    %v1887 = vmul.f32 %v1746, 0.5
    %v1888 = vmul.f32 %v1799, 0.5
    %v1889 = vmul.f32 %v1852, 0.5
    %v1890 = vmul.f32 %v1749, 0.5
    %v1891 = vmul.f32 %v1802, 0.5
    %v1892 = vmul.f32 %v1855, 0.5
    %v1893 = vmul.f32 %v1752, 0.5
    %v1894 = vmul.f32 %v1805, 0.5
    %v1895 = vmul.f32 %v1858, 0.5
    %v1896 = vtanh.pop %v1887
    %v1897 = vtanh.pop %v1888
    %v1898 = vtanh.pop %v1889
    %v1899 = vtanh.pop %v1890
    %v1900 = vtanh.pop %v1891
    %v1901 = vtanh.pop %v1892
    %v1902 = vtanh.pop %v1893
    %v1903 = vtanh.pop %v1894
    %v1904 = vtanh.pop %v1895
    %v1905 = vmul.f32 %v1896, 0.5
    %v1906 = vmul.f32 %v1897, 0.5
    %v1907 = vmul.f32 %v1898, 0.5
    %v1908 = vmul.f32 %v1899, 0.5
    %v1909 = vmul.f32 %v1900, 0.5
    %v1910 = vmul.f32 %v1901, 0.5
    %v1911 = vmul.f32 %v1902, 0.5
    %v1912 = vmul.f32 %v1903, 0.5
    %v1913 = vmul.f32 %v1904, 0.5
    %v1914 = vadd.f32 %v1905, 0.5
    %v1915 = vadd.f32 %v1906, 0.5
    %v1916 = vadd.f32 %v1907, 0.5
    %v1917 = vadd.f32 %v1908, 0.5
    %v1918 = vadd.f32 %v1909, 0.5
    %v1919 = vadd.f32 %v1910, 0.5
    %v1920 = vadd.f32 %v1911, 0.5
    %v1921 = vadd.f32 %v1912, 0.5
    %v1922 = vadd.f32 %v1913, 0.5
    %v1923 = vmul.f32 %v1755, 0.5
    %v1924 = vmul.f32 %v1808, 0.5
    %v1925 = vmul.f32 %v1861, 0.5
    %v1926 = vmul.f32 %v1758, 0.5
    %v1927 = vmul.f32 %v1811, 0.5
    %v1928 = vmul.f32 %v1864, 0.5
    %v1929 = vmul.f32 %v1761, 0.5
    %v1930 = vmul.f32 %v1814, 0.5
    %v1931 = vmul.f32 %v1867, 0.5
    %v1932 = vtanh.pop %v1923
    %v1933 = vtanh.pop %v1924
    %v1934 = vtanh.pop %v1925
    %v1935 = vtanh.pop %v1926
    %v1936 = vtanh.pop %v1927
    %v1937 = vtanh.pop %v1928
    %v1938 = vtanh.pop %v1929
    %v1939 = vtanh.pop %v1930
    %v1940 = vtanh.pop %v1931
    %v1941 = vmul.f32 %v1932, 0.5
    %v1942 = vmul.f32 %v1933, 0.5
    %v1943 = vmul.f32 %v1934, 0.5
    %v1944 = vmul.f32 %v1935, 0.5
    %v1945 = vmul.f32 %v1936, 0.5
    %v1946 = vmul.f32 %v1937, 0.5
    %v1947 = vmul.f32 %v1938, 0.5
    %v1948 = vmul.f32 %v1939, 0.5
    %v1949 = vmul.f32 %v1940, 0.5
    %v1950 = vadd.f32 %v1941, 0.5
    %v1951 = vadd.f32 %v1942, 0.5
    %v1952 = vadd.f32 %v1943, 0.5
    %v1953 = vadd.f32 %v1944, 0.5
    %v1954 = vadd.f32 %v1945, 0.5
    %v1955 = vadd.f32 %v1946, 0.5
    %v1956 = vadd.f32 %v1947, 0.5
    %v1957 = vadd.f32 %v1948, 0.5
    %v1958 = vadd.f32 %v1949, 0.5
    %v1959 = vtanh.pop %v1764
    %v1960 = vtanh.pop %v1817
    %v1961 = vtanh.pop %v1870
    %v1962 = vtanh.pop %v1767
    %v1963 = vtanh.pop %v1820
    %v1964 = vtanh.pop %v1873
    %v1965 = vtanh.pop %v1770
    %v1966 = vtanh.pop %v1823
    %v1967 = vtanh.pop %v1876
    %v1968 = vmul.f32 %v1773, 0.5
    %v1969 = vmul.f32 %v1826, 0.5
    %v1970 = vmul.f32 %v1879, 0.5
    %v1971 = vmul.f32 %v1776, 0.5
    %v1972 = vmul.f32 %v1829, 0.5
    %v1973 = vmul.f32 %v1882, 0.5
    %v1974 = vmul.f32 %v1779, 0.5
    %v1975 = vmul.f32 %v1832, 0.5
    %v1976 = vmul.f32 %v1885, 0.5
    %v1977 = vtanh.pop %v1968
    %v1978 = vtanh.pop %v1969
    %v1979 = vtanh.pop %v1970
    %v1980 = vtanh.pop %v1971
    %v1981 = vtanh.pop %v1972
    %v1982 = vtanh.pop %v1973
    %v1983 = vtanh.pop %v1974
    %v1984 = vtanh.pop %v1975
    %v1985 = vtanh.pop %v1976
    %v1986 = vmul.f32 %v1977, 0.5
    %v1987 = vmul.f32 %v1978, 0.5
    %v1988 = vmul.f32 %v1979, 0.5
    %v1989 = vmul.f32 %v1980, 0.5
    %v1990 = vmul.f32 %v1981, 0.5
    %v1991 = vmul.f32 %v1982, 0.5
    %v1992 = vmul.f32 %v1983, 0.5
    %v1993 = vmul.f32 %v1984, 0.5
    %v1994 = vmul.f32 %v1985, 0.5
    %v1995 = vadd.f32 %v1986, 0.5
    %v1996 = vadd.f32 %v1987, 0.5
    %v1997 = vadd.f32 %v1988, 0.5
    %v1998 = vadd.f32 %v1989, 0.5
    %v1999 = vadd.f32 %v1990, 0.5
    %v2000 = vadd.f32 %v1991, 0.5
    %v2001 = vadd.f32 %v1992, 0.5
    %v2002 = vadd.f32 %v1993, 0.5
    %v2003 = vadd.f32 %v1994, 0.5
    %v2004 = vmul.f32 %v1950, %v1027
    %v2005 = vmul.f32 %v1951, %v1028
    %v2006 = vmul.f32 %v1952, %v1029
    %v2007 = vmul.f32 %v1953, %v1030
    %v2008 = vmul.f32 %v1954, %v1031
    %v2009 = vmul.f32 %v1955, %v1032
    %v2010 = vmul.f32 %v1956, %v1033
    %v2011 = vmul.f32 %v1957, %v1034
    %v2012 = vmul.f32 %v1958, %v1035
    %v2013 = vmul.f32 %v1914, %v1959
    %v2014 = vmul.f32 %v1915, %v1960
    %v2015 = vmul.f32 %v1916, %v1961
    %v2016 = vmul.f32 %v1917, %v1962
    %v2017 = vmul.f32 %v1918, %v1963
    %v2018 = vmul.f32 %v1919, %v1964
    %v2019 = vmul.f32 %v1920, %v1965
    %v2020 = vmul.f32 %v1921, %v1966
    %v2021 = vmul.f32 %v1922, %v1967
    %v2022 = vadd.f32 %v2004, %v2013
    %v2023 = vadd.f32 %v2005, %v2014
    %v2024 = vadd.f32 %v2006, %v2015
    %v2025 = vadd.f32 %v2007, %v2016
    %v2026 = vadd.f32 %v2008, %v2017
    %v2027 = vadd.f32 %v2009, %v2018
    %v2028 = vadd.f32 %v2010, %v2019
    %v2029 = vadd.f32 %v2011, %v2020
    %v2030 = vadd.f32 %v2012, %v2021
    %v2031 = vtanh.pop %v2022
    %v2032 = vtanh.pop %v2023
    %v2033 = vtanh.pop %v2024
    %v2034 = vtanh.pop %v2025
    %v2035 = vtanh.pop %v2026
    %v2036 = vtanh.pop %v2027
    %v2037 = vtanh.pop %v2028
    %v2038 = vtanh.pop %v2029
    %v2039 = vtanh.pop %v2030
    %v2040 = vmul.f32 %v1995, %v2031
    %v2041 = vmul.f32 %v1996, %v2032
    %v2042 = vmul.f32 %v1997, %v2033
    %v2043 = vmul.f32 %v1998, %v2034
    %v2044 = vmul.f32 %v1999, %v2035
    %v2045 = vmul.f32 %v2000, %v2036
    %v2046 = vmul.f32 %v2001, %v2037
    %v2047 = vmul.f32 %v2002, %v2038
    %v2048 = vmul.f32 %v2003, %v2039
    %v2049 = vld [vmem:[%s6] sm:$0xff]
    %v2050 = vld [vmem:[%s6 + $0x8] sm:$0xff]
    %v2051 = vld [vmem:[%s6 + $0x10] sm:$0xff]
    %v2052 = vld [vmem:[%s6 + $0x18] sm:$0xff]
    %v2053 = vld [vmem:[%s6 + $0x20] sm:$0xff]
    %v2054 = vld [vmem:[%s6 + $0x28] sm:$0xff]
    %v2055 = vld [vmem:[%s6 + $0x30] sm:$0xff]
    %v2056 = vld [vmem:[%s6 + $0x38] sm:$0xff]
    %v2057 = vld [vmem:[%s6 + $0x40] sm:$0xff]
    %v2058 = vmul.f32 %v2040, %v2049
    %v2059 = vmul.f32 %v2041, %v2050
    %v2060 = vmul.f32 %v2042, %v2051
    %v2061 = vmul.f32 %v2043, %v2052
    %v2062 = vmul.f32 %v2044, %v2053
    %v2063 = vmul.f32 %v2045, %v2054
    %v2064 = vmul.f32 %v2046, %v2055
    %v2065 = vmul.f32 %v2047, %v2056
    %v2066 = vmul.f32 %v2048, %v2057
    %v2067 = vld [vmem:[#allocation2] sm:$0xff]
    %v2068 = vld [vmem:[#allocation2 + $0x8] sm:$0xff]
    %v2069 = vld [vmem:[#allocation2 + $0x10] sm:$0xff]
    %v2070 = vld [vmem:[#allocation2 + $0x18] sm:$0xff]
    %v2071 = vld [vmem:[#allocation2 + $0x20] sm:$0xff]
    %v2072 = vld [vmem:[#allocation2 + $0x28] sm:$0xff]
    %v2073 = vld [vmem:[#allocation2 + $0x30] sm:$0xff]
    %v2074 = vld [vmem:[#allocation2 + $0x38] sm:$0xff]
    %v2075 = vld [vmem:[#allocation2 + $0x40] sm:$0xff]
    %v2076 = vadd.f32 %v2058, %v2067
    %v2077 = vadd.f32 %v2059, %v2068
    %v2078 = vadd.f32 %v2060, %v2069
    %v2079 = vadd.f32 %v2061, %v2070
    %v2080 = vadd.f32 %v2062, %v2071
    %v2081 = vadd.f32 %v2063, %v2072
    %v2082 = vadd.f32 %v2064, %v2073
    %v2083 = vadd.f32 %v2065, %v2074
    %v2084 = vadd.f32 %v2066, %v2075
    %vm2085 = vcmp.gt.f32.partialorder %v2076, 0.0
    %vm2086 = vcmp.gt.f32.partialorder %v2077, 0.0
    %vm2087 = vcmp.gt.f32.partialorder %v2078, 0.0
    %vm2088 = vcmp.gt.f32.partialorder %v2079, 0.0
    %vm2089 = vcmp.gt.f32.partialorder %v2080, 0.0
    %vm2090 = vcmp.gt.f32.partialorder %v2081, 0.0
    %vm2091 = vcmp.gt.f32.partialorder %v2082, 0.0
    %vm2092 = vcmp.gt.f32.partialorder %v2083, 0.0
    %vm2093 = vcmp.gt.f32.partialorder %v2084, 0.0
    %v2094 = vmul.f32 %v2076, 0.01
    %v2095 = vmul.f32 %v2077, 0.01
    %v2096 = vmul.f32 %v2078, 0.01
    %v2097 = vmul.f32 %v2079, 0.01
    %v2098 = vmul.f32 %v2080, 0.01
    %v2099 = vmul.f32 %v2081, 0.01
    %v2100 = vmul.f32 %v2082, 0.01
    %v2101 = vmul.f32 %v2083, 0.01
    %v2102 = vmul.f32 %v2084, 0.01
    %v2103 = vsel %vm2085, %v2076, %v2094
    %v2104 = vsel %vm2086, %v2077, %v2095
    %v2105 = vsel %vm2087, %v2078, %v2096
    %v2106 = vsel %vm2088, %v2079, %v2097
    %v2107 = vsel %vm2089, %v2080, %v2098
    %v2108 = vsel %vm2090, %v2081, %v2099
    %v2109 = vsel %vm2091, %v2082, %v2100
    %v2110 = vsel %vm2092, %v2083, %v2101
    %v2111 = vsel %vm2093, %v2084, %v2102
    %v2112 = vld [vmem:[#allocation4] sm:$0xff]
    %v2113 = vld [vmem:[#allocation4 + $0x8] sm:$0xff]
    %v2114 = vld [vmem:[#allocation4 + $0x10] sm:$0xff]
    %v2115 = vld [vmem:[#allocation4 + $0x18] sm:$0xff]
    %v2116 = vld [vmem:[#allocation4 + $0x20] sm:$0xff]
    %v2117 = vld [vmem:[#allocation4 + $0x28] sm:$0xff]
    %v2118 = vld [vmem:[#allocation4 + $0x30] sm:$0xff]
    %v2119 = vld [vmem:[#allocation4 + $0x38] sm:$0xff]
    %v2120 = vld [vmem:[#allocation4 + $0x40] sm:$0xff]
    %v2121 = vmul.f32 %v2103, %v2112
    %v2122 = vmul.f32 %v2104, %v2113
    %v2123 = vmul.f32 %v2105, %v2114
    %v2124 = vmul.f32 %v2106, %v2115
    %v2125 = vmul.f32 %v2107, %v2116
    %v2126 = vmul.f32 %v2108, %v2117
    %v2127 = vmul.f32 %v2109, %v2118
    %v2128 = vmul.f32 %v2110, %v2119
    %v2129 = vmul.f32 %v2111, %v2120
    %v2130 = vld [vmem:[#allocation6] sm:$0xff]
    %v2131 = vld [vmem:[#allocation6 + $0x8] sm:$0xff]
    %v2132 = vld [vmem:[#allocation6 + $0x10] sm:$0xff]
    %v2133 = vld [vmem:[#allocation6 + $0x18] sm:$0xff]
    %v2134 = vld [vmem:[#allocation6 + $0x20] sm:$0xff]
    %v2135 = vld [vmem:[#allocation6 + $0x28] sm:$0xff]
    %v2136 = vld [vmem:[#allocation6 + $0x30] sm:$0xff]
    %v2137 = vld [vmem:[#allocation6 + $0x38] sm:$0xff]
    %v2138 = vld [vmem:[#allocation6 + $0x40] sm:$0xff]
    %v2139 = vadd.f32 %v2121, %v2130
    %v2140 = vadd.f32 %v2122, %v2131
    %v2141 = vadd.f32 %v2123, %v2132
    %v2142 = vadd.f32 %v2124, %v2133
    %v2143 = vadd.f32 %v2125, %v2134
    %v2144 = vadd.f32 %v2126, %v2135
    %v2145 = vadd.f32 %v2127, %v2136
    %v2146 = vadd.f32 %v2128, %v2137
    %v2147 = vadd.f32 %v2129, %v2138
    %vm2148 = vcmp.gt.f32.partialorder %v2139, 0.0
    %vm2149 = vcmp.gt.f32.partialorder %v2140, 0.0
    %vm2150 = vcmp.gt.f32.partialorder %v2141, 0.0
    %vm2151 = vcmp.gt.f32.partialorder %v2142, 0.0
    %vm2152 = vcmp.gt.f32.partialorder %v2143, 0.0
    %vm2153 = vcmp.gt.f32.partialorder %v2144, 0.0
    %vm2154 = vcmp.gt.f32.partialorder %v2145, 0.0
    %vm2155 = vcmp.gt.f32.partialorder %v2146, 0.0
    %vm2156 = vcmp.gt.f32.partialorder %v2147, 0.0
    %v2157 = vmul.f32 %v2139, 0.01
    %v2158 = vmul.f32 %v2140, 0.01
    %v2159 = vmul.f32 %v2141, 0.01
    %v2160 = vmul.f32 %v2142, 0.01
    %v2161 = vmul.f32 %v2143, 0.01
    %v2162 = vmul.f32 %v2144, 0.01
    %v2163 = vmul.f32 %v2145, 0.01
    %v2164 = vmul.f32 %v2146, 0.01
    %v2165 = vmul.f32 %v2147, 0.01
    %v2166 = vsel %vm2148, %v2139, %v2157
    %v2167 = vsel %vm2149, %v2140, %v2158
    %v2168 = vsel %vm2150, %v2141, %v2159
    %v2169 = vsel %vm2151, %v2142, %v2160
    %v2170 = vsel %vm2152, %v2143, %v2161
    %v2171 = vsel %vm2153, %v2144, %v2162
    %v2172 = vsel %vm2154, %v2145, %v2163
    %v2173 = vsel %vm2155, %v2146, %v2164
    %v2174 = vsel %vm2156, %v2147, %v2165
    %v2175 = vld [vmem:[%s10] sm:$0xff]
    %v2176 = vld [vmem:[%s10 + $0x8] sm:$0xff]
    %v2177 = vld [vmem:[%s10 + $0x10] sm:$0xff]
    %v2178 = vld [vmem:[%s10 + $0x18] sm:$0xff]
    %v2179 = vld [vmem:[%s10 + $0x20] sm:$0xff]
    %v2180 = vld [vmem:[%s10 + $0x28] sm:$0xff]
    %v2181 = vld [vmem:[%s10 + $0x30] sm:$0xff]
    %v2182 = vld [vmem:[%s10 + $0x38] sm:$0xff]
    %v2183 = vld [vmem:[%s10 + $0x40] sm:$0xff]
    %v2184 = vmul.f32 %v2166, %v2175
    %v2185 = vmul.f32 %v2167, %v2176
    %v2186 = vmul.f32 %v2168, %v2177
    %v2187 = vmul.f32 %v2169, %v2178
    %v2188 = vmul.f32 %v2170, %v2179
    %v2189 = vmul.f32 %v2171, %v2180
    %v2190 = vmul.f32 %v2172, %v2181
    %v2191 = vmul.f32 %v2173, %v2182
    %v2192 = vmul.f32 %v2174, %v2183
    %v2193 = vadd.f32 %v2184, %v2187
    %v2194 = vadd.f32 %v2193, %v2190
    %v2195 = vrot.slane %v2194, 4
    %v2196 = vadd.f32 %v2194, %v2195
    %v2197 = vrot.slane %v2196, 2
    %v2198 = vadd.f32 %v2196, %v2197
    %v2199 = vrot.slane %v2198, 1
    %v2200 = vadd.f32 %v2198, %v2199
    %v2201 = vadd.f32 %v2185, %v2188
    %v2202 = vadd.f32 %v2201, %v2191
    %v2203 = vrot.slane %v2202, 4
    %v2204 = vadd.f32 %v2202, %v2203
    %v2205 = vrot.slane %v2204, 2
    %v2206 = vadd.f32 %v2204, %v2205
    %v2207 = vrot.slane %v2206, 1
    %v2208 = vadd.f32 %v2206, %v2207
    %v2209 = vadd.f32 %v2186, %v2189
    %v2210 = vadd.f32 %v2209, %v2192
    %v2211 = vrot.slane %v2210, 4
    %v2212 = vadd.f32 %v2210, %v2211
    %v2213 = vrot.slane %v2212, 2
    %v2214 = vadd.f32 %v2212, %v2213
    %v2215 = vrot.slane %v2214, 1
    %v2216 = vadd.f32 %v2214, %v2215
    %v2217 = vld [vmem:[%s1222] sm:$0xff]
    %v2218 = vld [vmem:[%s1222 + $0x8] sm:$0xff]
    %v2219 = vld [vmem:[%s1222 + $0x10] sm:$0xff]
    %v2220 = vld [vmem:[%s1222 + $0x18] sm:$0xff]
    %v2221 = vld [vmem:[%s1222 + $0x20] sm:$0xff]
    %v2222 = vld [vmem:[%s1222 + $0x28] sm:$0xff]
    %v2223 = vld [vmem:[%s1222 + $0x30] sm:$0xff]
    %v2224 = vld [vmem:[%s1222 + $0x38] sm:$0xff]
    %v2225 = vld [vmem:[%s1222 + $0x40] sm:$0xff]
    %v2226 = vmul.f32 %v2166, %v2217
    %v2227 = vmul.f32 %v2167, %v2218
    %v2228 = vmul.f32 %v2168, %v2219
    %v2229 = vmul.f32 %v2169, %v2220
    %v2230 = vmul.f32 %v2170, %v2221
    %v2231 = vmul.f32 %v2171, %v2222
    %v2232 = vmul.f32 %v2172, %v2223
    %v2233 = vmul.f32 %v2173, %v2224
    %v2234 = vmul.f32 %v2174, %v2225
    %v2235 = vadd.f32 %v2226, %v2229
    %v2236 = vadd.f32 %v2235, %v2232
    %v2237 = vrot.slane %v2236, 4
    %v2238 = vadd.f32 %v2236, %v2237
    %v2239 = vrot.slane %v2238, 2
    %v2240 = vadd.f32 %v2238, %v2239
    %v2241 = vrot.slane %v2240, 1
    %v2242 = vadd.f32 %v2240, %v2241
    %v2243 = vadd.f32 %v2227, %v2230
    %v2244 = vadd.f32 %v2243, %v2233
    %v2245 = vrot.slane %v2244, 4
    %v2246 = vadd.f32 %v2244, %v2245
    %v2247 = vrot.slane %v2246, 2
    %v2248 = vadd.f32 %v2246, %v2247
    %v2249 = vrot.slane %v2248, 1
    %v2250 = vadd.f32 %v2248, %v2249
    %v2251 = vadd.f32 %v2228, %v2231
    %v2252 = vadd.f32 %v2251, %v2234
    %v2253 = vrot.slane %v2252, 4
    %v2254 = vadd.f32 %v2252, %v2253
    %v2255 = vrot.slane %v2254, 2
    %v2256 = vadd.f32 %v2254, %v2255
    %v2257 = vrot.slane %v2256, 1
    %v2258 = vadd.f32 %v2256, %v2257
    %v2262 = vrot.slane %v2208, 7
    %v2263 = vrot.slane %v2216, 6
    %v2264 = vsel %vm1270, %v2200, %v2262
    %v2265 = vsel %vm1272, %v2264, %v2263
    %s2267 = scalar_lea.vmem %s11, 1
    %2268 = vst.msk [vmem:[%s2267] ss:$2 sm:$0x7] %vm1278, %v2265
    %v2272 = vrot.slane %v2250, 7
    %v2273 = vrot.slane %v2258, 6
    %v2274 = vsel %vm1270, %v2242, %v2272
    %v2275 = vsel %vm1272, %v2274, %v2273
    %s2277 = scalar_lea.vmem %s11, 7
    %2278 = vst.msk [vmem:[%s2277] ss:$2 sm:$0x7] %vm1278, %v2275
    %2279 = vst [vmem:[%s12] sm:$0xff] %v1719
    %2280 = vst [vmem:[%s12 + $0x8] sm:$0xff] %v1720
    %2281 = vst [vmem:[%s12 + $0x10] sm:$0xff] %v1721
    %2282 = vst [vmem:[%s12 + $0x18] sm:$0xff] %v1722
    %2283 = vst [vmem:[%s12 + $0x20] sm:$0xff] %v1723
    %2284 = vst [vmem:[%s12 + $0x28] sm:$0xff] %v1724
    %2285 = vst [vmem:[%s12 + $0x30] sm:$0xff] %v1725
    %2286 = vst [vmem:[%s12 + $0x38] sm:$0xff] %v1726
    %2287 = vst [vmem:[%s12 + $0x40] sm:$0xff] %v1727
    %s2288 = scalar_lea.vmem %s12, 72
    %2289 = vst [vmem:[%s2288] sm:$0xff] %v2040
    %2290 = vst [vmem:[%s2288 + $0x8] sm:$0xff] %v2041
    %2291 = vst [vmem:[%s2288 + $0x10] sm:$0xff] %v2042
    %2292 = vst [vmem:[%s2288 + $0x18] sm:$0xff] %v2043
    %2293 = vst [vmem:[%s2288 + $0x20] sm:$0xff] %v2044
    %2294 = vst [vmem:[%s2288 + $0x28] sm:$0xff] %v2045
    %2295 = vst [vmem:[%s2288 + $0x30] sm:$0xff] %v2046
    %2296 = vst [vmem:[%s2288 + $0x38] sm:$0xff] %v2047
    %2297 = vst [vmem:[%s2288 + $0x40] sm:$0xff] %v2048
    %2298 = vst [vmem:[%s13] sm:$0xff] %v1701
    %2299 = vst [vmem:[%s13 + $0x8] sm:$0xff] %v1702
    %2300 = vst [vmem:[%s13 + $0x10] sm:$0xff] %v1703
    %2301 = vst [vmem:[%s13 + $0x18] sm:$0xff] %v1704
    %2302 = vst [vmem:[%s13 + $0x20] sm:$0xff] %v1705
    %2303 = vst [vmem:[%s13 + $0x28] sm:$0xff] %v1706
    %2304 = vst [vmem:[%s13 + $0x30] sm:$0xff] %v1707
    %2305 = vst [vmem:[%s13 + $0x38] sm:$0xff] %v1708
    %2306 = vst [vmem:[%s13 + $0x40] sm:$0xff] %v1709
    %s2307 = scalar_lea.vmem %s13, 72
    %2308 = vst [vmem:[%s2307] sm:$0xff] %v2022
    %2309 = vst [vmem:[%s2307 + $0x8] sm:$0xff] %v2023
    %2310 = vst [vmem:[%s2307 + $0x10] sm:$0xff] %v2024
    %2311 = vst [vmem:[%s2307 + $0x18] sm:$0xff] %v2025
    %2312 = vst [vmem:[%s2307 + $0x20] sm:$0xff] %v2026
    %2313 = vst [vmem:[%s2307 + $0x28] sm:$0xff] %v2027
    %2314 = vst [vmem:[%s2307 + $0x30] sm:$0xff] %v2028
    %2315 = vst [vmem:[%s2307 + $0x38] sm:$0xff] %v2029
    %2316 = vst [vmem:[%s2307 + $0x40] sm:$0xff] %v2030
    // Predicated region
    $region58: #{crnn_forward.3} parent=1 // pred_check
      _
    $region59: #{crnn_forward.3} parent=1 // pred_check_branch
      %2318 = sbr.rel (0) target = $region61
    $region60: #{crnn_forward.3} parent=1 // pred_region
      _
    $region61: #{crnn_forward.3} parent=1 // pred_fallthru
      _
    // Predicated region
    $region62: #{crnn_forward.3} parent=1 // pred_check
      _
    $region63: #{crnn_forward.3} parent=1 // pred_check_branch
      %2320 = sbr.rel (0) target = $region65
    $region64: #{crnn_forward.3} parent=1 // pred_region
      _
    $region65: #{crnn_forward.3} parent=1 // pred_fallthru
      _
    // Predicated region
    $region66: #{crnn_forward.3} parent=1 // pred_check
      _
    $region67: #{crnn_forward.3} parent=1 // pred_check_branch
      %2322 = sbr.rel (0) target = $region69
    $region68: #{crnn_forward.3} parent=1 // pred_region
      _
    $region69: #{crnn_forward.3} parent=1 // pred_fallthru
      _
    // Predicated region
    $region70: #{crnn_forward.3} parent=1 // pred_check
      _
    $region71: #{crnn_forward.3} parent=1 // pred_check_branch
      %2324 = sbr.rel (0) target = $region73
    $region72: #{crnn_forward.3} parent=1 // pred_region
      _
    $region73: #{crnn_forward.3} parent=1 // pred_fallthru
      _
    // Predicated region
    $region74: #{crnn_forward.3} parent=1 // pred_check
      _
    $region75: #{crnn_forward.3} parent=1 // pred_check_branch
      %2326 = sbr.rel (0) target = $region77
    $region76: #{crnn_forward.3} parent=1 // pred_region
      _
    $region77: #{crnn_forward.3} parent=1 // pred_fallthru
      _
    // Predicated region
    $region78: #{crnn_forward.3} parent=1 // pred_check
      _
    $region79: #{crnn_forward.3} parent=1 // pred_check_branch
      %2328 = sbr.rel (0) target = $region81
    $region80: #{crnn_forward.3} parent=1 // pred_region
      _
    $region81: #{crnn_forward.3} parent=1 // pred_fallthru
      _
    %2329 = vsyncpa [#allocation3], 1
    %2330 = vsyncpa [#allocation5], 1

</llo_original>
